<compile_context>
chip_gen: v5e
topology: v5e:2x2
jax: 0.10.0
libtpu: 0.0.40
codegen_flags: <defaults>
</compile_context>

<pallas_src>
import jax
import jax.numpy as jnp
from jax.experimental import pallas as pl
from jax.experimental.pallas import tpu as pltpu

HEAD_OUT = 9      # real number of output classes
HEAD_PAD = 128    # lane-padded head width (full-width stores, sliced in JAX)


def _round_up(n, m):
    return ((n + m - 1) // m) * m


# ----------------------------------------------------------------------------
# Fused kernel: one grid step == TILE_B batch elements, end to end.
# ----------------------------------------------------------------------------
def _fused_forward_kernel(
    x_ref,                    # (TB, C*L)        flattened input rows
    w1_ref, b1_ref,           # (60, 60), (1, 60)          conv1 as block matrix
    wm_ref, bm_ref,           # (60, 1280), (1, 1280)      conv2(no-b) ∘ fc2 ∘ fc1
    w34_ref, b34_ref,         # (64, 1024), (1, 1024)      fused fc3∘fc4
    w5_ref, b5_ref,           # (1024, 512), (1, 512)
    w6_ref, b6_ref,           # (512, 256), (1, 256)
    w7_ref, b7_ref,           # (256, 128), (1, 128)       zero-padded 9 -> 128
    o_ref,                    # (TB, 128)
):
    f32 = jnp.float32
    wdt = w1_ref.dtype        # matmul operand dtype (bf16 or f32)

    x = x_ref[...]                                                     # (TB, 60)

    # conv1 (kernel_size=1) + ReLU, as one 2-D matmul with M = TILE_B.
    h = jnp.dot(x.astype(wdt), w1_ref[...], preferred_element_type=f32)
    h = jnp.maximum(h + b1_ref[...], 0.0)                              # (TB, 60)

    # conv2 (bias folded) ∘ fc2 ∘ fc1 for all 20 channels in one matmul.
    m = jnp.dot(h.astype(wdt), wm_ref[...], preferred_element_type=f32)
    m = jnp.maximum(m + bm_ref[...], 0.0).astype(wdt)                  # (TB, 1280)

    # fc3∘fc4 per channel + global max-pool over channels (running maximum).
    feat = w34_ref.shape[0]                     # 64
    n_ch = m.shape[1] // feat                   # 20
    g = jnp.dot(m[:, :feat], w34_ref[...], preferred_element_type=f32)
    for c in range(1, n_ch):                    # static, unrolled
        gc = jnp.dot(m[:, c * feat:(c + 1) * feat], w34_ref[...],
                     preferred_element_type=f32)
        g = jnp.maximum(g, gc)
    g = g + b34_ref[...]                        # bias is channel-independent -> add after max

    # Head MLP: fc5 -> ReLU -> fc6 -> ReLU -> fc7 (lane-padded to 128).
    g = jnp.maximum(
        jnp.dot(g.astype(wdt), w5_ref[...], preferred_element_type=f32) + b5_ref[...], 0.0)
    g = jnp.maximum(
        jnp.dot(g.astype(wdt), w6_ref[...], preferred_element_type=f32) + b6_ref[...], 0.0)
    out = jnp.dot(g.astype(wdt), w7_ref[...], preferred_element_type=f32) + b7_ref[...]
    o_ref[...] = out.astype(o_ref.dtype)


# ----------------------------------------------------------------------------
# One-time parameter preparation: exact algebraic folding + layout prep.
# ----------------------------------------------------------------------------
def prepare_params(p, dtype=jnp.bfloat16):
    hp = jax.lax.Precision.HIGHEST
    C = p["conv1_w"].shape[0]          # 20
    L = p["fc1_w"].shape[1]            # 3

    # fc2(fc1(x)) = x @ (W2 W1)^T + (W2 b1 + b2)   (no activation between them)
    w12 = jnp.dot(p["fc2_w"], p["fc1_w"], precision=hp)                 # (64, 3)
    b12 = jnp.dot(p["fc2_w"], p["fc1_b"], precision=hp) + p["fc2_b"]    # (64,)
    # fc4(fc3(x)) = x @ (W4 W3)^T + (W4 b3 + b4)
    w34 = jnp.dot(p["fc4_w"], p["fc3_w"], precision=hp)                 # (1024, 64)
    b34 = jnp.dot(p["fc4_w"], p["fc3_b"], precision=hp) + p["fc4_b"]    # (1024,)

    # conv1 (k=1) as a (C*L, C*L) matrix acting on x flattened row-major (c, l):
    #   W1big[ci*L + l', co*L + l] = conv1_w[co, ci] * delta(l, l')
    w1big = jnp.kron(p["conv1_w"].T, jnp.eye(L, dtype=jnp.float32))     # (60, 60)
    b1big = jnp.repeat(p["conv1_b"], L)                                 # (60,)

    # conv2(no bias) ∘ fc2 ∘ fc1, all 20 output channels stacked along lanes:
    #   Wmid[ci*L + l, co*64 + f] = conv2_w[co, ci] * w12[f, l]
    wmid = jnp.kron(p["conv2_w"].T, w12.T)                              # (60, 1280)
    # Exact bias correction for commuting conv2 past the per-channel fc1/fc2:
    #   Bias[c, f] = (sum_c' conv2_w[c, c']) * b12[f] + conv2_b[c]
    bmid = (p["conv2_w"].sum(axis=1)[:, None] * b12[None, :]
            + p["conv2_b"][:, None]).reshape(-1)                        # (1280,)

    # Pad head output 9 -> 128 with zero rows (extra columns are exactly zero).
    w7p = jnp.pad(p["fc7_w"], ((0, HEAD_PAD - HEAD_OUT), (0, 0)))       # (128, 256)
    b7p = jnp.pad(p["fc7_b"], (0, HEAD_PAD - HEAD_OUT))                 # (128,)

    cast = lambda w: w.astype(dtype)
    row = lambda b: b.reshape(1, -1).astype(jnp.float32)
    return dict(
        w1=cast(w1big),        b1=row(b1big),
        wm=cast(wmid),         bm=row(bmid),
        w34=cast(w34.T),       b34=row(b34),
        w5=cast(p["fc5_w"].T), b5=row(p["fc5_b"]),
        w6=cast(p["fc6_w"].T), b6=row(p["fc6_b"]),
        w7=cast(w7p.T),        b7=row(b7p),
    )


# ----------------------------------------------------------------------------
# Forward pass: single fused pallas_call, grid over batch tiles.
# ----------------------------------------------------------------------------
def forward(x, prep, tile_b=128):
    B, C, L = x.shape
    xf = x.reshape(B, C * L)                       # lane-dense input rows

    tb = min(tile_b, _round_up(B, 8))              # sublane-aligned tile
    Bp = _round_up(B, tb)
    if Bp != B:
        xf = jnp.pad(xf, ((0, Bp - B), (0, 0)))

    args = (
        xf,
        prep["w1"], prep["b1"], prep["wm"], prep["bm"],
        prep["w34"], prep["b34"],
        prep["w5"], prep["b5"], prep["w6"], prep["b6"],
        prep["w7"], prep["b7"],
    )

    def resident_spec(arr):
        # Full-array block with a constant block index: fetched once, stays
        # resident in VMEM for the whole grid.
        return pl.BlockSpec(arr.shape, lambda i: (0, 0))

    in_specs = [pl.BlockSpec((tb, C * L), lambda i: (i, 0))]
    in_specs += [resident_spec(a) for a in args[1:]]

    out = pl.pallas_call(
        _fused_forward_kernel,
        out_shape=jax.ShapeDtypeStruct((Bp, HEAD_PAD), jnp.float32),
        grid=(Bp // tb,),
        in_specs=in_specs,
        out_specs=pl.BlockSpec((tb, HEAD_PAD), lambda i: (i, 0)),
        compiler_params=pltpu.CompilerParams(
            dimension_semantics=("parallel",)),    # batch tiles are independent
    )(*args)

    return out[:B, :HEAD_OUT]


# ----------------------------------------------------------------------------
# Parameter construction (deterministic, synthetic; PyTorch-default-like init)
# ----------------------------------------------------------------------------
def init_params(key):
    def lin(key, out_f, in_f):
        k1, k2 = jax.random.split(key)
        bound = 1.0 / jnp.sqrt(jnp.float32(in_f))
        w = jax.random.uniform(k1, (out_f, in_f), jnp.float32, -bound, bound)
        b = jax.random.uniform(k2, (out_f,), jnp.float32, -bound, bound)
        return w, b

    keys = jax.random.split(key, 9)
    p = {}
    p["conv1_w"], p["conv1_b"] = lin(keys[0], 20, 20)    # Conv1d(20,20,k=1)
    p["fc1_w"],   p["fc1_b"]   = lin(keys[1], 64, 3)
    p["conv2_w"], p["conv2_b"] = lin(keys[2], 20, 20)
    p["fc2_w"],   p["fc2_b"]   = lin(keys[3], 64, 64)
    p["fc3_w"],   p["fc3_b"]   = lin(keys[4], 128, 64)
    p["fc4_w"],   p["fc4_b"]   = lin(keys[5], 1024, 128)
    p["fc5_w"],   p["fc5_b"]   = lin(keys[6], 512, 1024)
    p["fc6_w"],   p["fc6_b"]   = lin(keys[7], 256, 512)
    p["fc7_w"],   p["fc7_b"]   = lin(keys[8], 9, 256)
    return p


# ----------------------------------------------------------------------------
# Pure-JAX reference (unfused, mirrors the PyTorch forward exactly).
# ----------------------------------------------------------------------------
def forward_ref(x, p):
    hp = jax.lax.Precision.HIGHEST
    h = jnp.einsum("oi,bil->bol", p["conv1_w"], x, precision=hp) + p["conv1_b"][None, :, None]
    h = jnp.maximum(h, 0.0)
    h = jnp.einsum("bcl,fl->bcf", h, p["fc1_w"], precision=hp) + p["fc1_b"]
    h = jnp.einsum("bcf,gf->bcg", h, p["fc2_w"], precision=hp) + p["fc2_b"]
    h = jnp.einsum("oi,bif->bof", p["conv2_w"], h, precision=hp) + p["conv2_b"][None, :, None]
    h = jnp.maximum(h, 0.0)
    h = jnp.einsum("bcf,gf->bcg", h, p["fc3_w"], precision=hp) + p["fc3_b"]
    h = jnp.einsum("bcf,gf->bcg", h, p["fc4_w"], precision=hp) + p["fc4_b"]
    g = jnp.max(h, axis=1)
    g = jnp.maximum(jnp.einsum("bf,gf->bg", g, p["fc5_w"], precision=hp) + p["fc5_b"], 0.0)
    g = jnp.maximum(jnp.einsum("bf,gf->bg", g, p["fc6_w"], precision=hp) + p["fc6_b"], 0.0)
    return jnp.einsum("bf,gf->bg", g, p["fc7_w"], precision=hp) + p["fc7_b"]


# ----------------------------------------------------------------------------
if __name__ == "__main__":
    key = jax.random.PRNGKey(0)
    k_x, k_x2, k_p = jax.random.split(key, 3)
    params = init_params(k_p)

    fwd = jax.jit(forward, static_argnames=("tile_b",))

    # --- check 1: f32 weights, tiny batch (single padded tile) ---------------
    B = 2
    x = jax.random.normal(k_x, (B, 20, 3), dtype=jnp.float32)
    prep_f32 = prepare_params(params, dtype=jnp.float32)
    out = jax.block_until_ready(fwd(x, prep_f32))
    ref = forward_ref(x, params)
    assert out.shape == (B, HEAD_OUT), out.shape
    assert bool(jnp.all(jnp.isfinite(out)))
    assert bool(jnp.allclose(out, ref, rtol=2e-2, atol=5e-3)), (
        float(jnp.max(jnp.abs(out - ref))))

    # --- check 2: bf16 weights, multi-tile grid with a padded tail tile ------
    B2 = 20
    x2 = jax.random.normal(k_x2, (B2, 20, 3), dtype=jnp.float32)
    prep_bf16 = prepare_params(params, dtype=jnp.bfloat16)
    out2 = jax.block_until_ready(fwd(x2, prep_bf16, tile_b=8))
    ref2 = forward_ref(x2, params)
    assert out2.shape == (B2, HEAD_OUT), out2.shape
    assert bool(jnp.all(jnp.isfinite(out2)))
    assert bool(jnp.allclose(out2, ref2, rtol=5e-2, atol=2e-2)), (
        float(jnp.max(jnp.abs(out2 - ref2))))

    print("KERNEL_OK")
</pallas_src>

<mosaic_0001>
module attributes {stable_mosaic.version = 11 : i64} {
  func.func @_fused_forward_kernel(%arg0: i32, %arg1: memref<8x60xf32, #tpu.memory_space<vmem>>, %arg2: memref<60x60xf32, #tpu.memory_space<vmem>>, %arg3: memref<1x60xf32, #tpu.memory_space<vmem>>, %arg4: memref<60x1280xf32, #tpu.memory_space<vmem>>, %arg5: memref<1x1280xf32, #tpu.memory_space<vmem>>, %arg6: memref<64x1024xf32, #tpu.memory_space<vmem>>, %arg7: memref<1x1024xf32, #tpu.memory_space<vmem>>, %arg8: memref<1024x512xf32, #tpu.memory_space<vmem>>, %arg9: memref<1x512xf32, #tpu.memory_space<vmem>>, %arg10: memref<512x256xf32, #tpu.memory_space<vmem>>, %arg11: memref<1x256xf32, #tpu.memory_space<vmem>>, %arg12: memref<256x128xf32, #tpu.memory_space<vmem>>, %arg13: memref<1x128xf32, #tpu.memory_space<vmem>>, %arg14: memref<8x128xf32, #tpu.memory_space<vmem>>) attributes {dimension_semantics = [#tpu.dimension_semantics<parallel>], iteration_bounds = array<i64: 1>, scalar_prefetch = 0 : i64, scratch_operands = 0 : i64, tpu.core_type = #tpu.core_type<tc>, window_params = [{transform_indices = @transform_0, window_bounds = array<i64: 8, 60>}, {pipeline_mode = #tpu.pipeline_mode<synchronous>, transform_indices = @transform_1, window_bounds = array<i64: 60, 60>}, {pipeline_mode = #tpu.pipeline_mode<synchronous>, transform_indices = @transform_2, window_bounds = array<i64: 1, 60>}, {pipeline_mode = #tpu.pipeline_mode<synchronous>, transform_indices = @transform_3, window_bounds = array<i64: 60, 1280>}, {pipeline_mode = #tpu.pipeline_mode<synchronous>, transform_indices = @transform_4, window_bounds = array<i64: 1, 1280>}, {pipeline_mode = #tpu.pipeline_mode<synchronous>, transform_indices = @transform_5, window_bounds = array<i64: 64, 1024>}, {pipeline_mode = #tpu.pipeline_mode<synchronous>, transform_indices = @transform_6, window_bounds = array<i64: 1, 1024>}, {pipeline_mode = #tpu.pipeline_mode<synchronous>, transform_indices = @transform_7, window_bounds = array<i64: 1024, 512>}, {pipeline_mode = #tpu.pipeline_mode<synchronous>, transform_indices = @transform_8, window_bounds = array<i64: 1, 512>}, {pipeline_mode = #tpu.pipeline_mode<synchronous>, transform_indices = @transform_9, window_bounds = array<i64: 512, 256>}, {pipeline_mode = #tpu.pipeline_mode<synchronous>, transform_indices = @transform_10, window_bounds = array<i64: 1, 256>}, {pipeline_mode = #tpu.pipeline_mode<synchronous>, transform_indices = @transform_11, window_bounds = array<i64: 256, 128>}, {pipeline_mode = #tpu.pipeline_mode<synchronous>, transform_indices = @transform_12, window_bounds = array<i64: 1, 128>}, {transform_indices = @transform_13, window_bounds = array<i64: 8, 128>}]} {
    %c0 = arith.constant 0 : index
    %c0_0 = arith.constant 0 : index
    %0 = vector.load %arg1[%c0, %c0_0] : memref<8x60xf32, #tpu.memory_space<vmem>>, vector<8x60xf32>
    %c0_1 = arith.constant 0 : index
    %c0_2 = arith.constant 0 : index
    %1 = vector.load %arg2[%c0_1, %c0_2] : memref<60x60xf32, #tpu.memory_space<vmem>>, vector<60x60xf32>
    %cst = arith.constant dense<0.000000e+00> : vector<8x60xf32>
    %2 = tpu.matmul %0, %1, %cst {dimension_numbers = #tpu.dot_dimension_numbers<[1], [0], [0], [1], [0, 0, 1, 1], [], []>} : vector<8x60xf32>, vector<60x60xf32>, vector<8x60xf32> -> vector<8x60xf32>
    %c0_3 = arith.constant 0 : index
    %c0_4 = arith.constant 0 : index
    %3 = vector.load %arg3[%c0_3, %c0_4] : memref<1x60xf32, #tpu.memory_space<vmem>>, vector<1x60xf32>
    %4 = vector.broadcast %3 : vector<1x60xf32> to vector<8x60xf32>
    %5 = arith.addf %2, %4 : vector<8x60xf32>
    %cst_5 = arith.constant 0.000000e+00 : f32
    %6 = vector.broadcast %cst_5 : f32 to vector<8x60xf32>
    %7 = arith.maximumf %5, %6 : vector<8x60xf32>
    %c0_6 = arith.constant 0 : index
    %c0_7 = arith.constant 0 : index
    %8 = vector.load %arg4[%c0_6, %c0_7] : memref<60x1280xf32, #tpu.memory_space<vmem>>, vector<60x1280xf32>
    %cst_8 = arith.constant dense<0.000000e+00> : vector<8x1280xf32>
    %9 = tpu.matmul %7, %8, %cst_8 {dimension_numbers = #tpu.dot_dimension_numbers<[1], [0], [0], [1], [0, 0, 1, 1], [], []>} : vector<8x60xf32>, vector<60x1280xf32>, vector<8x1280xf32> -> vector<8x1280xf32>
    %c0_9 = arith.constant 0 : index
    %c0_10 = arith.constant 0 : index
    %10 = vector.load %arg5[%c0_9, %c0_10] : memref<1x1280xf32, #tpu.memory_space<vmem>>, vector<1x1280xf32>
    %11 = vector.broadcast %10 : vector<1x1280xf32> to vector<8x1280xf32>
    %12 = arith.addf %9, %11 : vector<8x1280xf32>
    %cst_11 = arith.constant 0.000000e+00 : f32
    %13 = vector.broadcast %cst_11 : f32 to vector<8x1280xf32>
    %14 = arith.maximumf %12, %13 : vector<8x1280xf32>
    %15 = vector.extract_strided_slice %14 {offsets = [0, 0], sizes = [8, 64], strides = [1, 1]} : vector<8x1280xf32> to vector<8x64xf32>
    %c0_12 = arith.constant 0 : index
    %c0_13 = arith.constant 0 : index
    %16 = vector.load %arg6[%c0_12, %c0_13] : memref<64x1024xf32, #tpu.memory_space<vmem>>, vector<64x1024xf32>
    %cst_14 = arith.constant dense<0.000000e+00> : vector<8x1024xf32>
    %17 = tpu.matmul %15, %16, %cst_14 {dimension_numbers = #tpu.dot_dimension_numbers<[1], [0], [0], [1], [0, 0, 1, 1], [], []>} : vector<8x64xf32>, vector<64x1024xf32>, vector<8x1024xf32> -> vector<8x1024xf32>
    %18 = vector.extract_strided_slice %14 {offsets = [0, 64], sizes = [8, 64], strides = [1, 1]} : vector<8x1280xf32> to vector<8x64xf32>
    %c0_15 = arith.constant 0 : index
    %c0_16 = arith.constant 0 : index
    %19 = vector.load %arg6[%c0_15, %c0_16] : memref<64x1024xf32, #tpu.memory_space<vmem>>, vector<64x1024xf32>
    %cst_17 = arith.constant dense<0.000000e+00> : vector<8x1024xf32>
    %20 = tpu.matmul %18, %19, %cst_17 {dimension_numbers = #tpu.dot_dimension_numbers<[1], [0], [0], [1], [0, 0, 1, 1], [], []>} : vector<8x64xf32>, vector<64x1024xf32>, vector<8x1024xf32> -> vector<8x1024xf32>
    %21 = arith.maximumf %17, %20 : vector<8x1024xf32>
    %22 = vector.extract_strided_slice %14 {offsets = [0, 128], sizes = [8, 64], strides = [1, 1]} : vector<8x1280xf32> to vector<8x64xf32>
    %c0_18 = arith.constant 0 : index
    %c0_19 = arith.constant 0 : index
    %23 = vector.load %arg6[%c0_18, %c0_19] : memref<64x1024xf32, #tpu.memory_space<vmem>>, vector<64x1024xf32>
    %cst_20 = arith.constant dense<0.000000e+00> : vector<8x1024xf32>
    %24 = tpu.matmul %22, %23, %cst_20 {dimension_numbers = #tpu.dot_dimension_numbers<[1], [0], [0], [1], [0, 0, 1, 1], [], []>} : vector<8x64xf32>, vector<64x1024xf32>, vector<8x1024xf32> -> vector<8x1024xf32>
    %25 = arith.maximumf %21, %24 : vector<8x1024xf32>
    %26 = vector.extract_strided_slice %14 {offsets = [0, 192], sizes = [8, 64], strides = [1, 1]} : vector<8x1280xf32> to vector<8x64xf32>
    %c0_21 = arith.constant 0 : index
    %c0_22 = arith.constant 0 : index
    %27 = vector.load %arg6[%c0_21, %c0_22] : memref<64x1024xf32, #tpu.memory_space<vmem>>, vector<64x1024xf32>
    %cst_23 = arith.constant dense<0.000000e+00> : vector<8x1024xf32>
    %28 = tpu.matmul %26, %27, %cst_23 {dimension_numbers = #tpu.dot_dimension_numbers<[1], [0], [0], [1], [0, 0, 1, 1], [], []>} : vector<8x64xf32>, vector<64x1024xf32>, vector<8x1024xf32> -> vector<8x1024xf32>
    %29 = arith.maximumf %25, %28 : vector<8x1024xf32>
    %30 = vector.extract_strided_slice %14 {offsets = [0, 256], sizes = [8, 64], strides = [1, 1]} : vector<8x1280xf32> to vector<8x64xf32>
    %c0_24 = arith.constant 0 : index
    %c0_25 = arith.constant 0 : index
    %31 = vector.load %arg6[%c0_24, %c0_25] : memref<64x1024xf32, #tpu.memory_space<vmem>>, vector<64x1024xf32>
    %cst_26 = arith.constant dense<0.000000e+00> : vector<8x1024xf32>
    %32 = tpu.matmul %30, %31, %cst_26 {dimension_numbers = #tpu.dot_dimension_numbers<[1], [0], [0], [1], [0, 0, 1, 1], [], []>} : vector<8x64xf32>, vector<64x1024xf32>, vector<8x1024xf32> -> vector<8x1024xf32>
    %33 = arith.maximumf %29, %32 : vector<8x1024xf32>
    %34 = vector.extract_strided_slice %14 {offsets = [0, 320], sizes = [8, 64], strides = [1, 1]} : vector<8x1280xf32> to vector<8x64xf32>
    %c0_27 = arith.constant 0 : index
    %c0_28 = arith.constant 0 : index
    %35 = vector.load %arg6[%c0_27, %c0_28] : memref<64x1024xf32, #tpu.memory_space<vmem>>, vector<64x1024xf32>
    %cst_29 = arith.constant dense<0.000000e+00> : vector<8x1024xf32>
    %36 = tpu.matmul %34, %35, %cst_29 {dimension_numbers = #tpu.dot_dimension_numbers<[1], [0], [0], [1], [0, 0, 1, 1], [], []>} : vector<8x64xf32>, vector<64x1024xf32>, vector<8x1024xf32> -> vector<8x1024xf32>
    %37 = arith.maximumf %33, %36 : vector<8x1024xf32>
    %38 = vector.extract_strided_slice %14 {offsets = [0, 384], sizes = [8, 64], strides = [1, 1]} : vector<8x1280xf32> to vector<8x64xf32>
    %c0_30 = arith.constant 0 : index
    %c0_31 = arith.constant 0 : index
    %39 = vector.load %arg6[%c0_30, %c0_31] : memref<64x1024xf32, #tpu.memory_space<vmem>>, vector<64x1024xf32>
    %cst_32 = arith.constant dense<0.000000e+00> : vector<8x1024xf32>
    %40 = tpu.matmul %38, %39, %cst_32 {dimension_numbers = #tpu.dot_dimension_numbers<[1], [0], [0], [1], [0, 0, 1, 1], [], []>} : vector<8x64xf32>, vector<64x1024xf32>, vector<8x1024xf32> -> vector<8x1024xf32>
    %41 = arith.maximumf %37, %40 : vector<8x1024xf32>
    %42 = vector.extract_strided_slice %14 {offsets = [0, 448], sizes = [8, 64], strides = [1, 1]} : vector<8x1280xf32> to vector<8x64xf32>
    %c0_33 = arith.constant 0 : index
    %c0_34 = arith.constant 0 : index
    %43 = vector.load %arg6[%c0_33, %c0_34] : memref<64x1024xf32, #tpu.memory_space<vmem>>, vector<64x1024xf32>
    %cst_35 = arith.constant dense<0.000000e+00> : vector<8x1024xf32>
    %44 = tpu.matmul %42, %43, %cst_35 {dimension_numbers = #tpu.dot_dimension_numbers<[1], [0], [0], [1], [0, 0, 1, 1], [], []>} : vector<8x64xf32>, vector<64x1024xf32>, vector<8x1024xf32> -> vector<8x1024xf32>
    %45 = arith.maximumf %41, %44 : vector<8x1024xf32>
    %46 = vector.extract_strided_slice %14 {offsets = [0, 512], sizes = [8, 64], strides = [1, 1]} : vector<8x1280xf32> to vector<8x64xf32>
    %c0_36 = arith.constant 0 : index
    %c0_37 = arith.constant 0 : index
    %47 = vector.load %arg6[%c0_36, %c0_37] : memref<64x1024xf32, #tpu.memory_space<vmem>>, vector<64x1024xf32>
    %cst_38 = arith.constant dense<0.000000e+00> : vector<8x1024xf32>
    %48 = tpu.matmul %46, %47, %cst_38 {dimension_numbers = #tpu.dot_dimension_numbers<[1], [0], [0], [1], [0, 0, 1, 1], [], []>} : vector<8x64xf32>, vector<64x1024xf32>, vector<8x1024xf32> -> vector<8x1024xf32>
    %49 = arith.maximumf %45, %48 : vector<8x1024xf32>
    %50 = vector.extract_strided_slice %14 {offsets = [0, 576], sizes = [8, 64], strides = [1, 1]} : vector<8x1280xf32> to vector<8x64xf32>
    %c0_39 = arith.constant 0 : index
    %c0_40 = arith.constant 0 : index
    %51 = vector.load %arg6[%c0_39, %c0_40] : memref<64x1024xf32, #tpu.memory_space<vmem>>, vector<64x1024xf32>
    %cst_41 = arith.constant dense<0.000000e+00> : vector<8x1024xf32>
    %52 = tpu.matmul %50, %51, %cst_41 {dimension_numbers = #tpu.dot_dimension_numbers<[1], [0], [0], [1], [0, 0, 1, 1], [], []>} : vector<8x64xf32>, vector<64x1024xf32>, vector<8x1024xf32> -> vector<8x1024xf32>
    %53 = arith.maximumf %49, %52 : vector<8x1024xf32>
    %54 = vector.extract_strided_slice %14 {offsets = [0, 640], sizes = [8, 64], strides = [1, 1]} : vector<8x1280xf32> to vector<8x64xf32>
    %c0_42 = arith.constant 0 : index
    %c0_43 = arith.constant 0 : index
    %55 = vector.load %arg6[%c0_42, %c0_43] : memref<64x1024xf32, #tpu.memory_space<vmem>>, vector<64x1024xf32>
    %cst_44 = arith.constant dense<0.000000e+00> : vector<8x1024xf32>
    %56 = tpu.matmul %54, %55, %cst_44 {dimension_numbers = #tpu.dot_dimension_numbers<[1], [0], [0], [1], [0, 0, 1, 1], [], []>} : vector<8x64xf32>, vector<64x1024xf32>, vector<8x1024xf32> -> vector<8x1024xf32>
    %57 = arith.maximumf %53, %56 : vector<8x1024xf32>
    %58 = vector.extract_strided_slice %14 {offsets = [0, 704], sizes = [8, 64], strides = [1, 1]} : vector<8x1280xf32> to vector<8x64xf32>
    %c0_45 = arith.constant 0 : index
    %c0_46 = arith.constant 0 : index
    %59 = vector.load %arg6[%c0_45, %c0_46] : memref<64x1024xf32, #tpu.memory_space<vmem>>, vector<64x1024xf32>
    %cst_47 = arith.constant dense<0.000000e+00> : vector<8x1024xf32>
    %60 = tpu.matmul %58, %59, %cst_47 {dimension_numbers = #tpu.dot_dimension_numbers<[1], [0], [0], [1], [0, 0, 1, 1], [], []>} : vector<8x64xf32>, vector<64x1024xf32>, vector<8x1024xf32> -> vector<8x1024xf32>
    %61 = arith.maximumf %57, %60 : vector<8x1024xf32>
    %62 = vector.extract_strided_slice %14 {offsets = [0, 768], sizes = [8, 64], strides = [1, 1]} : vector<8x1280xf32> to vector<8x64xf32>
    %c0_48 = arith.constant 0 : index
    %c0_49 = arith.constant 0 : index
    %63 = vector.load %arg6[%c0_48, %c0_49] : memref<64x1024xf32, #tpu.memory_space<vmem>>, vector<64x1024xf32>
    %cst_50 = arith.constant dense<0.000000e+00> : vector<8x1024xf32>
    %64 = tpu.matmul %62, %63, %cst_50 {dimension_numbers = #tpu.dot_dimension_numbers<[1], [0], [0], [1], [0, 0, 1, 1], [], []>} : vector<8x64xf32>, vector<64x1024xf32>, vector<8x1024xf32> -> vector<8x1024xf32>
    %65 = arith.maximumf %61, %64 : vector<8x1024xf32>
    %66 = vector.extract_strided_slice %14 {offsets = [0, 832], sizes = [8, 64], strides = [1, 1]} : vector<8x1280xf32> to vector<8x64xf32>
    %c0_51 = arith.constant 0 : index
    %c0_52 = arith.constant 0 : index
    %67 = vector.load %arg6[%c0_51, %c0_52] : memref<64x1024xf32, #tpu.memory_space<vmem>>, vector<64x1024xf32>
    %cst_53 = arith.constant dense<0.000000e+00> : vector<8x1024xf32>
    %68 = tpu.matmul %66, %67, %cst_53 {dimension_numbers = #tpu.dot_dimension_numbers<[1], [0], [0], [1], [0, 0, 1, 1], [], []>} : vector<8x64xf32>, vector<64x1024xf32>, vector<8x1024xf32> -> vector<8x1024xf32>
    %69 = arith.maximumf %65, %68 : vector<8x1024xf32>
    %70 = vector.extract_strided_slice %14 {offsets = [0, 896], sizes = [8, 64], strides = [1, 1]} : vector<8x1280xf32> to vector<8x64xf32>
    %c0_54 = arith.constant 0 : index
    %c0_55 = arith.constant 0 : index
    %71 = vector.load %arg6[%c0_54, %c0_55] : memref<64x1024xf32, #tpu.memory_space<vmem>>, vector<64x1024xf32>
    %cst_56 = arith.constant dense<0.000000e+00> : vector<8x1024xf32>
    %72 = tpu.matmul %70, %71, %cst_56 {dimension_numbers = #tpu.dot_dimension_numbers<[1], [0], [0], [1], [0, 0, 1, 1], [], []>} : vector<8x64xf32>, vector<64x1024xf32>, vector<8x1024xf32> -> vector<8x1024xf32>
    %73 = arith.maximumf %69, %72 : vector<8x1024xf32>
    %74 = vector.extract_strided_slice %14 {offsets = [0, 960], sizes = [8, 64], strides = [1, 1]} : vector<8x1280xf32> to vector<8x64xf32>
    %c0_57 = arith.constant 0 : index
    %c0_58 = arith.constant 0 : index
    %75 = vector.load %arg6[%c0_57, %c0_58] : memref<64x1024xf32, #tpu.memory_space<vmem>>, vector<64x1024xf32>
    %cst_59 = arith.constant dense<0.000000e+00> : vector<8x1024xf32>
    %76 = tpu.matmul %74, %75, %cst_59 {dimension_numbers = #tpu.dot_dimension_numbers<[1], [0], [0], [1], [0, 0, 1, 1], [], []>} : vector<8x64xf32>, vector<64x1024xf32>, vector<8x1024xf32> -> vector<8x1024xf32>
    %77 = arith.maximumf %73, %76 : vector<8x1024xf32>
    %78 = vector.extract_strided_slice %14 {offsets = [0, 1024], sizes = [8, 64], strides = [1, 1]} : vector<8x1280xf32> to vector<8x64xf32>
    %c0_60 = arith.constant 0 : index
    %c0_61 = arith.constant 0 : index
    %79 = vector.load %arg6[%c0_60, %c0_61] : memref<64x1024xf32, #tpu.memory_space<vmem>>, vector<64x1024xf32>
    %cst_62 = arith.constant dense<0.000000e+00> : vector<8x1024xf32>
    %80 = tpu.matmul %78, %79, %cst_62 {dimension_numbers = #tpu.dot_dimension_numbers<[1], [0], [0], [1], [0, 0, 1, 1], [], []>} : vector<8x64xf32>, vector<64x1024xf32>, vector<8x1024xf32> -> vector<8x1024xf32>
    %81 = arith.maximumf %77, %80 : vector<8x1024xf32>
    %82 = vector.extract_strided_slice %14 {offsets = [0, 1088], sizes = [8, 64], strides = [1, 1]} : vector<8x1280xf32> to vector<8x64xf32>
    %c0_63 = arith.constant 0 : index
    %c0_64 = arith.constant 0 : index
    %83 = vector.load %arg6[%c0_63, %c0_64] : memref<64x1024xf32, #tpu.memory_space<vmem>>, vector<64x1024xf32>
    %cst_65 = arith.constant dense<0.000000e+00> : vector<8x1024xf32>
    %84 = tpu.matmul %82, %83, %cst_65 {dimension_numbers = #tpu.dot_dimension_numbers<[1], [0], [0], [1], [0, 0, 1, 1], [], []>} : vector<8x64xf32>, vector<64x1024xf32>, vector<8x1024xf32> -> vector<8x1024xf32>
    %85 = arith.maximumf %81, %84 : vector<8x1024xf32>
    %86 = vector.extract_strided_slice %14 {offsets = [0, 1152], sizes = [8, 64], strides = [1, 1]} : vector<8x1280xf32> to vector<8x64xf32>
    %c0_66 = arith.constant 0 : index
    %c0_67 = arith.constant 0 : index
    %87 = vector.load %arg6[%c0_66, %c0_67] : memref<64x1024xf32, #tpu.memory_space<vmem>>, vector<64x1024xf32>
    %cst_68 = arith.constant dense<0.000000e+00> : vector<8x1024xf32>
    %88 = tpu.matmul %86, %87, %cst_68 {dimension_numbers = #tpu.dot_dimension_numbers<[1], [0], [0], [1], [0, 0, 1, 1], [], []>} : vector<8x64xf32>, vector<64x1024xf32>, vector<8x1024xf32> -> vector<8x1024xf32>
    %89 = arith.maximumf %85, %88 : vector<8x1024xf32>
    %90 = vector.extract_strided_slice %14 {offsets = [0, 1216], sizes = [8, 64], strides = [1, 1]} : vector<8x1280xf32> to vector<8x64xf32>
    %c0_69 = arith.constant 0 : index
    %c0_70 = arith.constant 0 : index
    %91 = vector.load %arg6[%c0_69, %c0_70] : memref<64x1024xf32, #tpu.memory_space<vmem>>, vector<64x1024xf32>
    %cst_71 = arith.constant dense<0.000000e+00> : vector<8x1024xf32>
    %92 = tpu.matmul %90, %91, %cst_71 {dimension_numbers = #tpu.dot_dimension_numbers<[1], [0], [0], [1], [0, 0, 1, 1], [], []>} : vector<8x64xf32>, vector<64x1024xf32>, vector<8x1024xf32> -> vector<8x1024xf32>
    %93 = arith.maximumf %89, %92 : vector<8x1024xf32>
    %c0_72 = arith.constant 0 : index
    %c0_73 = arith.constant 0 : index
    %94 = vector.load %arg7[%c0_72, %c0_73] : memref<1x1024xf32, #tpu.memory_space<vmem>>, vector<1x1024xf32>
    %95 = vector.broadcast %94 : vector<1x1024xf32> to vector<8x1024xf32>
    %96 = arith.addf %93, %95 : vector<8x1024xf32>
    %c0_74 = arith.constant 0 : index
    %c0_75 = arith.constant 0 : index
    %97 = vector.load %arg8[%c0_74, %c0_75] : memref<1024x512xf32, #tpu.memory_space<vmem>>, vector<1024x512xf32>
    %cst_76 = arith.constant dense<0.000000e+00> : vector<8x512xf32>
    %98 = tpu.matmul %96, %97, %cst_76 {dimension_numbers = #tpu.dot_dimension_numbers<[1], [0], [0], [1], [0, 0, 1, 1], [], []>} : vector<8x1024xf32>, vector<1024x512xf32>, vector<8x512xf32> -> vector<8x512xf32>
    %c0_77 = arith.constant 0 : index
    %c0_78 = arith.constant 0 : index
    %99 = vector.load %arg9[%c0_77, %c0_78] : memref<1x512xf32, #tpu.memory_space<vmem>>, vector<1x512xf32>
    %100 = vector.broadcast %99 : vector<1x512xf32> to vector<8x512xf32>
    %101 = arith.addf %98, %100 : vector<8x512xf32>
    %cst_79 = arith.constant 0.000000e+00 : f32
    %102 = vector.broadcast %cst_79 : f32 to vector<8x512xf32>
    %103 = arith.maximumf %101, %102 : vector<8x512xf32>
    %c0_80 = arith.constant 0 : index
    %c0_81 = arith.constant 0 : index
    %104 = vector.load %arg10[%c0_80, %c0_81] : memref<512x256xf32, #tpu.memory_space<vmem>>, vector<512x256xf32>
    %cst_82 = arith.constant dense<0.000000e+00> : vector<8x256xf32>
    %105 = tpu.matmul %103, %104, %cst_82 {dimension_numbers = #tpu.dot_dimension_numbers<[1], [0], [0], [1], [0, 0, 1, 1], [], []>} : vector<8x512xf32>, vector<512x256xf32>, vector<8x256xf32> -> vector<8x256xf32>
    %c0_83 = arith.constant 0 : index
    %c0_84 = arith.constant 0 : index
    %106 = vector.load %arg11[%c0_83, %c0_84] : memref<1x256xf32, #tpu.memory_space<vmem>>, vector<1x256xf32>
    %107 = vector.broadcast %106 : vector<1x256xf32> to vector<8x256xf32>
    %108 = arith.addf %105, %107 : vector<8x256xf32>
    %cst_85 = arith.constant 0.000000e+00 : f32
    %109 = vector.broadcast %cst_85 : f32 to vector<8x256xf32>
    %110 = arith.maximumf %108, %109 : vector<8x256xf32>
    %c0_86 = arith.constant 0 : index
    %c0_87 = arith.constant 0 : index
    %111 = vector.load %arg12[%c0_86, %c0_87] : memref<256x128xf32, #tpu.memory_space<vmem>>, vector<256x128xf32>
    %cst_88 = arith.constant dense<0.000000e+00> : vector<8x128xf32>
    %112 = tpu.matmul %110, %111, %cst_88 {dimension_numbers = #tpu.dot_dimension_numbers<[1], [0], [0], [1], [0, 0, 1, 1], [], []>} : vector<8x256xf32>, vector<256x128xf32>, vector<8x128xf32> -> vector<8x128xf32>
    %c0_89 = arith.constant 0 : index
    %c0_90 = arith.constant 0 : index
    %113 = vector.load %arg13[%c0_89, %c0_90] : memref<1x128xf32, #tpu.memory_space<vmem>>, vector<1x128xf32>
    %114 = vector.broadcast %113 : vector<1x128xf32> to vector<8x128xf32>
    %115 = arith.addf %112, %114 : vector<8x128xf32>
    %c0_91 = arith.constant 0 : index
    %c0_92 = arith.constant 0 : index
    %116 = vector.load %arg14[%c0_91, %c0_92] : memref<8x128xf32, #tpu.memory_space<vmem>>, vector<8x128xf32>
    tpu.vector_store %arg14[%c0_91, %c0_92], %115 {strides = array<i32>} : memref<8x128xf32, #tpu.memory_space<vmem>>, vector<8x128xf32>,
    return
  }
  func.func @transform_0(%arg0: i32) -> (i32, i32) {
    %c0_i32 = arith.constant 0 : i32
    %c0_i32_0 = arith.constant 0 : i32
    return %arg0, %c0_i32 : i32, i32
  }
  func.func @transform_1(%arg0: i32) -> (i32, i32) {
    %c0_i32 = arith.constant 0 : i32
    %c0_i32_0 = arith.constant 0 : i32
    %c0_i32_1 = arith.constant 0 : i32
    return %c0_i32, %c0_i32_0 : i32, i32
  }
  func.func @transform_2(%arg0: i32) -> (i32, i32) {
    %c0_i32 = arith.constant 0 : i32
    %c0_i32_0 = arith.constant 0 : i32
    %c0_i32_1 = arith.constant 0 : i32
    return %c0_i32, %c0_i32_0 : i32, i32
  }
  func.func @transform_3(%arg0: i32) -> (i32, i32) {
    %c0_i32 = arith.constant 0 : i32
    %c0_i32_0 = arith.constant 0 : i32
    %c0_i32_1 = arith.constant 0 : i32
    return %c0_i32, %c0_i32_0 : i32, i32
  }
  func.func @transform_4(%arg0: i32) -> (i32, i32) {
    %c0_i32 = arith.constant 0 : i32
    %c0_i32_0 = arith.constant 0 : i32
    %c0_i32_1 = arith.constant 0 : i32
    return %c0_i32, %c0_i32_0 : i32, i32
  }
  func.func @transform_5(%arg0: i32) -> (i32, i32) {
    %c0_i32 = arith.constant 0 : i32
    %c0_i32_0 = arith.constant 0 : i32
    %c0_i32_1 = arith.constant 0 : i32
    return %c0_i32, %c0_i32_0 : i32, i32
  }
  func.func @transform_6(%arg0: i32) -> (i32, i32) {
    %c0_i32 = arith.constant 0 : i32
    %c0_i32_0 = arith.constant 0 : i32
    %c0_i32_1 = arith.constant 0 : i32
    return %c0_i32, %c0_i32_0 : i32, i32
  }
  func.func @transform_7(%arg0: i32) -> (i32, i32) {
    %c0_i32 = arith.constant 0 : i32
    %c0_i32_0 = arith.constant 0 : i32
    %c0_i32_1 = arith.constant 0 : i32
    return %c0_i32, %c0_i32_0 : i32, i32
  }
  func.func @transform_8(%arg0: i32) -> (i32, i32) {
    %c0_i32 = arith.constant 0 : i32
    %c0_i32_0 = arith.constant 0 : i32
    %c0_i32_1 = arith.constant 0 : i32
    return %c0_i32, %c0_i32_0 : i32, i32
  }
  func.func @transform_9(%arg0: i32) -> (i32, i32) {
    %c0_i32 = arith.constant 0 : i32
    %c0_i32_0 = arith.constant 0 : i32
    %c0_i32_1 = arith.constant 0 : i32
    return %c0_i32, %c0_i32_0 : i32, i32
  }
  func.func @transform_10(%arg0: i32) -> (i32, i32) {
    %c0_i32 = arith.constant 0 : i32
    %c0_i32_0 = arith.constant 0 : i32
    %c0_i32_1 = arith.constant 0 : i32
    return %c0_i32, %c0_i32_0 : i32, i32
  }
  func.func @transform_11(%arg0: i32) -> (i32, i32) {
    %c0_i32 = arith.constant 0 : i32
    %c0_i32_0 = arith.constant 0 : i32
    %c0_i32_1 = arith.constant 0 : i32
    return %c0_i32, %c0_i32_0 : i32, i32
  }
  func.func @transform_12(%arg0: i32) -> (i32, i32) {
    %c0_i32 = arith.constant 0 : i32
    %c0_i32_0 = arith.constant 0 : i32
    %c0_i32_1 = arith.constant 0 : i32
    return %c0_i32, %c0_i32_0 : i32, i32
  }
  func.func @transform_13(%arg0: i32) -> (i32, i32) {
    %c0_i32 = arith.constant 0 : i32
    %c0_i32_0 = arith.constant 0 : i32
    return %arg0, %c0_i32 : i32, i32
  }
}

</mosaic_0001>

<llo_original>
// kernel: forward.1
$region0: #{forward.1}
  #allocation0 [shape = 'u32[]', space=smem, size = 0x4, offset = 0x4, fixed_abs, tag = 'smem constant byte address 0x4 - core index']
  #allocation1 [shape = 'u32[72,128]{1,0:T(1,128)}', space=vmem, size = 0x9000, scoped, tag = 'internal scratch']
  %s0 = inlined_call_operand.vmem [shape: f32[8,60], index: 0, kind: input, shape index: {}]
  %s1 = inlined_call_operand.hbm [shape: f32[60,60], index: 1, kind: input, shape index: {}]
  %s2 = inlined_call_operand.hbm [shape: f32[1,60], index: 2, kind: input, shape index: {}]
  %s3 = inlined_call_operand.hbm [shape: f32[60,1280], index: 3, kind: input, shape index: {}]
  %s4 = inlined_call_operand.hbm [shape: f32[1,1280], index: 4, kind: input, shape index: {}]
  %s5 = inlined_call_operand.hbm [shape: f32[64,1024], index: 5, kind: input, shape index: {}]
  %s6 = inlined_call_operand.hbm [shape: f32[1,1024], index: 6, kind: input, shape index: {}]
  %s7 = inlined_call_operand.hbm [shape: f32[1024,512], index: 7, kind: input, shape index: {}]
  %s8 = inlined_call_operand.hbm [shape: f32[1,512], index: 8, kind: input, shape index: {}]
  %s9 = inlined_call_operand.hbm [shape: f32[512,256], index: 9, kind: input, shape index: {}]
  %s10 = inlined_call_operand.hbm [shape: f32[1,256], index: 10, kind: input, shape index: {}]
  %s11 = inlined_call_operand.hbm [shape: f32[256,128], index: 11, kind: input, shape index: {}]
  %s12 = inlined_call_operand.hbm [shape: f32[1,128], index: 12, kind: input, shape index: {}]
  %s13 = inlined_call_operand.vmem [shape: f32[8,128], index: 13, kind: output, shape index: {}]
  %s14 = sld [smem:[#allocation0]]
  $region110: #{forward.1} parent=0
    _
  %s16 = ssub.s32 1, %s14
  %s17 = scalar_select 0, %s16, %s14
  $region1: #{forward.1} parent=0
    #allocation2 [shape = 'u8[32768]{0}', space=vmem, size = 0x8000, scoped, tag = 'input window, operand 1, single buffered']
    #allocation3 [shape = 's32[1]{0}', space=sflag, size = 0x4, scoped, tag = 'scoped memory for forward.1']
    #allocation4 [shape = 'u8[512]{0}', space=vmem, size = 0x400, scoped, tag = 'input window, operand 2, single buffered']
    #allocation5 [shape = 's32[1]{0}', space=sflag, size = 0x4, scoped, tag = 'scoped memory for forward.1']
    #allocation6 [shape = 'u8[327680]{0}', space=vmem, size = 0x50000, scoped, tag = 'input window, operand 3, single buffered']
    #allocation7 [shape = 'u8[5120]{0}', space=vmem, size = 0x1400, scoped, tag = 'input window, operand 4, single buffered']
    #allocation8 [shape = 's32[1]{0}', space=sflag, size = 0x4, scoped, tag = 'scoped memory for forward.1']
    #allocation9 [shape = 'u8[262144]{0}', space=vmem, size = 0x40000, scoped, tag = 'input window, operand 5, single buffered']
    #allocation10 [shape = 'u8[4096]{0}', space=vmem, size = 0x1000, scoped, tag = 'input window, operand 6, single buffered']
    #allocation11 [shape = 's32[1]{0}', space=sflag, size = 0x4, scoped, tag = 'scoped memory for forward.1']
    #allocation12 [shape = 'u8[2097152]{0}', space=vmem, size = 0x200000, scoped, tag = 'input window, operand 7, single buffered']
    #allocation13 [shape = 'u8[2048]{0}', space=vmem, size = 0x800, scoped, tag = 'input window, operand 8, single buffered']
    #allocation14 [shape = 's32[1]{0}', space=sflag, size = 0x4, scoped, tag = 'scoped memory for forward.1']
    #allocation15 [shape = 'u8[524288]{0}', space=vmem, size = 0x80000, scoped, tag = 'input window, operand 9, single buffered']
    #allocation16 [shape = 'u8[1024]{0}', space=vmem, size = 0x400, scoped, tag = 'input window, operand 10, single buffered']
    #allocation17 [shape = 's32[1]{0}', space=sflag, size = 0x4, scoped, tag = 'scoped memory for forward.1']
    #allocation18 [shape = 'u8[131072]{0}', space=vmem, size = 0x20000, scoped, tag = 'input window, operand 11, single buffered']
    #allocation19 [shape = 'u8[512]{0}', space=vmem, size = 0x400, scoped, tag = 'input window, operand 12, single buffered']
    #allocation20 [shape = 's32[1]{0}', space=sflag, size = 0x4, scoped, tag = 'scoped memory for forward.1']
    %18 = vsyncpa [#allocation3], 0
    %19 = vsyncpa [#allocation5], 0
    %20 = vsyncpa [#allocation8], 0
    %21 = vsyncpa [#allocation11], 0
    %22 = vsyncpa [#allocation14], 0
    %23 = vsyncpa [#allocation17], 0
    %24 = vsyncpa [#allocation20], 0
    // Predicated region
    $region2: #{forward.1} parent=1 // pred_check
      _
    $region3: #{forward.1} parent=1 // pred_check_branch
      %26 = sbr.rel (0) target = $region5
    $region4: #{forward.1} parent=1 // pred_region
      _
    $region5: #{forward.1} parent=1 // pred_fallthru
      _
    // Predicated region
    $region6: #{forward.1} parent=1 // pred_check
      _
    $region7: #{forward.1} parent=1 // pred_check_branch
      %28 = sbr.rel (0) target = $region9
    $region8: #{forward.1} parent=1 // pred_region
      %30 = vsyncadd [#allocation3], 0
      %s31 = sshll.u32 %s1, 4
      %s32 = int_to_ptr.hbm [resolvable:$true] %s31
      %s33 = sshll.u32 [#allocation2], 4
      %s34 = int_to_ptr.vmem [resolvable:$true] %s33
      %39 = dma.hbm_to_vmem [thread:$0]  %s32, 1024, %s34, [#allocation3], 128, 128, 8
    $region9: #{forward.1} parent=1 // pred_fallthru
      _
    // Predicated region
    $region10: #{forward.1} parent=1 // pred_check
      _
    $region11: #{forward.1} parent=1 // pred_check_branch
      %41 = sbr.rel (0) target = $region13
    $region12: #{forward.1} parent=1 // pred_region
      %43 = vsyncadd [#allocation5], 0
      %s45 = sshll.u32 %s2, 4
      %s46 = int_to_ptr.hbm [resolvable:$true] %s45
      %s47 = sshll.u32 [#allocation4], 4
      %s48 = int_to_ptr.vmem [resolvable:$true] %s47
      %50 = dma.hbm_to_vmem [thread:$0]  %s46, 16, %s48, [#allocation5]
    $region13: #{forward.1} parent=1 // pred_fallthru
      _
    // Predicated region
    $region14: #{forward.1} parent=1 // pred_check
      _
    $region15: #{forward.1} parent=1 // pred_check_branch
      %52 = sbr.rel (0) target = $region17
    $region16: #{forward.1} parent=1 // pred_region
      %54 = vsyncadd [#allocation5], 0
      %s55 = sshll.u32 %s3, 4
      %s56 = int_to_ptr.hbm [resolvable:$true] %s55
      %s57 = sshll.u32 [#allocation6], 4
      %s58 = int_to_ptr.vmem [resolvable:$true] %s57
      %63 = dma.hbm_to_vmem [thread:$0]  %s56, 10240, %s58, [#allocation5], 1280, 1280, 80
    $region17: #{forward.1} parent=1 // pred_fallthru
      _
    // Predicated region
    $region18: #{forward.1} parent=1 // pred_check
      _
    $region19: #{forward.1} parent=1 // pred_check_branch
      %65 = sbr.rel (0) target = $region21
    $region20: #{forward.1} parent=1 // pred_region
      %67 = vsyncadd [#allocation8], 0
      %s69 = sshll.u32 %s4, 4
      %s70 = int_to_ptr.hbm [resolvable:$true] %s69
      %s71 = sshll.u32 [#allocation7], 4
      %s72 = int_to_ptr.vmem [resolvable:$true] %s71
      %74 = dma.hbm_to_vmem [thread:$0]  %s70, 160, %s72, [#allocation8]
    $region21: #{forward.1} parent=1 // pred_fallthru
      _
    // Predicated region
    $region22: #{forward.1} parent=1 // pred_check
      _
    $region23: #{forward.1} parent=1 // pred_check_branch
      %76 = sbr.rel (0) target = $region25
    $region24: #{forward.1} parent=1 // pred_region
      %78 = vsyncadd [#allocation8], 0
      %s79 = sshll.u32 %s5, 4
      %s80 = int_to_ptr.hbm [resolvable:$true] %s79
      %s81 = sshll.u32 [#allocation9], 4
      %s82 = int_to_ptr.vmem [resolvable:$true] %s81
      %87 = dma.hbm_to_vmem [thread:$0]  %s80, 8192, %s82, [#allocation8], 1024, 1024, 64
    $region25: #{forward.1} parent=1 // pred_fallthru
      _
    // Predicated region
    $region26: #{forward.1} parent=1 // pred_check
      _
    $region27: #{forward.1} parent=1 // pred_check_branch
      %89 = sbr.rel (0) target = $region29
    $region28: #{forward.1} parent=1 // pred_region
      %91 = vsyncadd [#allocation11], 0
      %s93 = sshll.u32 %s6, 4
      %s94 = int_to_ptr.hbm [resolvable:$true] %s93
      %s95 = sshll.u32 [#allocation10], 4
      %s96 = int_to_ptr.vmem [resolvable:$true] %s95
      %98 = dma.hbm_to_vmem [thread:$0]  %s94, 128, %s96, [#allocation11]
    $region29: #{forward.1} parent=1 // pred_fallthru
      _
    // Predicated region
    $region30: #{forward.1} parent=1 // pred_check
      _
    $region31: #{forward.1} parent=1 // pred_check_branch
      %100 = sbr.rel (0) target = $region33
    $region32: #{forward.1} parent=1 // pred_region
      %102 = vsyncadd [#allocation11], 0
      %s103 = sshll.u32 %s7, 4
      %s104 = int_to_ptr.hbm [resolvable:$true] %s103
      %s105 = sshll.u32 [#allocation12], 4
      %s106 = int_to_ptr.vmem [resolvable:$true] %s105
      %111 = dma.hbm_to_vmem [thread:$0]  %s104, 65536, %s106, [#allocation11], 512, 512, 32
    $region33: #{forward.1} parent=1 // pred_fallthru
      _
    // Predicated region
    $region34: #{forward.1} parent=1 // pred_check
      _
    $region35: #{forward.1} parent=1 // pred_check_branch
      %113 = sbr.rel (0) target = $region37
    $region36: #{forward.1} parent=1 // pred_region
      %115 = vsyncadd [#allocation14], 0
      %s117 = sshll.u32 %s8, 4
      %s118 = int_to_ptr.hbm [resolvable:$true] %s117
      %s119 = sshll.u32 [#allocation13], 4
      %s120 = int_to_ptr.vmem [resolvable:$true] %s119
      %122 = dma.hbm_to_vmem [thread:$0]  %s118, 64, %s120, [#allocation14]
    $region37: #{forward.1} parent=1 // pred_fallthru
      _
    // Predicated region
    $region38: #{forward.1} parent=1 // pred_check
      _
    $region39: #{forward.1} parent=1 // pred_check_branch
      %124 = sbr.rel (0) target = $region41
    $region40: #{forward.1} parent=1 // pred_region
      %126 = vsyncadd [#allocation14], 0
      %s127 = sshll.u32 %s9, 4
      %s128 = int_to_ptr.hbm [resolvable:$true] %s127
      %s129 = sshll.u32 [#allocation15], 4
      %s130 = int_to_ptr.vmem [resolvable:$true] %s129
      %135 = dma.hbm_to_vmem [thread:$0]  %s128, 16384, %s130, [#allocation14], 256, 256, 16
    $region41: #{forward.1} parent=1 // pred_fallthru
      _
    // Predicated region
    $region42: #{forward.1} parent=1 // pred_check
      _
    $region43: #{forward.1} parent=1 // pred_check_branch
      %137 = sbr.rel (0) target = $region45
    $region44: #{forward.1} parent=1 // pred_region
      %139 = vsyncadd [#allocation17], 0
      %s141 = sshll.u32 %s10, 4
      %s142 = int_to_ptr.hbm [resolvable:$true] %s141
      %s143 = sshll.u32 [#allocation16], 4
      %s144 = int_to_ptr.vmem [resolvable:$true] %s143
      %146 = dma.hbm_to_vmem [thread:$0]  %s142, 32, %s144, [#allocation17]
    $region45: #{forward.1} parent=1 // pred_fallthru
      _
    // Predicated region
    $region46: #{forward.1} parent=1 // pred_check
      _
    $region47: #{forward.1} parent=1 // pred_check_branch
      %148 = sbr.rel (0) target = $region49
    $region48: #{forward.1} parent=1 // pred_region
      %150 = vsyncadd [#allocation17], 0
      %s151 = sshll.u32 %s11, 4
      %s152 = int_to_ptr.hbm [resolvable:$true] %s151
      %s153 = sshll.u32 [#allocation18], 4
      %s154 = int_to_ptr.vmem [resolvable:$true] %s153
      %159 = dma.hbm_to_vmem [thread:$0]  %s152, 4096, %s154, [#allocation17], 128, 128, 8
    $region49: #{forward.1} parent=1 // pred_fallthru
      _
    // Predicated region
    $region50: #{forward.1} parent=1 // pred_check
      _
    $region51: #{forward.1} parent=1 // pred_check_branch
      %161 = sbr.rel (0) target = $region53
    $region52: #{forward.1} parent=1 // pred_region
      %163 = vsyncadd [#allocation20], 0
      %s165 = sshll.u32 %s12, 4
      %s166 = int_to_ptr.hbm [resolvable:$true] %s165
      %s167 = sshll.u32 [#allocation19], 4
      %s168 = int_to_ptr.vmem [resolvable:$true] %s167
      %170 = dma.hbm_to_vmem [thread:$0]  %s166, 16, %s168, [#allocation20]
    $region53: #{forward.1} parent=1 // pred_fallthru
      _
    // Predicated region
    $region54: #{forward.1} parent=1 // pred_check
      _
    $region55: #{forward.1} parent=1 // pred_check_branch
      %172 = sbr.rel (0) target = $region57
    $region56: #{forward.1} parent=1 // pred_region
      %174 = dma.done [#allocation3], 1024
    $region57: #{forward.1} parent=1 // pred_fallthru
      _
    // Predicated region
    $region58: #{forward.1} parent=1 // pred_check
      _
    $region59: #{forward.1} parent=1 // pred_check_branch
      %176 = sbr.rel (0) target = $region61
    $region60: #{forward.1} parent=1 // pred_region
      %178 = dma.done [#allocation5], 16
    $region61: #{forward.1} parent=1 // pred_fallthru
      _
    // Predicated region
    $region62: #{forward.1} parent=1 // pred_check
      _
    $region63: #{forward.1} parent=1 // pred_check_branch
      %180 = sbr.rel (0) target = $region65
    $region64: #{forward.1} parent=1 // pred_region
      %182 = dma.done [#allocation5], 10240
    $region65: #{forward.1} parent=1 // pred_fallthru
      _
    // Predicated region
    $region66: #{forward.1} parent=1 // pred_check
      _
    $region67: #{forward.1} parent=1 // pred_check_branch
      %184 = sbr.rel (0) target = $region69
    $region68: #{forward.1} parent=1 // pred_region
      %186 = dma.done [#allocation8], 160
    $region69: #{forward.1} parent=1 // pred_fallthru
      _
    // Predicated region
    $region70: #{forward.1} parent=1 // pred_check
      _
    $region71: #{forward.1} parent=1 // pred_check_branch
      %188 = sbr.rel (0) target = $region73
    $region72: #{forward.1} parent=1 // pred_region
      %190 = dma.done [#allocation8], 8192
    $region73: #{forward.1} parent=1 // pred_fallthru
      _
    // Predicated region
    $region74: #{forward.1} parent=1 // pred_check
      _
    $region75: #{forward.1} parent=1 // pred_check_branch
      %192 = sbr.rel (0) target = $region77
    $region76: #{forward.1} parent=1 // pred_region
      %194 = dma.done [#allocation11], 128
    $region77: #{forward.1} parent=1 // pred_fallthru
      _
    // Predicated region
    $region78: #{forward.1} parent=1 // pred_check
      _
    $region79: #{forward.1} parent=1 // pred_check_branch
      %196 = sbr.rel (0) target = $region81
    $region80: #{forward.1} parent=1 // pred_region
      %198 = dma.done [#allocation11], 65536
    $region81: #{forward.1} parent=1 // pred_fallthru
      _
    // Predicated region
    $region82: #{forward.1} parent=1 // pred_check
      _
    $region83: #{forward.1} parent=1 // pred_check_branch
      %200 = sbr.rel (0) target = $region85
    $region84: #{forward.1} parent=1 // pred_region
      %202 = dma.done [#allocation14], 64
    $region85: #{forward.1} parent=1 // pred_fallthru
      _
    // Predicated region
    $region86: #{forward.1} parent=1 // pred_check
      _
    $region87: #{forward.1} parent=1 // pred_check_branch
      %204 = sbr.rel (0) target = $region89
    $region88: #{forward.1} parent=1 // pred_region
      %206 = dma.done [#allocation14], 16384
    $region89: #{forward.1} parent=1 // pred_fallthru
      _
    // Predicated region
    $region90: #{forward.1} parent=1 // pred_check
      _
    $region91: #{forward.1} parent=1 // pred_check_branch
      %208 = sbr.rel (0) target = $region93
    $region92: #{forward.1} parent=1 // pred_region
      %210 = dma.done [#allocation17], 32
    $region93: #{forward.1} parent=1 // pred_fallthru
      _
    // Predicated region
    $region94: #{forward.1} parent=1 // pred_check
      _
    $region95: #{forward.1} parent=1 // pred_check_branch
      %212 = sbr.rel (0) target = $region97
    $region96: #{forward.1} parent=1 // pred_region
      %214 = dma.done [#allocation17], 4096
    $region97: #{forward.1} parent=1 // pred_fallthru
      _
    // Predicated region
    $region98: #{forward.1} parent=1 // pred_check
      _
    $region99: #{forward.1} parent=1 // pred_check_branch
      %216 = sbr.rel (0) target = $region101
    $region100: #{forward.1} parent=1 // pred_region
      %218 = dma.done [#allocation20], 16
    $region101: #{forward.1} parent=1 // pred_fallthru
      _
    %v219 = vld [vmem:[%s0] sm:$0xff]
    %v220 = vld [vmem:[#allocation2] sm:$0xff]
    %v221 = vld [vmem:[#allocation2 + $0x8] sm:$0xff]
    %v222 = vld [vmem:[#allocation2 + $0x10] sm:$0xff]
    %v223 = vld [vmem:[#allocation2 + $0x18] sm:$0xff]
    %v224 = vld [vmem:[#allocation2 + $0x20] sm:$0xff]
    %v225 = vld [vmem:[#allocation2 + $0x28] sm:$0xff]
    %v226 = vld [vmem:[#allocation2 + $0x30] sm:$0xff]
    %v227 = vld [vmem:[#allocation2 + $0x38] sm:$0xf]
    %v228 = vld [vmem:[#allocation4] sm:$0x1]
    %v230 = vperm.slane %v228, 0
    %vm232 = vcmask 490496
    %v234 = vsel %vm232, %v219, 0
    %vm236 = vcmask 1043456
    %v238 = vsel %vm236, %v227, 0
    %240 = vmatpush.msra.mxu0 0.0
    %241 = vmatpush.msra.mxu0 0.0
    %242 = vmatpush.msra.mxu0 0.0
    %243 = vmatpush.msra.mxu0 0.0
    %244 = vmatpush.msra.mxu0 0.0
    %245 = vmatpush.msra.mxu0 0.0
    %246 = vmatpush.msra.mxu0 0.0
    %247 = vmatpush.msra.mxu0 0.0
    %248 = vmatpush.msra.mxu0 %v238
    %249 = vmatpush.msra.mxu0 %v226
    %250 = vmatpush.msra.mxu0 %v225
    %251 = vmatpush.msra.mxu0 %v224
    %252 = vmatpush.msra.mxu0 %v223
    %253 = vmatpush.msra.mxu0 %v222
    %254 = vmatpush.msra.mxu0 %v221
    %255 = vmatpush.msra.mxu0 %v220
    %256 = vmatmul.f32.gmra.mxu0 %v234
    %v257 = vpop.f32.mrf.mxu0
    %v258 = vadd.f32 %v230, %v257
    %259 = vdwg.mxu0
    %v260 = vmax.f32 %v258, 0.0
    %v261 = vld [vmem:[#allocation6] sm:$0xff]
    %v262 = vld [vmem:[#allocation6 + $0x8] sm:$0xff]
    %v263 = vld [vmem:[#allocation6 + $0x10] sm:$0xff]
    %v264 = vld [vmem:[#allocation6 + $0x18] sm:$0xff]
    %v265 = vld [vmem:[#allocation6 + $0x20] sm:$0xff]
    %v266 = vld [vmem:[#allocation6 + $0x28] sm:$0xff]
    %v267 = vld [vmem:[#allocation6 + $0x30] sm:$0xff]
    %v268 = vld [vmem:[#allocation6 + $0x38] sm:$0xff]
    %v269 = vld [vmem:[#allocation6 + $0x40] sm:$0xff]
    %v270 = vld [vmem:[#allocation6 + $0x48] sm:$0xff]
    %v271 = vld [vmem:[#allocation6 + $0x50] sm:$0xff]
    %v272 = vld [vmem:[#allocation6 + $0x58] sm:$0xff]
    %v273 = vld [vmem:[#allocation6 + $0x60] sm:$0xff]
    %v274 = vld [vmem:[#allocation6 + $0x68] sm:$0xff]
    %v275 = vld [vmem:[#allocation6 + $0x70] sm:$0xff]
    %v276 = vld [vmem:[#allocation6 + $0x78] sm:$0xff]
    %v277 = vld [vmem:[#allocation6 + $0x80] sm:$0xff]
    %v278 = vld [vmem:[#allocation6 + $0x88] sm:$0xff]
    %v279 = vld [vmem:[#allocation6 + $0x90] sm:$0xff]
    %v280 = vld [vmem:[#allocation6 + $0x98] sm:$0xff]
    %v281 = vld [vmem:[#allocation6 + $0xa0] sm:$0xff]
    %v282 = vld [vmem:[#allocation6 + $0xa8] sm:$0xff]
    %v283 = vld [vmem:[#allocation6 + $0xb0] sm:$0xff]
    %v284 = vld [vmem:[#allocation6 + $0xb8] sm:$0xff]
    %v285 = vld [vmem:[#allocation6 + $0xc0] sm:$0xff]
    %v286 = vld [vmem:[#allocation6 + $0xc8] sm:$0xff]
    %v287 = vld [vmem:[#allocation6 + $0xd0] sm:$0xff]
    %v288 = vld [vmem:[#allocation6 + $0xd8] sm:$0xff]
    %v289 = vld [vmem:[#allocation6 + $0xe0] sm:$0xff]
    %v290 = vld [vmem:[#allocation6 + $0xe8] sm:$0xff]
    %v291 = vld [vmem:[#allocation6 + $0xf0] sm:$0xff]
    %v292 = vld [vmem:[#allocation6 + $0xf8] sm:$0xff]
    %v293 = vld [vmem:[#allocation6 + $0x100] sm:$0xff]
    %v294 = vld [vmem:[#allocation6 + $0x108] sm:$0xff]
    %v295 = vld [vmem:[#allocation6 + $0x110] sm:$0xff]
    %v296 = vld [vmem:[#allocation6 + $0x118] sm:$0xff]
    %v297 = vld [vmem:[#allocation6 + $0x120] sm:$0xff]
    %v298 = vld [vmem:[#allocation6 + $0x128] sm:$0xff]
    %v299 = vld [vmem:[#allocation6 + $0x130] sm:$0xff]
    %v300 = vld [vmem:[#allocation6 + $0x138] sm:$0xff]
    %v301 = vld [vmem:[#allocation6 + $0x140] sm:$0xff]
    %v302 = vld [vmem:[#allocation6 + $0x148] sm:$0xff]
    %v303 = vld [vmem:[#allocation6 + $0x150] sm:$0xff]
    %v304 = vld [vmem:[#allocation6 + $0x158] sm:$0xff]
    %v305 = vld [vmem:[#allocation6 + $0x160] sm:$0xff]
    %v306 = vld [vmem:[#allocation6 + $0x168] sm:$0xff]
    %v307 = vld [vmem:[#allocation6 + $0x170] sm:$0xff]
    %v308 = vld [vmem:[#allocation6 + $0x178] sm:$0xff]
    %v309 = vld [vmem:[#allocation6 + $0x180] sm:$0xff]
    %v310 = vld [vmem:[#allocation6 + $0x188] sm:$0xff]
    %v311 = vld [vmem:[#allocation6 + $0x190] sm:$0xff]
    %v312 = vld [vmem:[#allocation6 + $0x198] sm:$0xff]
    %v313 = vld [vmem:[#allocation6 + $0x1a0] sm:$0xff]
    %v314 = vld [vmem:[#allocation6 + $0x1a8] sm:$0xff]
    %v315 = vld [vmem:[#allocation6 + $0x1b0] sm:$0xff]
    %v316 = vld [vmem:[#allocation6 + $0x1b8] sm:$0xff]
    %v317 = vld [vmem:[#allocation6 + $0x1c0] sm:$0xff]
    %v318 = vld [vmem:[#allocation6 + $0x1c8] sm:$0xff]
    %v319 = vld [vmem:[#allocation6 + $0x1d0] sm:$0xff]
    %v320 = vld [vmem:[#allocation6 + $0x1d8] sm:$0xff]
    %v321 = vld [vmem:[#allocation6 + $0x1e0] sm:$0xff]
    %v322 = vld [vmem:[#allocation6 + $0x1e8] sm:$0xff]
    %v323 = vld [vmem:[#allocation6 + $0x1f0] sm:$0xff]
    %v324 = vld [vmem:[#allocation6 + $0x1f8] sm:$0xff]
    %v325 = vld [vmem:[#allocation6 + $0x200] sm:$0xff]
    %v326 = vld [vmem:[#allocation6 + $0x208] sm:$0xff]
    %v327 = vld [vmem:[#allocation6 + $0x210] sm:$0xff]
    %v328 = vld [vmem:[#allocation6 + $0x218] sm:$0xff]
    %v329 = vld [vmem:[#allocation6 + $0x220] sm:$0xff]
    %v330 = vld [vmem:[#allocation6 + $0x228] sm:$0xff]
    %v331 = vld [vmem:[#allocation6 + $0x230] sm:$0xf]
    %v332 = vld [vmem:[#allocation6 + $0x238] sm:$0xf]
    %v333 = vld [vmem:[#allocation6 + $0x240] sm:$0xf]
    %v334 = vld [vmem:[#allocation6 + $0x248] sm:$0xf]
    %v335 = vld [vmem:[#allocation6 + $0x250] sm:$0xf]
    %v336 = vld [vmem:[#allocation6 + $0x258] sm:$0xf]
    %v337 = vld [vmem:[#allocation6 + $0x260] sm:$0xf]
    %v338 = vld [vmem:[#allocation6 + $0x268] sm:$0xf]
    %v339 = vld [vmem:[#allocation6 + $0x270] sm:$0xf]
    %v340 = vld [vmem:[#allocation6 + $0x278] sm:$0xf]
    %v341 = vld [vmem:[#allocation7] sm:$0xff]
    %v342 = vld [vmem:[#allocation7 + $0x8] sm:$0x3]
    %v345 = vperm.slane %v341, 0
    %v346 = vperm.slane %v341, 1
    %v347 = vperm.slane %v341, 2
    %v348 = vperm.slane %v341, 3
    %v349 = vperm.slane %v341, 4
    %v350 = vperm.slane %v341, 5
    %v351 = vperm.slane %v341, 6
    %v352 = vperm.slane %v341, 7
    %v353 = vperm.slane %v342, 0
    %v354 = vperm.slane %v342, 1
    %v366 = vsel %vm232, %v260, 0
    %v369 = vsel %vm236, %v331, 0
    %v372 = vsel %vm236, %v332, 0
    %v375 = vsel %vm236, %v333, 0
    %v378 = vsel %vm236, %v334, 0
    %v381 = vsel %vm236, %v335, 0
    %v384 = vsel %vm236, %v336, 0
    %v387 = vsel %vm236, %v337, 0
    %v390 = vsel %vm236, %v338, 0
    %v393 = vsel %vm236, %v339, 0
    %v396 = vsel %vm236, %v340, 0
    %398 = vmatpush.msra.mxu0 0.0
    %399 = vmatpush.msra.mxu0 0.0
    %400 = vmatpush.msra.mxu0 0.0
    %401 = vmatpush.msra.mxu0 0.0
    %402 = vmatpush.msra.mxu0 0.0
    %403 = vmatpush.msra.mxu0 0.0
    %404 = vmatpush.msra.mxu0 0.0
    %405 = vmatpush.msra.mxu0 0.0
    %406 = vmatpush.msra.mxu0 %v369
    %407 = vmatpush.msra.mxu0 %v321
    %408 = vmatpush.msra.mxu0 %v311
    %409 = vmatpush.msra.mxu0 %v301
    %410 = vmatpush.msra.mxu0 %v291
    %411 = vmatpush.msra.mxu0 %v281
    %412 = vmatpush.msra.mxu0 %v271
    %413 = vmatpush.msra.mxu0 %v261
    %414 = vmatmul.f32.gmra.mxu0 %v366
    %v415 = vpop.f32.mrf.mxu0
    %v416 = vadd.f32 %v345, %v415
    %417 = vdwg.mxu0
    %418 = vmatpush.msra.mxu0 0.0
    %419 = vmatpush.msra.mxu0 0.0
    %420 = vmatpush.msra.mxu0 0.0
    %421 = vmatpush.msra.mxu0 0.0
    %422 = vmatpush.msra.mxu0 0.0
    %423 = vmatpush.msra.mxu0 0.0
    %424 = vmatpush.msra.mxu0 0.0
    %425 = vmatpush.msra.mxu0 0.0
    %426 = vmatpush.msra.mxu0 %v372
    %427 = vmatpush.msra.mxu0 %v322
    %428 = vmatpush.msra.mxu0 %v312
    %429 = vmatpush.msra.mxu0 %v302
    %430 = vmatpush.msra.mxu0 %v292
    %431 = vmatpush.msra.mxu0 %v282
    %432 = vmatpush.msra.mxu0 %v272
    %433 = vmatpush.msra.mxu0 %v262
    %434 = vmatmul.f32.gmra.mxu0 %v366
    %v435 = vpop.f32.mrf.mxu0
    %v436 = vadd.f32 %v346, %v435
    %437 = vdwg.mxu0
    %438 = vmatpush.msra.mxu0 0.0
    %439 = vmatpush.msra.mxu0 0.0
    %440 = vmatpush.msra.mxu0 0.0
    %441 = vmatpush.msra.mxu0 0.0
    %442 = vmatpush.msra.mxu0 0.0
    %443 = vmatpush.msra.mxu0 0.0
    %444 = vmatpush.msra.mxu0 0.0
    %445 = vmatpush.msra.mxu0 0.0
    %446 = vmatpush.msra.mxu0 %v375
    %447 = vmatpush.msra.mxu0 %v323
    %448 = vmatpush.msra.mxu0 %v313
    %449 = vmatpush.msra.mxu0 %v303
    %450 = vmatpush.msra.mxu0 %v293
    %451 = vmatpush.msra.mxu0 %v283
    %452 = vmatpush.msra.mxu0 %v273
    %453 = vmatpush.msra.mxu0 %v263
    %454 = vmatmul.f32.gmra.mxu0 %v366
    %v455 = vpop.f32.mrf.mxu0
    %v456 = vadd.f32 %v347, %v455
    %457 = vdwg.mxu0
    %458 = vmatpush.msra.mxu0 0.0
    %459 = vmatpush.msra.mxu0 0.0
    %460 = vmatpush.msra.mxu0 0.0
    %461 = vmatpush.msra.mxu0 0.0
    %462 = vmatpush.msra.mxu0 0.0
    %463 = vmatpush.msra.mxu0 0.0
    %464 = vmatpush.msra.mxu0 0.0
    %465 = vmatpush.msra.mxu0 0.0
    %466 = vmatpush.msra.mxu0 %v378
    %467 = vmatpush.msra.mxu0 %v324
    %468 = vmatpush.msra.mxu0 %v314
    %469 = vmatpush.msra.mxu0 %v304
    %470 = vmatpush.msra.mxu0 %v294
    %471 = vmatpush.msra.mxu0 %v284
    %472 = vmatpush.msra.mxu0 %v274
    %473 = vmatpush.msra.mxu0 %v264
    %474 = vmatmul.f32.gmra.mxu0 %v366
    %v475 = vpop.f32.mrf.mxu0
    %v476 = vadd.f32 %v348, %v475
    %477 = vdwg.mxu0
    %478 = vmatpush.msra.mxu0 0.0
    %479 = vmatpush.msra.mxu0 0.0
    %480 = vmatpush.msra.mxu0 0.0
    %481 = vmatpush.msra.mxu0 0.0
    %482 = vmatpush.msra.mxu0 0.0
    %483 = vmatpush.msra.mxu0 0.0
    %484 = vmatpush.msra.mxu0 0.0
    %485 = vmatpush.msra.mxu0 0.0
    %486 = vmatpush.msra.mxu0 %v381
    %487 = vmatpush.msra.mxu0 %v325
    %488 = vmatpush.msra.mxu0 %v315
    %489 = vmatpush.msra.mxu0 %v305
    %490 = vmatpush.msra.mxu0 %v295
    %491 = vmatpush.msra.mxu0 %v285
    %492 = vmatpush.msra.mxu0 %v275
    %493 = vmatpush.msra.mxu0 %v265
    %494 = vmatmul.f32.gmra.mxu0 %v366
    %v495 = vpop.f32.mrf.mxu0
    %v496 = vadd.f32 %v349, %v495
    %497 = vdwg.mxu0
    %498 = vmatpush.msra.mxu0 0.0
    %499 = vmatpush.msra.mxu0 0.0
    %500 = vmatpush.msra.mxu0 0.0
    %501 = vmatpush.msra.mxu0 0.0
    %502 = vmatpush.msra.mxu0 0.0
    %503 = vmatpush.msra.mxu0 0.0
    %504 = vmatpush.msra.mxu0 0.0
    %505 = vmatpush.msra.mxu0 0.0
    %506 = vmatpush.msra.mxu0 %v384
    %507 = vmatpush.msra.mxu0 %v326
    %508 = vmatpush.msra.mxu0 %v316
    %509 = vmatpush.msra.mxu0 %v306
    %510 = vmatpush.msra.mxu0 %v296
    %511 = vmatpush.msra.mxu0 %v286
    %512 = vmatpush.msra.mxu0 %v276
    %513 = vmatpush.msra.mxu0 %v266
    %514 = vmatmul.f32.gmra.mxu0 %v366
    %v515 = vpop.f32.mrf.mxu0
    %v516 = vadd.f32 %v350, %v515
    %517 = vdwg.mxu0
    %518 = vmatpush.msra.mxu0 0.0
    %519 = vmatpush.msra.mxu0 0.0
    %520 = vmatpush.msra.mxu0 0.0
    %521 = vmatpush.msra.mxu0 0.0
    %522 = vmatpush.msra.mxu0 0.0
    %523 = vmatpush.msra.mxu0 0.0
    %524 = vmatpush.msra.mxu0 0.0
    %525 = vmatpush.msra.mxu0 0.0
    %526 = vmatpush.msra.mxu0 %v387
    %527 = vmatpush.msra.mxu0 %v327
    %528 = vmatpush.msra.mxu0 %v317
    %529 = vmatpush.msra.mxu0 %v307
    %530 = vmatpush.msra.mxu0 %v297
    %531 = vmatpush.msra.mxu0 %v287
    %532 = vmatpush.msra.mxu0 %v277
    %533 = vmatpush.msra.mxu0 %v267
    %534 = vmatmul.f32.gmra.mxu0 %v366
    %v535 = vpop.f32.mrf.mxu0
    %v536 = vadd.f32 %v351, %v535
    %537 = vdwg.mxu0
    %538 = vmatpush.msra.mxu0 0.0
    %539 = vmatpush.msra.mxu0 0.0
    %540 = vmatpush.msra.mxu0 0.0
    %541 = vmatpush.msra.mxu0 0.0
    %542 = vmatpush.msra.mxu0 0.0
    %543 = vmatpush.msra.mxu0 0.0
    %544 = vmatpush.msra.mxu0 0.0
    %545 = vmatpush.msra.mxu0 0.0
    %546 = vmatpush.msra.mxu0 %v390
    %547 = vmatpush.msra.mxu0 %v328
    %548 = vmatpush.msra.mxu0 %v318
    %549 = vmatpush.msra.mxu0 %v308
    %550 = vmatpush.msra.mxu0 %v298
    %551 = vmatpush.msra.mxu0 %v288
    %552 = vmatpush.msra.mxu0 %v278
    %553 = vmatpush.msra.mxu0 %v268
    %554 = vmatmul.f32.gmra.mxu0 %v366
    %v555 = vpop.f32.mrf.mxu0
    %v556 = vadd.f32 %v352, %v555
    %557 = vdwg.mxu0
    %558 = vmatpush.msra.mxu0 0.0
    %559 = vmatpush.msra.mxu0 0.0
    %560 = vmatpush.msra.mxu0 0.0
    %561 = vmatpush.msra.mxu0 0.0
    %562 = vmatpush.msra.mxu0 0.0
    %563 = vmatpush.msra.mxu0 0.0
    %564 = vmatpush.msra.mxu0 0.0
    %565 = vmatpush.msra.mxu0 0.0
    %566 = vmatpush.msra.mxu0 %v393
    %567 = vmatpush.msra.mxu0 %v329
    %568 = vmatpush.msra.mxu0 %v319
    %569 = vmatpush.msra.mxu0 %v309
    %570 = vmatpush.msra.mxu0 %v299
    %571 = vmatpush.msra.mxu0 %v289
    %572 = vmatpush.msra.mxu0 %v279
    %573 = vmatpush.msra.mxu0 %v269
    %574 = vmatmul.f32.gmra.mxu0 %v366
    %v575 = vpop.f32.mrf.mxu0
    %v576 = vadd.f32 %v353, %v575
    %577 = vdwg.mxu0
    %578 = vmatpush.msra.mxu0 0.0
    %579 = vmatpush.msra.mxu0 0.0
    %580 = vmatpush.msra.mxu0 0.0
    %581 = vmatpush.msra.mxu0 0.0
    %582 = vmatpush.msra.mxu0 0.0
    %583 = vmatpush.msra.mxu0 0.0
    %584 = vmatpush.msra.mxu0 0.0
    %585 = vmatpush.msra.mxu0 0.0
    %586 = vmatpush.msra.mxu0 %v396
    %587 = vmatpush.msra.mxu0 %v330
    %588 = vmatpush.msra.mxu0 %v320
    %589 = vmatpush.msra.mxu0 %v310
    %590 = vmatpush.msra.mxu0 %v300
    %591 = vmatpush.msra.mxu0 %v290
    %592 = vmatpush.msra.mxu0 %v280
    %593 = vmatpush.msra.mxu0 %v270
    %594 = vmatmul.f32.gmra.mxu0 %v366
    %v595 = vpop.f32.mrf.mxu0
    %v596 = vadd.f32 %v354, %v595
    %597 = vdwg.mxu0
    %v598 = vmax.f32 %v416, 0.0
    %v599 = vmax.f32 %v436, 0.0
    %v600 = vmax.f32 %v456, 0.0
    %v601 = vmax.f32 %v476, 0.0
    %v602 = vmax.f32 %v496, 0.0
    %v603 = vmax.f32 %v516, 0.0
    %v604 = vmax.f32 %v536, 0.0
    %v605 = vmax.f32 %v556, 0.0
    %v606 = vmax.f32 %v576, 0.0
    %v607 = vmax.f32 %v596, 0.0
    %v608 = vld [vmem:[#allocation9] sm:$0xff]
    %v609 = vld [vmem:[#allocation9 + $0x8] sm:$0xff]
    %v610 = vld [vmem:[#allocation9 + $0x10] sm:$0xff]
    %v611 = vld [vmem:[#allocation9 + $0x18] sm:$0xff]
    %v612 = vld [vmem:[#allocation9 + $0x20] sm:$0xff]
    %v613 = vld [vmem:[#allocation9 + $0x28] sm:$0xff]
    %v614 = vld [vmem:[#allocation9 + $0x30] sm:$0xff]
    %v615 = vld [vmem:[#allocation9 + $0x38] sm:$0xff]
    %v616 = vld [vmem:[#allocation9 + $0x40] sm:$0xff]
    %v617 = vld [vmem:[#allocation9 + $0x48] sm:$0xff]
    %v618 = vld [vmem:[#allocation9 + $0x50] sm:$0xff]
    %v619 = vld [vmem:[#allocation9 + $0x58] sm:$0xff]
    %v620 = vld [vmem:[#allocation9 + $0x60] sm:$0xff]
    %v621 = vld [vmem:[#allocation9 + $0x68] sm:$0xff]
    %v622 = vld [vmem:[#allocation9 + $0x70] sm:$0xff]
    %v623 = vld [vmem:[#allocation9 + $0x78] sm:$0xff]
    %v624 = vld [vmem:[#allocation9 + $0x80] sm:$0xff]
    %v625 = vld [vmem:[#allocation9 + $0x88] sm:$0xff]
    %v626 = vld [vmem:[#allocation9 + $0x90] sm:$0xff]
    %v627 = vld [vmem:[#allocation9 + $0x98] sm:$0xff]
    %v628 = vld [vmem:[#allocation9 + $0xa0] sm:$0xff]
    %v629 = vld [vmem:[#allocation9 + $0xa8] sm:$0xff]
    %v630 = vld [vmem:[#allocation9 + $0xb0] sm:$0xff]
    %v631 = vld [vmem:[#allocation9 + $0xb8] sm:$0xff]
    %v632 = vld [vmem:[#allocation9 + $0xc0] sm:$0xff]
    %v633 = vld [vmem:[#allocation9 + $0xc8] sm:$0xff]
    %v634 = vld [vmem:[#allocation9 + $0xd0] sm:$0xff]
    %v635 = vld [vmem:[#allocation9 + $0xd8] sm:$0xff]
    %v636 = vld [vmem:[#allocation9 + $0xe0] sm:$0xff]
    %v637 = vld [vmem:[#allocation9 + $0xe8] sm:$0xff]
    %v638 = vld [vmem:[#allocation9 + $0xf0] sm:$0xff]
    %v639 = vld [vmem:[#allocation9 + $0xf8] sm:$0xff]
    %v640 = vld [vmem:[#allocation9 + $0x100] sm:$0xff]
    %v641 = vld [vmem:[#allocation9 + $0x108] sm:$0xff]
    %v642 = vld [vmem:[#allocation9 + $0x110] sm:$0xff]
    %v643 = vld [vmem:[#allocation9 + $0x118] sm:$0xff]
    %v644 = vld [vmem:[#allocation9 + $0x120] sm:$0xff]
    %v645 = vld [vmem:[#allocation9 + $0x128] sm:$0xff]
    %v646 = vld [vmem:[#allocation9 + $0x130] sm:$0xff]
    %v647 = vld [vmem:[#allocation9 + $0x138] sm:$0xff]
    %v648 = vld [vmem:[#allocation9 + $0x140] sm:$0xff]
    %v649 = vld [vmem:[#allocation9 + $0x148] sm:$0xff]
    %v650 = vld [vmem:[#allocation9 + $0x150] sm:$0xff]
    %v651 = vld [vmem:[#allocation9 + $0x158] sm:$0xff]
    %v652 = vld [vmem:[#allocation9 + $0x160] sm:$0xff]
    %v653 = vld [vmem:[#allocation9 + $0x168] sm:$0xff]
    %v654 = vld [vmem:[#allocation9 + $0x170] sm:$0xff]
    %v655 = vld [vmem:[#allocation9 + $0x178] sm:$0xff]
    %v656 = vld [vmem:[#allocation9 + $0x180] sm:$0xff]
    %v657 = vld [vmem:[#allocation9 + $0x188] sm:$0xff]
    %v658 = vld [vmem:[#allocation9 + $0x190] sm:$0xff]
    %v659 = vld [vmem:[#allocation9 + $0x198] sm:$0xff]
    %v660 = vld [vmem:[#allocation9 + $0x1a0] sm:$0xff]
    %v661 = vld [vmem:[#allocation9 + $0x1a8] sm:$0xff]
    %v662 = vld [vmem:[#allocation9 + $0x1b0] sm:$0xff]
    %v663 = vld [vmem:[#allocation9 + $0x1b8] sm:$0xff]
    %v664 = vld [vmem:[#allocation9 + $0x1c0] sm:$0xff]
    %v665 = vld [vmem:[#allocation9 + $0x1c8] sm:$0xff]
    %v666 = vld [vmem:[#allocation9 + $0x1d0] sm:$0xff]
    %v667 = vld [vmem:[#allocation9 + $0x1d8] sm:$0xff]
    %v668 = vld [vmem:[#allocation9 + $0x1e0] sm:$0xff]
    %v669 = vld [vmem:[#allocation9 + $0x1e8] sm:$0xff]
    %v670 = vld [vmem:[#allocation9 + $0x1f0] sm:$0xff]
    %v671 = vld [vmem:[#allocation9 + $0x1f8] sm:$0xff]
    %vm672 = vcmask 523264
    %v674 = vsel %vm672, %v598, 0
    %676 = vmatpush.msra.mxu0 0.0
    %677 = vmatpush.msra.mxu0 0.0
    %678 = vmatpush.msra.mxu0 0.0
    %679 = vmatpush.msra.mxu0 0.0
    %680 = vmatpush.msra.mxu0 0.0
    %681 = vmatpush.msra.mxu0 0.0
    %682 = vmatpush.msra.mxu0 0.0
    %683 = vmatpush.msra.mxu0 0.0
    %684 = vmatpush.msra.mxu0 %v664
    %685 = vmatpush.msra.mxu0 %v656
    %686 = vmatpush.msra.mxu0 %v648
    %687 = vmatpush.msra.mxu0 %v640
    %688 = vmatpush.msra.mxu0 %v632
    %689 = vmatpush.msra.mxu0 %v624
    %690 = vmatpush.msra.mxu0 %v616
    %691 = vmatpush.msra.mxu0 %v608
    %692 = vmatmul.f32.gmra.mxu0 %v674
    %v693 = vpop.f32.mrf.mxu0
    %v694 = vadd.f32 0.0, %v693
    %695 = vdwg.mxu0
    %696 = vmatpush.msra.mxu0 0.0
    %697 = vmatpush.msra.mxu0 0.0
    %698 = vmatpush.msra.mxu0 0.0
    %699 = vmatpush.msra.mxu0 0.0
    %700 = vmatpush.msra.mxu0 0.0
    %701 = vmatpush.msra.mxu0 0.0
    %702 = vmatpush.msra.mxu0 0.0
    %703 = vmatpush.msra.mxu0 0.0
    %704 = vmatpush.msra.mxu0 %v665
    %705 = vmatpush.msra.mxu0 %v657
    %706 = vmatpush.msra.mxu0 %v649
    %707 = vmatpush.msra.mxu0 %v641
    %708 = vmatpush.msra.mxu0 %v633
    %709 = vmatpush.msra.mxu0 %v625
    %710 = vmatpush.msra.mxu0 %v617
    %711 = vmatpush.msra.mxu0 %v609
    %712 = vmatmul.f32.gmra.mxu0 %v674
    %v713 = vpop.f32.mrf.mxu0
    %v714 = vadd.f32 0.0, %v713
    %715 = vdwg.mxu0
    %716 = vmatpush.msra.mxu0 0.0
    %717 = vmatpush.msra.mxu0 0.0
    %718 = vmatpush.msra.mxu0 0.0
    %719 = vmatpush.msra.mxu0 0.0
    %720 = vmatpush.msra.mxu0 0.0
    %721 = vmatpush.msra.mxu0 0.0
    %722 = vmatpush.msra.mxu0 0.0
    %723 = vmatpush.msra.mxu0 0.0
    %724 = vmatpush.msra.mxu0 %v666
    %725 = vmatpush.msra.mxu0 %v658
    %726 = vmatpush.msra.mxu0 %v650
    %727 = vmatpush.msra.mxu0 %v642
    %728 = vmatpush.msra.mxu0 %v634
    %729 = vmatpush.msra.mxu0 %v626
    %730 = vmatpush.msra.mxu0 %v618
    %731 = vmatpush.msra.mxu0 %v610
    %732 = vmatmul.f32.gmra.mxu0 %v674
    %v733 = vpop.f32.mrf.mxu0
    %v734 = vadd.f32 0.0, %v733
    %735 = vdwg.mxu0
    %736 = vmatpush.msra.mxu0 0.0
    %737 = vmatpush.msra.mxu0 0.0
    %738 = vmatpush.msra.mxu0 0.0
    %739 = vmatpush.msra.mxu0 0.0
    %740 = vmatpush.msra.mxu0 0.0
    %741 = vmatpush.msra.mxu0 0.0
    %742 = vmatpush.msra.mxu0 0.0
    %743 = vmatpush.msra.mxu0 0.0
    %744 = vmatpush.msra.mxu0 %v667
    %745 = vmatpush.msra.mxu0 %v659
    %746 = vmatpush.msra.mxu0 %v651
    %747 = vmatpush.msra.mxu0 %v643
    %748 = vmatpush.msra.mxu0 %v635
    %749 = vmatpush.msra.mxu0 %v627
    %750 = vmatpush.msra.mxu0 %v619
    %751 = vmatpush.msra.mxu0 %v611
    %752 = vmatmul.f32.gmra.mxu0 %v674
    %v753 = vpop.f32.mrf.mxu0
    %v754 = vadd.f32 0.0, %v753
    %755 = vdwg.mxu0
    %756 = vmatpush.msra.mxu0 0.0
    %757 = vmatpush.msra.mxu0 0.0
    %758 = vmatpush.msra.mxu0 0.0
    %759 = vmatpush.msra.mxu0 0.0
    %760 = vmatpush.msra.mxu0 0.0
    %761 = vmatpush.msra.mxu0 0.0
    %762 = vmatpush.msra.mxu0 0.0
    %763 = vmatpush.msra.mxu0 0.0
    %764 = vmatpush.msra.mxu0 %v668
    %765 = vmatpush.msra.mxu0 %v660
    %766 = vmatpush.msra.mxu0 %v652
    %767 = vmatpush.msra.mxu0 %v644
    %768 = vmatpush.msra.mxu0 %v636
    %769 = vmatpush.msra.mxu0 %v628
    %770 = vmatpush.msra.mxu0 %v620
    %771 = vmatpush.msra.mxu0 %v612
    %772 = vmatmul.f32.gmra.mxu0 %v674
    %v773 = vpop.f32.mrf.mxu0
    %v774 = vadd.f32 0.0, %v773
    %775 = vdwg.mxu0
    %776 = vmatpush.msra.mxu0 0.0
    %777 = vmatpush.msra.mxu0 0.0
    %778 = vmatpush.msra.mxu0 0.0
    %779 = vmatpush.msra.mxu0 0.0
    %780 = vmatpush.msra.mxu0 0.0
    %781 = vmatpush.msra.mxu0 0.0
    %782 = vmatpush.msra.mxu0 0.0
    %783 = vmatpush.msra.mxu0 0.0
    %784 = vmatpush.msra.mxu0 %v669
    %785 = vmatpush.msra.mxu0 %v661
    %786 = vmatpush.msra.mxu0 %v653
    %787 = vmatpush.msra.mxu0 %v645
    %788 = vmatpush.msra.mxu0 %v637
    %789 = vmatpush.msra.mxu0 %v629
    %790 = vmatpush.msra.mxu0 %v621
    %791 = vmatpush.msra.mxu0 %v613
    %792 = vmatmul.f32.gmra.mxu0 %v674
    %v793 = vpop.f32.mrf.mxu0
    %v794 = vadd.f32 0.0, %v793
    %795 = vdwg.mxu0
    %796 = vmatpush.msra.mxu0 0.0
    %797 = vmatpush.msra.mxu0 0.0
    %798 = vmatpush.msra.mxu0 0.0
    %799 = vmatpush.msra.mxu0 0.0
    %800 = vmatpush.msra.mxu0 0.0
    %801 = vmatpush.msra.mxu0 0.0
    %802 = vmatpush.msra.mxu0 0.0
    %803 = vmatpush.msra.mxu0 0.0
    %804 = vmatpush.msra.mxu0 %v670
    %805 = vmatpush.msra.mxu0 %v662
    %806 = vmatpush.msra.mxu0 %v654
    %807 = vmatpush.msra.mxu0 %v646
    %808 = vmatpush.msra.mxu0 %v638
    %809 = vmatpush.msra.mxu0 %v630
    %810 = vmatpush.msra.mxu0 %v622
    %811 = vmatpush.msra.mxu0 %v614
    %812 = vmatmul.f32.gmra.mxu0 %v674
    %v813 = vpop.f32.mrf.mxu0
    %v814 = vadd.f32 0.0, %v813
    %815 = vdwg.mxu0
    %816 = vmatpush.msra.mxu0 0.0
    %817 = vmatpush.msra.mxu0 0.0
    %818 = vmatpush.msra.mxu0 0.0
    %819 = vmatpush.msra.mxu0 0.0
    %820 = vmatpush.msra.mxu0 0.0
    %821 = vmatpush.msra.mxu0 0.0
    %822 = vmatpush.msra.mxu0 0.0
    %823 = vmatpush.msra.mxu0 0.0
    %824 = vmatpush.msra.mxu0 %v671
    %825 = vmatpush.msra.mxu0 %v663
    %826 = vmatpush.msra.mxu0 %v655
    %827 = vmatpush.msra.mxu0 %v647
    %828 = vmatpush.msra.mxu0 %v639
    %829 = vmatpush.msra.mxu0 %v631
    %830 = vmatpush.msra.mxu0 %v623
    %831 = vmatpush.msra.mxu0 %v615
    %832 = vmatmul.f32.gmra.mxu0 %v674
    %v833 = vpop.f32.mrf.mxu0
    %v834 = vadd.f32 0.0, %v833
    %835 = vdwg.mxu0
    %836 = vrot.lane.b32.xlu0 %v598, 64
    %v837 = vpop.permute.xlu0 %836
    %v838 = vsel %vm672, %v837, 0
    %840 = vmatpush.msra.mxu0 0.0
    %841 = vmatpush.msra.mxu0 0.0
    %842 = vmatpush.msra.mxu0 0.0
    %843 = vmatpush.msra.mxu0 0.0
    %844 = vmatpush.msra.mxu0 0.0
    %845 = vmatpush.msra.mxu0 0.0
    %846 = vmatpush.msra.mxu0 0.0
    %847 = vmatpush.msra.mxu0 0.0
    %848 = vmatpush.msra.mxu0 %v664
    %849 = vmatpush.msra.mxu0 %v656
    %850 = vmatpush.msra.mxu0 %v648
    %851 = vmatpush.msra.mxu0 %v640
    %852 = vmatpush.msra.mxu0 %v632
    %853 = vmatpush.msra.mxu0 %v624
    %854 = vmatpush.msra.mxu0 %v616
    %855 = vmatpush.msra.mxu0 %v608
    %856 = vmatmul.f32.gmra.mxu0 %v838
    %v857 = vpop.f32.mrf.mxu0
    %v858 = vadd.f32 0.0, %v857
    %859 = vdwg.mxu0
    %860 = vmatpush.msra.mxu0 0.0
    %861 = vmatpush.msra.mxu0 0.0
    %862 = vmatpush.msra.mxu0 0.0
    %863 = vmatpush.msra.mxu0 0.0
    %864 = vmatpush.msra.mxu0 0.0
    %865 = vmatpush.msra.mxu0 0.0
    %866 = vmatpush.msra.mxu0 0.0
    %867 = vmatpush.msra.mxu0 0.0
    %868 = vmatpush.msra.mxu0 %v665
    %869 = vmatpush.msra.mxu0 %v657
    %870 = vmatpush.msra.mxu0 %v649
    %871 = vmatpush.msra.mxu0 %v641
    %872 = vmatpush.msra.mxu0 %v633
    %873 = vmatpush.msra.mxu0 %v625
    %874 = vmatpush.msra.mxu0 %v617
    %875 = vmatpush.msra.mxu0 %v609
    %876 = vmatmul.f32.gmra.mxu0 %v838
    %v877 = vpop.f32.mrf.mxu0
    %v878 = vadd.f32 0.0, %v877
    %879 = vdwg.mxu0
    %880 = vmatpush.msra.mxu0 0.0
    %881 = vmatpush.msra.mxu0 0.0
    %882 = vmatpush.msra.mxu0 0.0
    %883 = vmatpush.msra.mxu0 0.0
    %884 = vmatpush.msra.mxu0 0.0
    %885 = vmatpush.msra.mxu0 0.0
    %886 = vmatpush.msra.mxu0 0.0
    %887 = vmatpush.msra.mxu0 0.0
    %888 = vmatpush.msra.mxu0 %v666
    %889 = vmatpush.msra.mxu0 %v658
    %890 = vmatpush.msra.mxu0 %v650
    %891 = vmatpush.msra.mxu0 %v642
    %892 = vmatpush.msra.mxu0 %v634
    %893 = vmatpush.msra.mxu0 %v626
    %894 = vmatpush.msra.mxu0 %v618
    %895 = vmatpush.msra.mxu0 %v610
    %896 = vmatmul.f32.gmra.mxu0 %v838
    %v897 = vpop.f32.mrf.mxu0
    %v898 = vadd.f32 0.0, %v897
    %899 = vdwg.mxu0
    %900 = vmatpush.msra.mxu0 0.0
    %901 = vmatpush.msra.mxu0 0.0
    %902 = vmatpush.msra.mxu0 0.0
    %903 = vmatpush.msra.mxu0 0.0
    %904 = vmatpush.msra.mxu0 0.0
    %905 = vmatpush.msra.mxu0 0.0
    %906 = vmatpush.msra.mxu0 0.0
    %907 = vmatpush.msra.mxu0 0.0
    %908 = vmatpush.msra.mxu0 %v667
    %909 = vmatpush.msra.mxu0 %v659
    %910 = vmatpush.msra.mxu0 %v651
    %911 = vmatpush.msra.mxu0 %v643
    %912 = vmatpush.msra.mxu0 %v635
    %913 = vmatpush.msra.mxu0 %v627
    %914 = vmatpush.msra.mxu0 %v619
    %915 = vmatpush.msra.mxu0 %v611
    %916 = vmatmul.f32.gmra.mxu0 %v838
    %v917 = vpop.f32.mrf.mxu0
    %v918 = vadd.f32 0.0, %v917
    %919 = vdwg.mxu0
    %920 = vmatpush.msra.mxu0 0.0
    %921 = vmatpush.msra.mxu0 0.0
    %922 = vmatpush.msra.mxu0 0.0
    %923 = vmatpush.msra.mxu0 0.0
    %924 = vmatpush.msra.mxu0 0.0
    %925 = vmatpush.msra.mxu0 0.0
    %926 = vmatpush.msra.mxu0 0.0
    %927 = vmatpush.msra.mxu0 0.0
    %928 = vmatpush.msra.mxu0 %v668
    %929 = vmatpush.msra.mxu0 %v660
    %930 = vmatpush.msra.mxu0 %v652
    %931 = vmatpush.msra.mxu0 %v644
    %932 = vmatpush.msra.mxu0 %v636
    %933 = vmatpush.msra.mxu0 %v628
    %934 = vmatpush.msra.mxu0 %v620
    %935 = vmatpush.msra.mxu0 %v612
    %936 = vmatmul.f32.gmra.mxu0 %v838
    %v937 = vpop.f32.mrf.mxu0
    %v938 = vadd.f32 0.0, %v937
    %939 = vdwg.mxu0
    %940 = vmatpush.msra.mxu0 0.0
    %941 = vmatpush.msra.mxu0 0.0
    %942 = vmatpush.msra.mxu0 0.0
    %943 = vmatpush.msra.mxu0 0.0
    %944 = vmatpush.msra.mxu0 0.0
    %945 = vmatpush.msra.mxu0 0.0
    %946 = vmatpush.msra.mxu0 0.0
    %947 = vmatpush.msra.mxu0 0.0
    %948 = vmatpush.msra.mxu0 %v669
    %949 = vmatpush.msra.mxu0 %v661
    %950 = vmatpush.msra.mxu0 %v653
    %951 = vmatpush.msra.mxu0 %v645
    %952 = vmatpush.msra.mxu0 %v637
    %953 = vmatpush.msra.mxu0 %v629
    %954 = vmatpush.msra.mxu0 %v621
    %955 = vmatpush.msra.mxu0 %v613
    %956 = vmatmul.f32.gmra.mxu0 %v838
    %v957 = vpop.f32.mrf.mxu0
    %v958 = vadd.f32 0.0, %v957
    %959 = vdwg.mxu0
    %960 = vmatpush.msra.mxu0 0.0
    %961 = vmatpush.msra.mxu0 0.0
    %962 = vmatpush.msra.mxu0 0.0
    %963 = vmatpush.msra.mxu0 0.0
    %964 = vmatpush.msra.mxu0 0.0
    %965 = vmatpush.msra.mxu0 0.0
    %966 = vmatpush.msra.mxu0 0.0
    %967 = vmatpush.msra.mxu0 0.0
    %968 = vmatpush.msra.mxu0 %v670
    %969 = vmatpush.msra.mxu0 %v662
    %970 = vmatpush.msra.mxu0 %v654
    %971 = vmatpush.msra.mxu0 %v646
    %972 = vmatpush.msra.mxu0 %v638
    %973 = vmatpush.msra.mxu0 %v630
    %974 = vmatpush.msra.mxu0 %v622
    %975 = vmatpush.msra.mxu0 %v614
    %976 = vmatmul.f32.gmra.mxu0 %v838
    %v977 = vpop.f32.mrf.mxu0
    %v978 = vadd.f32 0.0, %v977
    %979 = vdwg.mxu0
    %980 = vmatpush.msra.mxu0 0.0
    %981 = vmatpush.msra.mxu0 0.0
    %982 = vmatpush.msra.mxu0 0.0
    %983 = vmatpush.msra.mxu0 0.0
    %984 = vmatpush.msra.mxu0 0.0
    %985 = vmatpush.msra.mxu0 0.0
    %986 = vmatpush.msra.mxu0 0.0
    %987 = vmatpush.msra.mxu0 0.0
    %988 = vmatpush.msra.mxu0 %v671
    %989 = vmatpush.msra.mxu0 %v663
    %990 = vmatpush.msra.mxu0 %v655
    %991 = vmatpush.msra.mxu0 %v647
    %992 = vmatpush.msra.mxu0 %v639
    %993 = vmatpush.msra.mxu0 %v631
    %994 = vmatpush.msra.mxu0 %v623
    %995 = vmatpush.msra.mxu0 %v615
    %996 = vmatmul.f32.gmra.mxu0 %v838
    %v997 = vpop.f32.mrf.mxu0
    %v998 = vadd.f32 0.0, %v997
    %999 = vdwg.mxu0
    %v1000 = vmax.f32 %v694, %v858
    %v1001 = vmax.f32 %v714, %v878
    %v1002 = vmax.f32 %v734, %v898
    %v1003 = vmax.f32 %v754, %v918
    %v1004 = vmax.f32 %v774, %v938
    %v1005 = vmax.f32 %v794, %v958
    %v1006 = vmax.f32 %v814, %v978
    %v1007 = vmax.f32 %v834, %v998
    %v1009 = vsel %vm672, %v599, 0
    %1011 = vmatpush.msra.mxu0 0.0
    %1012 = vmatpush.msra.mxu0 0.0
    %1013 = vmatpush.msra.mxu0 0.0
    %1014 = vmatpush.msra.mxu0 0.0
    %1015 = vmatpush.msra.mxu0 0.0
    %1016 = vmatpush.msra.mxu0 0.0
    %1017 = vmatpush.msra.mxu0 0.0
    %1018 = vmatpush.msra.mxu0 0.0
    %1019 = vmatpush.msra.mxu0 %v664
    %1020 = vmatpush.msra.mxu0 %v656
    %1021 = vmatpush.msra.mxu0 %v648
    %1022 = vmatpush.msra.mxu0 %v640
    %1023 = vmatpush.msra.mxu0 %v632
    %1024 = vmatpush.msra.mxu0 %v624
    %1025 = vmatpush.msra.mxu0 %v616
    %1026 = vmatpush.msra.mxu0 %v608
    %1027 = vmatmul.f32.gmra.mxu0 %v1009
    %v1028 = vpop.f32.mrf.mxu0
    %v1029 = vadd.f32 0.0, %v1028
    %1030 = vdwg.mxu0
    %1031 = vmatpush.msra.mxu0 0.0
    %1032 = vmatpush.msra.mxu0 0.0
    %1033 = vmatpush.msra.mxu0 0.0
    %1034 = vmatpush.msra.mxu0 0.0
    %1035 = vmatpush.msra.mxu0 0.0
    %1036 = vmatpush.msra.mxu0 0.0
    %1037 = vmatpush.msra.mxu0 0.0
    %1038 = vmatpush.msra.mxu0 0.0
    %1039 = vmatpush.msra.mxu0 %v665
    %1040 = vmatpush.msra.mxu0 %v657
    %1041 = vmatpush.msra.mxu0 %v649
    %1042 = vmatpush.msra.mxu0 %v641
    %1043 = vmatpush.msra.mxu0 %v633
    %1044 = vmatpush.msra.mxu0 %v625
    %1045 = vmatpush.msra.mxu0 %v617
    %1046 = vmatpush.msra.mxu0 %v609
    %1047 = vmatmul.f32.gmra.mxu0 %v1009
    %v1048 = vpop.f32.mrf.mxu0
    %v1049 = vadd.f32 0.0, %v1048
    %1050 = vdwg.mxu0
    %1051 = vmatpush.msra.mxu0 0.0
    %1052 = vmatpush.msra.mxu0 0.0
    %1053 = vmatpush.msra.mxu0 0.0
    %1054 = vmatpush.msra.mxu0 0.0
    %1055 = vmatpush.msra.mxu0 0.0
    %1056 = vmatpush.msra.mxu0 0.0
    %1057 = vmatpush.msra.mxu0 0.0
    %1058 = vmatpush.msra.mxu0 0.0
    %1059 = vmatpush.msra.mxu0 %v666
    %1060 = vmatpush.msra.mxu0 %v658
    %1061 = vmatpush.msra.mxu0 %v650
    %1062 = vmatpush.msra.mxu0 %v642
    %1063 = vmatpush.msra.mxu0 %v634
    %1064 = vmatpush.msra.mxu0 %v626
    %1065 = vmatpush.msra.mxu0 %v618
    %1066 = vmatpush.msra.mxu0 %v610
    %1067 = vmatmul.f32.gmra.mxu0 %v1009
    %v1068 = vpop.f32.mrf.mxu0
    %v1069 = vadd.f32 0.0, %v1068
    %1070 = vdwg.mxu0
    %1071 = vmatpush.msra.mxu0 0.0
    %1072 = vmatpush.msra.mxu0 0.0
    %1073 = vmatpush.msra.mxu0 0.0
    %1074 = vmatpush.msra.mxu0 0.0
    %1075 = vmatpush.msra.mxu0 0.0
    %1076 = vmatpush.msra.mxu0 0.0
    %1077 = vmatpush.msra.mxu0 0.0
    %1078 = vmatpush.msra.mxu0 0.0
    %1079 = vmatpush.msra.mxu0 %v667
    %1080 = vmatpush.msra.mxu0 %v659
    %1081 = vmatpush.msra.mxu0 %v651
    %1082 = vmatpush.msra.mxu0 %v643
    %1083 = vmatpush.msra.mxu0 %v635
    %1084 = vmatpush.msra.mxu0 %v627
    %1085 = vmatpush.msra.mxu0 %v619
    %1086 = vmatpush.msra.mxu0 %v611
    %1087 = vmatmul.f32.gmra.mxu0 %v1009
    %v1088 = vpop.f32.mrf.mxu0
    %v1089 = vadd.f32 0.0, %v1088
    %1090 = vdwg.mxu0
    %1091 = vmatpush.msra.mxu0 0.0
    %1092 = vmatpush.msra.mxu0 0.0
    %1093 = vmatpush.msra.mxu0 0.0
    %1094 = vmatpush.msra.mxu0 0.0
    %1095 = vmatpush.msra.mxu0 0.0
    %1096 = vmatpush.msra.mxu0 0.0
    %1097 = vmatpush.msra.mxu0 0.0
    %1098 = vmatpush.msra.mxu0 0.0
    %1099 = vmatpush.msra.mxu0 %v668
    %1100 = vmatpush.msra.mxu0 %v660
    %1101 = vmatpush.msra.mxu0 %v652
    %1102 = vmatpush.msra.mxu0 %v644
    %1103 = vmatpush.msra.mxu0 %v636
    %1104 = vmatpush.msra.mxu0 %v628
    %1105 = vmatpush.msra.mxu0 %v620
    %1106 = vmatpush.msra.mxu0 %v612
    %1107 = vmatmul.f32.gmra.mxu0 %v1009
    %v1108 = vpop.f32.mrf.mxu0
    %v1109 = vadd.f32 0.0, %v1108
    %1110 = vdwg.mxu0
    %1111 = vmatpush.msra.mxu0 0.0
    %1112 = vmatpush.msra.mxu0 0.0
    %1113 = vmatpush.msra.mxu0 0.0
    %1114 = vmatpush.msra.mxu0 0.0
    %1115 = vmatpush.msra.mxu0 0.0
    %1116 = vmatpush.msra.mxu0 0.0
    %1117 = vmatpush.msra.mxu0 0.0
    %1118 = vmatpush.msra.mxu0 0.0
    %1119 = vmatpush.msra.mxu0 %v669
    %1120 = vmatpush.msra.mxu0 %v661
    %1121 = vmatpush.msra.mxu0 %v653
    %1122 = vmatpush.msra.mxu0 %v645
    %1123 = vmatpush.msra.mxu0 %v637
    %1124 = vmatpush.msra.mxu0 %v629
    %1125 = vmatpush.msra.mxu0 %v621
    %1126 = vmatpush.msra.mxu0 %v613
    %1127 = vmatmul.f32.gmra.mxu0 %v1009
    %v1128 = vpop.f32.mrf.mxu0
    %v1129 = vadd.f32 0.0, %v1128
    %1130 = vdwg.mxu0
    %1131 = vmatpush.msra.mxu0 0.0
    %1132 = vmatpush.msra.mxu0 0.0
    %1133 = vmatpush.msra.mxu0 0.0
    %1134 = vmatpush.msra.mxu0 0.0
    %1135 = vmatpush.msra.mxu0 0.0
    %1136 = vmatpush.msra.mxu0 0.0
    %1137 = vmatpush.msra.mxu0 0.0
    %1138 = vmatpush.msra.mxu0 0.0
    %1139 = vmatpush.msra.mxu0 %v670
    %1140 = vmatpush.msra.mxu0 %v662
    %1141 = vmatpush.msra.mxu0 %v654
    %1142 = vmatpush.msra.mxu0 %v646
    %1143 = vmatpush.msra.mxu0 %v638
    %1144 = vmatpush.msra.mxu0 %v630
    %1145 = vmatpush.msra.mxu0 %v622
    %1146 = vmatpush.msra.mxu0 %v614
    %1147 = vmatmul.f32.gmra.mxu0 %v1009
    %v1148 = vpop.f32.mrf.mxu0
    %v1149 = vadd.f32 0.0, %v1148
    %1150 = vdwg.mxu0
    %1151 = vmatpush.msra.mxu0 0.0
    %1152 = vmatpush.msra.mxu0 0.0
    %1153 = vmatpush.msra.mxu0 0.0
    %1154 = vmatpush.msra.mxu0 0.0
    %1155 = vmatpush.msra.mxu0 0.0
    %1156 = vmatpush.msra.mxu0 0.0
    %1157 = vmatpush.msra.mxu0 0.0
    %1158 = vmatpush.msra.mxu0 0.0
    %1159 = vmatpush.msra.mxu0 %v671
    %1160 = vmatpush.msra.mxu0 %v663
    %1161 = vmatpush.msra.mxu0 %v655
    %1162 = vmatpush.msra.mxu0 %v647
    %1163 = vmatpush.msra.mxu0 %v639
    %1164 = vmatpush.msra.mxu0 %v631
    %1165 = vmatpush.msra.mxu0 %v623
    %1166 = vmatpush.msra.mxu0 %v615
    %1167 = vmatmul.f32.gmra.mxu0 %v1009
    %v1168 = vpop.f32.mrf.mxu0
    %v1169 = vadd.f32 0.0, %v1168
    %1170 = vdwg.mxu0
    %v1171 = vmax.f32 %v1000, %v1029
    %v1172 = vmax.f32 %v1001, %v1049
    %v1173 = vmax.f32 %v1002, %v1069
    %v1174 = vmax.f32 %v1003, %v1089
    %v1175 = vmax.f32 %v1004, %v1109
    %v1176 = vmax.f32 %v1005, %v1129
    %v1177 = vmax.f32 %v1006, %v1149
    %v1178 = vmax.f32 %v1007, %v1169
    %1179 = vrot.lane.b32.xlu0 %v599, 64
    %v1180 = vpop.permute.xlu0 %1179
    %v1181 = vsel %vm672, %v1180, 0
    %1183 = vmatpush.msra.mxu0 0.0
    %1184 = vmatpush.msra.mxu0 0.0
    %1185 = vmatpush.msra.mxu0 0.0
    %1186 = vmatpush.msra.mxu0 0.0
    %1187 = vmatpush.msra.mxu0 0.0
    %1188 = vmatpush.msra.mxu0 0.0
    %1189 = vmatpush.msra.mxu0 0.0
    %1190 = vmatpush.msra.mxu0 0.0
    %1191 = vmatpush.msra.mxu0 %v664
    %1192 = vmatpush.msra.mxu0 %v656
    %1193 = vmatpush.msra.mxu0 %v648
    %1194 = vmatpush.msra.mxu0 %v640
    %1195 = vmatpush.msra.mxu0 %v632
    %1196 = vmatpush.msra.mxu0 %v624
    %1197 = vmatpush.msra.mxu0 %v616
    %1198 = vmatpush.msra.mxu0 %v608
    %1199 = vmatmul.f32.gmra.mxu0 %v1181
    %v1200 = vpop.f32.mrf.mxu0
    %v1201 = vadd.f32 0.0, %v1200
    %1202 = vdwg.mxu0
    %1203 = vmatpush.msra.mxu0 0.0
    %1204 = vmatpush.msra.mxu0 0.0
    %1205 = vmatpush.msra.mxu0 0.0
    %1206 = vmatpush.msra.mxu0 0.0
    %1207 = vmatpush.msra.mxu0 0.0
    %1208 = vmatpush.msra.mxu0 0.0
    %1209 = vmatpush.msra.mxu0 0.0
    %1210 = vmatpush.msra.mxu0 0.0
    %1211 = vmatpush.msra.mxu0 %v665
    %1212 = vmatpush.msra.mxu0 %v657
    %1213 = vmatpush.msra.mxu0 %v649
    %1214 = vmatpush.msra.mxu0 %v641
    %1215 = vmatpush.msra.mxu0 %v633
    %1216 = vmatpush.msra.mxu0 %v625
    %1217 = vmatpush.msra.mxu0 %v617
    %1218 = vmatpush.msra.mxu0 %v609
    %1219 = vmatmul.f32.gmra.mxu0 %v1181
    %v1220 = vpop.f32.mrf.mxu0
    %v1221 = vadd.f32 0.0, %v1220
    %1222 = vdwg.mxu0
    %1223 = vmatpush.msra.mxu0 0.0
    %1224 = vmatpush.msra.mxu0 0.0
    %1225 = vmatpush.msra.mxu0 0.0
    %1226 = vmatpush.msra.mxu0 0.0
    %1227 = vmatpush.msra.mxu0 0.0
    %1228 = vmatpush.msra.mxu0 0.0
    %1229 = vmatpush.msra.mxu0 0.0
    %1230 = vmatpush.msra.mxu0 0.0
    %1231 = vmatpush.msra.mxu0 %v666
    %1232 = vmatpush.msra.mxu0 %v658
    %1233 = vmatpush.msra.mxu0 %v650
    %1234 = vmatpush.msra.mxu0 %v642
    %1235 = vmatpush.msra.mxu0 %v634
    %1236 = vmatpush.msra.mxu0 %v626
    %1237 = vmatpush.msra.mxu0 %v618
    %1238 = vmatpush.msra.mxu0 %v610
    %1239 = vmatmul.f32.gmra.mxu0 %v1181
    %v1240 = vpop.f32.mrf.mxu0
    %v1241 = vadd.f32 0.0, %v1240
    %1242 = vdwg.mxu0
    %1243 = vmatpush.msra.mxu0 0.0
    %1244 = vmatpush.msra.mxu0 0.0
    %1245 = vmatpush.msra.mxu0 0.0
    %1246 = vmatpush.msra.mxu0 0.0
    %1247 = vmatpush.msra.mxu0 0.0
    %1248 = vmatpush.msra.mxu0 0.0
    %1249 = vmatpush.msra.mxu0 0.0
    %1250 = vmatpush.msra.mxu0 0.0
    %1251 = vmatpush.msra.mxu0 %v667
    %1252 = vmatpush.msra.mxu0 %v659
    %1253 = vmatpush.msra.mxu0 %v651
    %1254 = vmatpush.msra.mxu0 %v643
    %1255 = vmatpush.msra.mxu0 %v635
    %1256 = vmatpush.msra.mxu0 %v627
    %1257 = vmatpush.msra.mxu0 %v619
    %1258 = vmatpush.msra.mxu0 %v611
    %1259 = vmatmul.f32.gmra.mxu0 %v1181
    %v1260 = vpop.f32.mrf.mxu0
    %v1261 = vadd.f32 0.0, %v1260
    %1262 = vdwg.mxu0
    %1263 = vmatpush.msra.mxu0 0.0
    %1264 = vmatpush.msra.mxu0 0.0
    %1265 = vmatpush.msra.mxu0 0.0
    %1266 = vmatpush.msra.mxu0 0.0
    %1267 = vmatpush.msra.mxu0 0.0
    %1268 = vmatpush.msra.mxu0 0.0
    %1269 = vmatpush.msra.mxu0 0.0
    %1270 = vmatpush.msra.mxu0 0.0
    %1271 = vmatpush.msra.mxu0 %v668
    %1272 = vmatpush.msra.mxu0 %v660
    %1273 = vmatpush.msra.mxu0 %v652
    %1274 = vmatpush.msra.mxu0 %v644
    %1275 = vmatpush.msra.mxu0 %v636
    %1276 = vmatpush.msra.mxu0 %v628
    %1277 = vmatpush.msra.mxu0 %v620
    %1278 = vmatpush.msra.mxu0 %v612
    %1279 = vmatmul.f32.gmra.mxu0 %v1181
    %v1280 = vpop.f32.mrf.mxu0
    %v1281 = vadd.f32 0.0, %v1280
    %1282 = vdwg.mxu0
    %1283 = vmatpush.msra.mxu0 0.0
    %1284 = vmatpush.msra.mxu0 0.0
    %1285 = vmatpush.msra.mxu0 0.0
    %1286 = vmatpush.msra.mxu0 0.0
    %1287 = vmatpush.msra.mxu0 0.0
    %1288 = vmatpush.msra.mxu0 0.0
    %1289 = vmatpush.msra.mxu0 0.0
    %1290 = vmatpush.msra.mxu0 0.0
    %1291 = vmatpush.msra.mxu0 %v669
    %1292 = vmatpush.msra.mxu0 %v661
    %1293 = vmatpush.msra.mxu0 %v653
    %1294 = vmatpush.msra.mxu0 %v645
    %1295 = vmatpush.msra.mxu0 %v637
    %1296 = vmatpush.msra.mxu0 %v629
    %1297 = vmatpush.msra.mxu0 %v621
    %1298 = vmatpush.msra.mxu0 %v613
    %1299 = vmatmul.f32.gmra.mxu0 %v1181
    %v1300 = vpop.f32.mrf.mxu0
    %v1301 = vadd.f32 0.0, %v1300
    %1302 = vdwg.mxu0
    %1303 = vmatpush.msra.mxu0 0.0
    %1304 = vmatpush.msra.mxu0 0.0
    %1305 = vmatpush.msra.mxu0 0.0
    %1306 = vmatpush.msra.mxu0 0.0
    %1307 = vmatpush.msra.mxu0 0.0
    %1308 = vmatpush.msra.mxu0 0.0
    %1309 = vmatpush.msra.mxu0 0.0
    %1310 = vmatpush.msra.mxu0 0.0
    %1311 = vmatpush.msra.mxu0 %v670
    %1312 = vmatpush.msra.mxu0 %v662
    %1313 = vmatpush.msra.mxu0 %v654
    %1314 = vmatpush.msra.mxu0 %v646
    %1315 = vmatpush.msra.mxu0 %v638
    %1316 = vmatpush.msra.mxu0 %v630
    %1317 = vmatpush.msra.mxu0 %v622
    %1318 = vmatpush.msra.mxu0 %v614
    %1319 = vmatmul.f32.gmra.mxu0 %v1181
    %v1320 = vpop.f32.mrf.mxu0
    %v1321 = vadd.f32 0.0, %v1320
    %1322 = vdwg.mxu0
    %1323 = vmatpush.msra.mxu0 0.0
    %1324 = vmatpush.msra.mxu0 0.0
    %1325 = vmatpush.msra.mxu0 0.0
    %1326 = vmatpush.msra.mxu0 0.0
    %1327 = vmatpush.msra.mxu0 0.0
    %1328 = vmatpush.msra.mxu0 0.0
    %1329 = vmatpush.msra.mxu0 0.0
    %1330 = vmatpush.msra.mxu0 0.0
    %1331 = vmatpush.msra.mxu0 %v671
    %1332 = vmatpush.msra.mxu0 %v663
    %1333 = vmatpush.msra.mxu0 %v655
    %1334 = vmatpush.msra.mxu0 %v647
    %1335 = vmatpush.msra.mxu0 %v639
    %1336 = vmatpush.msra.mxu0 %v631
    %1337 = vmatpush.msra.mxu0 %v623
    %1338 = vmatpush.msra.mxu0 %v615
    %1339 = vmatmul.f32.gmra.mxu0 %v1181
    %v1340 = vpop.f32.mrf.mxu0
    %v1341 = vadd.f32 0.0, %v1340
    %1342 = vdwg.mxu0
    %v1343 = vmax.f32 %v1171, %v1201
    %v1344 = vmax.f32 %v1172, %v1221
    %v1345 = vmax.f32 %v1173, %v1241
    %v1346 = vmax.f32 %v1174, %v1261
    %v1347 = vmax.f32 %v1175, %v1281
    %v1348 = vmax.f32 %v1176, %v1301
    %v1349 = vmax.f32 %v1177, %v1321
    %v1350 = vmax.f32 %v1178, %v1341
    %v1352 = vsel %vm672, %v600, 0
    %1354 = vmatpush.msra.mxu0 0.0
    %1355 = vmatpush.msra.mxu0 0.0
    %1356 = vmatpush.msra.mxu0 0.0
    %1357 = vmatpush.msra.mxu0 0.0
    %1358 = vmatpush.msra.mxu0 0.0
    %1359 = vmatpush.msra.mxu0 0.0
    %1360 = vmatpush.msra.mxu0 0.0
    %1361 = vmatpush.msra.mxu0 0.0
    %1362 = vmatpush.msra.mxu0 %v664
    %1363 = vmatpush.msra.mxu0 %v656
    %1364 = vmatpush.msra.mxu0 %v648
    %1365 = vmatpush.msra.mxu0 %v640
    %1366 = vmatpush.msra.mxu0 %v632
    %1367 = vmatpush.msra.mxu0 %v624
    %1368 = vmatpush.msra.mxu0 %v616
    %1369 = vmatpush.msra.mxu0 %v608
    %1370 = vmatmul.f32.gmra.mxu0 %v1352
    %v1371 = vpop.f32.mrf.mxu0
    %v1372 = vadd.f32 0.0, %v1371
    %1373 = vdwg.mxu0
    %1374 = vmatpush.msra.mxu0 0.0
    %1375 = vmatpush.msra.mxu0 0.0
    %1376 = vmatpush.msra.mxu0 0.0
    %1377 = vmatpush.msra.mxu0 0.0
    %1378 = vmatpush.msra.mxu0 0.0
    %1379 = vmatpush.msra.mxu0 0.0
    %1380 = vmatpush.msra.mxu0 0.0
    %1381 = vmatpush.msra.mxu0 0.0
    %1382 = vmatpush.msra.mxu0 %v665
    %1383 = vmatpush.msra.mxu0 %v657
    %1384 = vmatpush.msra.mxu0 %v649
    %1385 = vmatpush.msra.mxu0 %v641
    %1386 = vmatpush.msra.mxu0 %v633
    %1387 = vmatpush.msra.mxu0 %v625
    %1388 = vmatpush.msra.mxu0 %v617
    %1389 = vmatpush.msra.mxu0 %v609
    %1390 = vmatmul.f32.gmra.mxu0 %v1352
    %v1391 = vpop.f32.mrf.mxu0
    %v1392 = vadd.f32 0.0, %v1391
    %1393 = vdwg.mxu0
    %1394 = vmatpush.msra.mxu0 0.0
    %1395 = vmatpush.msra.mxu0 0.0
    %1396 = vmatpush.msra.mxu0 0.0
    %1397 = vmatpush.msra.mxu0 0.0
    %1398 = vmatpush.msra.mxu0 0.0
    %1399 = vmatpush.msra.mxu0 0.0
    %1400 = vmatpush.msra.mxu0 0.0
    %1401 = vmatpush.msra.mxu0 0.0
    %1402 = vmatpush.msra.mxu0 %v666
    %1403 = vmatpush.msra.mxu0 %v658
    %1404 = vmatpush.msra.mxu0 %v650
    %1405 = vmatpush.msra.mxu0 %v642
    %1406 = vmatpush.msra.mxu0 %v634
    %1407 = vmatpush.msra.mxu0 %v626
    %1408 = vmatpush.msra.mxu0 %v618
    %1409 = vmatpush.msra.mxu0 %v610
    %1410 = vmatmul.f32.gmra.mxu0 %v1352
    %v1411 = vpop.f32.mrf.mxu0
    %v1412 = vadd.f32 0.0, %v1411
    %1413 = vdwg.mxu0
    %1414 = vmatpush.msra.mxu0 0.0
    %1415 = vmatpush.msra.mxu0 0.0
    %1416 = vmatpush.msra.mxu0 0.0
    %1417 = vmatpush.msra.mxu0 0.0
    %1418 = vmatpush.msra.mxu0 0.0
    %1419 = vmatpush.msra.mxu0 0.0
    %1420 = vmatpush.msra.mxu0 0.0
    %1421 = vmatpush.msra.mxu0 0.0
    %1422 = vmatpush.msra.mxu0 %v667
    %1423 = vmatpush.msra.mxu0 %v659
    %1424 = vmatpush.msra.mxu0 %v651
    %1425 = vmatpush.msra.mxu0 %v643
    %1426 = vmatpush.msra.mxu0 %v635
    %1427 = vmatpush.msra.mxu0 %v627
    %1428 = vmatpush.msra.mxu0 %v619
    %1429 = vmatpush.msra.mxu0 %v611
    %1430 = vmatmul.f32.gmra.mxu0 %v1352
    %v1431 = vpop.f32.mrf.mxu0
    %v1432 = vadd.f32 0.0, %v1431
    %1433 = vdwg.mxu0
    %1434 = vmatpush.msra.mxu0 0.0
    %1435 = vmatpush.msra.mxu0 0.0
    %1436 = vmatpush.msra.mxu0 0.0
    %1437 = vmatpush.msra.mxu0 0.0
    %1438 = vmatpush.msra.mxu0 0.0
    %1439 = vmatpush.msra.mxu0 0.0
    %1440 = vmatpush.msra.mxu0 0.0
    %1441 = vmatpush.msra.mxu0 0.0
    %1442 = vmatpush.msra.mxu0 %v668
    %1443 = vmatpush.msra.mxu0 %v660
    %1444 = vmatpush.msra.mxu0 %v652
    %1445 = vmatpush.msra.mxu0 %v644
    %1446 = vmatpush.msra.mxu0 %v636
    %1447 = vmatpush.msra.mxu0 %v628
    %1448 = vmatpush.msra.mxu0 %v620
    %1449 = vmatpush.msra.mxu0 %v612
    %1450 = vmatmul.f32.gmra.mxu0 %v1352
    %v1451 = vpop.f32.mrf.mxu0
    %v1452 = vadd.f32 0.0, %v1451
    %1453 = vdwg.mxu0
    %1454 = vmatpush.msra.mxu0 0.0
    %1455 = vmatpush.msra.mxu0 0.0
    %1456 = vmatpush.msra.mxu0 0.0
    %1457 = vmatpush.msra.mxu0 0.0
    %1458 = vmatpush.msra.mxu0 0.0
    %1459 = vmatpush.msra.mxu0 0.0
    %1460 = vmatpush.msra.mxu0 0.0
    %1461 = vmatpush.msra.mxu0 0.0
    %1462 = vmatpush.msra.mxu0 %v669
    %1463 = vmatpush.msra.mxu0 %v661
    %1464 = vmatpush.msra.mxu0 %v653
    %1465 = vmatpush.msra.mxu0 %v645
    %1466 = vmatpush.msra.mxu0 %v637
    %1467 = vmatpush.msra.mxu0 %v629
    %1468 = vmatpush.msra.mxu0 %v621
    %1469 = vmatpush.msra.mxu0 %v613
    %1470 = vmatmul.f32.gmra.mxu0 %v1352
    %v1471 = vpop.f32.mrf.mxu0
    %v1472 = vadd.f32 0.0, %v1471
    %1473 = vdwg.mxu0
    %1474 = vmatpush.msra.mxu0 0.0
    %1475 = vmatpush.msra.mxu0 0.0
    %1476 = vmatpush.msra.mxu0 0.0
    %1477 = vmatpush.msra.mxu0 0.0
    %1478 = vmatpush.msra.mxu0 0.0
    %1479 = vmatpush.msra.mxu0 0.0
    %1480 = vmatpush.msra.mxu0 0.0
    %1481 = vmatpush.msra.mxu0 0.0
    %1482 = vmatpush.msra.mxu0 %v670
    %1483 = vmatpush.msra.mxu0 %v662
    %1484 = vmatpush.msra.mxu0 %v654
    %1485 = vmatpush.msra.mxu0 %v646
    %1486 = vmatpush.msra.mxu0 %v638
    %1487 = vmatpush.msra.mxu0 %v630
    %1488 = vmatpush.msra.mxu0 %v622
    %1489 = vmatpush.msra.mxu0 %v614
    %1490 = vmatmul.f32.gmra.mxu0 %v1352
    %v1491 = vpop.f32.mrf.mxu0
    %v1492 = vadd.f32 0.0, %v1491
    %1493 = vdwg.mxu0
    %1494 = vmatpush.msra.mxu0 0.0
    %1495 = vmatpush.msra.mxu0 0.0
    %1496 = vmatpush.msra.mxu0 0.0
    %1497 = vmatpush.msra.mxu0 0.0
    %1498 = vmatpush.msra.mxu0 0.0
    %1499 = vmatpush.msra.mxu0 0.0
    %1500 = vmatpush.msra.mxu0 0.0
    %1501 = vmatpush.msra.mxu0 0.0
    %1502 = vmatpush.msra.mxu0 %v671
    %1503 = vmatpush.msra.mxu0 %v663
    %1504 = vmatpush.msra.mxu0 %v655
    %1505 = vmatpush.msra.mxu0 %v647
    %1506 = vmatpush.msra.mxu0 %v639
    %1507 = vmatpush.msra.mxu0 %v631
    %1508 = vmatpush.msra.mxu0 %v623
    %1509 = vmatpush.msra.mxu0 %v615
    %1510 = vmatmul.f32.gmra.mxu0 %v1352
    %v1511 = vpop.f32.mrf.mxu0
    %v1512 = vadd.f32 0.0, %v1511
    %1513 = vdwg.mxu0
    %v1514 = vmax.f32 %v1343, %v1372
    %v1515 = vmax.f32 %v1344, %v1392
    %v1516 = vmax.f32 %v1345, %v1412
    %v1517 = vmax.f32 %v1346, %v1432
    %v1518 = vmax.f32 %v1347, %v1452
    %v1519 = vmax.f32 %v1348, %v1472
    %v1520 = vmax.f32 %v1349, %v1492
    %v1521 = vmax.f32 %v1350, %v1512
    %1522 = vrot.lane.b32.xlu0 %v600, 64
    %v1523 = vpop.permute.xlu0 %1522
    %v1524 = vsel %vm672, %v1523, 0
    %1526 = vmatpush.msra.mxu0 0.0
    %1527 = vmatpush.msra.mxu0 0.0
    %1528 = vmatpush.msra.mxu0 0.0
    %1529 = vmatpush.msra.mxu0 0.0
    %1530 = vmatpush.msra.mxu0 0.0
    %1531 = vmatpush.msra.mxu0 0.0
    %1532 = vmatpush.msra.mxu0 0.0
    %1533 = vmatpush.msra.mxu0 0.0
    %1534 = vmatpush.msra.mxu0 %v664
    %1535 = vmatpush.msra.mxu0 %v656
    %1536 = vmatpush.msra.mxu0 %v648
    %1537 = vmatpush.msra.mxu0 %v640
    %1538 = vmatpush.msra.mxu0 %v632
    %1539 = vmatpush.msra.mxu0 %v624
    %1540 = vmatpush.msra.mxu0 %v616
    %1541 = vmatpush.msra.mxu0 %v608
    %1542 = vmatmul.f32.gmra.mxu0 %v1524
    %v1543 = vpop.f32.mrf.mxu0
    %v1544 = vadd.f32 0.0, %v1543
    %1545 = vdwg.mxu0
    %1546 = vmatpush.msra.mxu0 0.0
    %1547 = vmatpush.msra.mxu0 0.0
    %1548 = vmatpush.msra.mxu0 0.0
    %1549 = vmatpush.msra.mxu0 0.0
    %1550 = vmatpush.msra.mxu0 0.0
    %1551 = vmatpush.msra.mxu0 0.0
    %1552 = vmatpush.msra.mxu0 0.0
    %1553 = vmatpush.msra.mxu0 0.0
    %1554 = vmatpush.msra.mxu0 %v665
    %1555 = vmatpush.msra.mxu0 %v657
    %1556 = vmatpush.msra.mxu0 %v649
    %1557 = vmatpush.msra.mxu0 %v641
    %1558 = vmatpush.msra.mxu0 %v633
    %1559 = vmatpush.msra.mxu0 %v625
    %1560 = vmatpush.msra.mxu0 %v617
    %1561 = vmatpush.msra.mxu0 %v609
    %1562 = vmatmul.f32.gmra.mxu0 %v1524
    %v1563 = vpop.f32.mrf.mxu0
    %v1564 = vadd.f32 0.0, %v1563
    %1565 = vdwg.mxu0
    %1566 = vmatpush.msra.mxu0 0.0
    %1567 = vmatpush.msra.mxu0 0.0
    %1568 = vmatpush.msra.mxu0 0.0
    %1569 = vmatpush.msra.mxu0 0.0
    %1570 = vmatpush.msra.mxu0 0.0
    %1571 = vmatpush.msra.mxu0 0.0
    %1572 = vmatpush.msra.mxu0 0.0
    %1573 = vmatpush.msra.mxu0 0.0
    %1574 = vmatpush.msra.mxu0 %v666
    %1575 = vmatpush.msra.mxu0 %v658
    %1576 = vmatpush.msra.mxu0 %v650
    %1577 = vmatpush.msra.mxu0 %v642
    %1578 = vmatpush.msra.mxu0 %v634
    %1579 = vmatpush.msra.mxu0 %v626
    %1580 = vmatpush.msra.mxu0 %v618
    %1581 = vmatpush.msra.mxu0 %v610
    %1582 = vmatmul.f32.gmra.mxu0 %v1524
    %v1583 = vpop.f32.mrf.mxu0
    %v1584 = vadd.f32 0.0, %v1583
    %1585 = vdwg.mxu0
    %1586 = vmatpush.msra.mxu0 0.0
    %1587 = vmatpush.msra.mxu0 0.0
    %1588 = vmatpush.msra.mxu0 0.0
    %1589 = vmatpush.msra.mxu0 0.0
    %1590 = vmatpush.msra.mxu0 0.0
    %1591 = vmatpush.msra.mxu0 0.0
    %1592 = vmatpush.msra.mxu0 0.0
    %1593 = vmatpush.msra.mxu0 0.0
    %1594 = vmatpush.msra.mxu0 %v667
    %1595 = vmatpush.msra.mxu0 %v659
    %1596 = vmatpush.msra.mxu0 %v651
    %1597 = vmatpush.msra.mxu0 %v643
    %1598 = vmatpush.msra.mxu0 %v635
    %1599 = vmatpush.msra.mxu0 %v627
    %1600 = vmatpush.msra.mxu0 %v619
    %1601 = vmatpush.msra.mxu0 %v611
    %1602 = vmatmul.f32.gmra.mxu0 %v1524
    %v1603 = vpop.f32.mrf.mxu0
    %v1604 = vadd.f32 0.0, %v1603
    %1605 = vdwg.mxu0
    %1606 = vmatpush.msra.mxu0 0.0
    %1607 = vmatpush.msra.mxu0 0.0
    %1608 = vmatpush.msra.mxu0 0.0
    %1609 = vmatpush.msra.mxu0 0.0
    %1610 = vmatpush.msra.mxu0 0.0
    %1611 = vmatpush.msra.mxu0 0.0
    %1612 = vmatpush.msra.mxu0 0.0
    %1613 = vmatpush.msra.mxu0 0.0
    %1614 = vmatpush.msra.mxu0 %v668
    %1615 = vmatpush.msra.mxu0 %v660
    %1616 = vmatpush.msra.mxu0 %v652
    %1617 = vmatpush.msra.mxu0 %v644
    %1618 = vmatpush.msra.mxu0 %v636
    %1619 = vmatpush.msra.mxu0 %v628
    %1620 = vmatpush.msra.mxu0 %v620
    %1621 = vmatpush.msra.mxu0 %v612
    %1622 = vmatmul.f32.gmra.mxu0 %v1524
    %v1623 = vpop.f32.mrf.mxu0
    %v1624 = vadd.f32 0.0, %v1623
    %1625 = vdwg.mxu0
    %1626 = vmatpush.msra.mxu0 0.0
    %1627 = vmatpush.msra.mxu0 0.0
    %1628 = vmatpush.msra.mxu0 0.0
    %1629 = vmatpush.msra.mxu0 0.0
    %1630 = vmatpush.msra.mxu0 0.0
    %1631 = vmatpush.msra.mxu0 0.0
    %1632 = vmatpush.msra.mxu0 0.0
    %1633 = vmatpush.msra.mxu0 0.0
    %1634 = vmatpush.msra.mxu0 %v669
    %1635 = vmatpush.msra.mxu0 %v661
    %1636 = vmatpush.msra.mxu0 %v653
    %1637 = vmatpush.msra.mxu0 %v645
    %1638 = vmatpush.msra.mxu0 %v637
    %1639 = vmatpush.msra.mxu0 %v629
    %1640 = vmatpush.msra.mxu0 %v621
    %1641 = vmatpush.msra.mxu0 %v613
    %1642 = vmatmul.f32.gmra.mxu0 %v1524
    %v1643 = vpop.f32.mrf.mxu0
    %v1644 = vadd.f32 0.0, %v1643
    %1645 = vdwg.mxu0
    %1646 = vmatpush.msra.mxu0 0.0
    %1647 = vmatpush.msra.mxu0 0.0
    %1648 = vmatpush.msra.mxu0 0.0
    %1649 = vmatpush.msra.mxu0 0.0
    %1650 = vmatpush.msra.mxu0 0.0
    %1651 = vmatpush.msra.mxu0 0.0
    %1652 = vmatpush.msra.mxu0 0.0
    %1653 = vmatpush.msra.mxu0 0.0
    %1654 = vmatpush.msra.mxu0 %v670
    %1655 = vmatpush.msra.mxu0 %v662
    %1656 = vmatpush.msra.mxu0 %v654
    %1657 = vmatpush.msra.mxu0 %v646
    %1658 = vmatpush.msra.mxu0 %v638
    %1659 = vmatpush.msra.mxu0 %v630
    %1660 = vmatpush.msra.mxu0 %v622
    %1661 = vmatpush.msra.mxu0 %v614
    %1662 = vmatmul.f32.gmra.mxu0 %v1524
    %v1663 = vpop.f32.mrf.mxu0
    %v1664 = vadd.f32 0.0, %v1663
    %1665 = vdwg.mxu0
    %1666 = vmatpush.msra.mxu0 0.0
    %1667 = vmatpush.msra.mxu0 0.0
    %1668 = vmatpush.msra.mxu0 0.0
    %1669 = vmatpush.msra.mxu0 0.0
    %1670 = vmatpush.msra.mxu0 0.0
    %1671 = vmatpush.msra.mxu0 0.0
    %1672 = vmatpush.msra.mxu0 0.0
    %1673 = vmatpush.msra.mxu0 0.0
    %1674 = vmatpush.msra.mxu0 %v671
    %1675 = vmatpush.msra.mxu0 %v663
    %1676 = vmatpush.msra.mxu0 %v655
    %1677 = vmatpush.msra.mxu0 %v647
    %1678 = vmatpush.msra.mxu0 %v639
    %1679 = vmatpush.msra.mxu0 %v631
    %1680 = vmatpush.msra.mxu0 %v623
    %1681 = vmatpush.msra.mxu0 %v615
    %1682 = vmatmul.f32.gmra.mxu0 %v1524
    %v1683 = vpop.f32.mrf.mxu0
    %v1684 = vadd.f32 0.0, %v1683
    %1685 = vdwg.mxu0
    %v1686 = vmax.f32 %v1514, %v1544
    %v1687 = vmax.f32 %v1515, %v1564
    %v1688 = vmax.f32 %v1516, %v1584
    %v1689 = vmax.f32 %v1517, %v1604
    %v1690 = vmax.f32 %v1518, %v1624
    %v1691 = vmax.f32 %v1519, %v1644
    %v1692 = vmax.f32 %v1520, %v1664
    %v1693 = vmax.f32 %v1521, %v1684
    %v1695 = vsel %vm672, %v601, 0
    %1697 = vmatpush.msra.mxu0 0.0
    %1698 = vmatpush.msra.mxu0 0.0
    %1699 = vmatpush.msra.mxu0 0.0
    %1700 = vmatpush.msra.mxu0 0.0
    %1701 = vmatpush.msra.mxu0 0.0
    %1702 = vmatpush.msra.mxu0 0.0
    %1703 = vmatpush.msra.mxu0 0.0
    %1704 = vmatpush.msra.mxu0 0.0
    %1705 = vmatpush.msra.mxu0 %v664
    %1706 = vmatpush.msra.mxu0 %v656
    %1707 = vmatpush.msra.mxu0 %v648
    %1708 = vmatpush.msra.mxu0 %v640
    %1709 = vmatpush.msra.mxu0 %v632
    %1710 = vmatpush.msra.mxu0 %v624
    %1711 = vmatpush.msra.mxu0 %v616
    %1712 = vmatpush.msra.mxu0 %v608
    %1713 = vmatmul.f32.gmra.mxu0 %v1695
    %v1714 = vpop.f32.mrf.mxu0
    %v1715 = vadd.f32 0.0, %v1714
    %1716 = vdwg.mxu0
    %1717 = vmatpush.msra.mxu0 0.0
    %1718 = vmatpush.msra.mxu0 0.0
    %1719 = vmatpush.msra.mxu0 0.0
    %1720 = vmatpush.msra.mxu0 0.0
    %1721 = vmatpush.msra.mxu0 0.0
    %1722 = vmatpush.msra.mxu0 0.0
    %1723 = vmatpush.msra.mxu0 0.0
    %1724 = vmatpush.msra.mxu0 0.0
    %1725 = vmatpush.msra.mxu0 %v665
    %1726 = vmatpush.msra.mxu0 %v657
    %1727 = vmatpush.msra.mxu0 %v649
    %1728 = vmatpush.msra.mxu0 %v641
    %1729 = vmatpush.msra.mxu0 %v633
    %1730 = vmatpush.msra.mxu0 %v625
    %1731 = vmatpush.msra.mxu0 %v617
    %1732 = vmatpush.msra.mxu0 %v609
    %1733 = vmatmul.f32.gmra.mxu0 %v1695
    %v1734 = vpop.f32.mrf.mxu0
    %v1735 = vadd.f32 0.0, %v1734
    %1736 = vdwg.mxu0
    %1737 = vmatpush.msra.mxu0 0.0
    %1738 = vmatpush.msra.mxu0 0.0
    %1739 = vmatpush.msra.mxu0 0.0
    %1740 = vmatpush.msra.mxu0 0.0
    %1741 = vmatpush.msra.mxu0 0.0
    %1742 = vmatpush.msra.mxu0 0.0
    %1743 = vmatpush.msra.mxu0 0.0
    %1744 = vmatpush.msra.mxu0 0.0
    %1745 = vmatpush.msra.mxu0 %v666
    %1746 = vmatpush.msra.mxu0 %v658
    %1747 = vmatpush.msra.mxu0 %v650
    %1748 = vmatpush.msra.mxu0 %v642
    %1749 = vmatpush.msra.mxu0 %v634
    %1750 = vmatpush.msra.mxu0 %v626
    %1751 = vmatpush.msra.mxu0 %v618
    %1752 = vmatpush.msra.mxu0 %v610
    %1753 = vmatmul.f32.gmra.mxu0 %v1695
    %v1754 = vpop.f32.mrf.mxu0
    %v1755 = vadd.f32 0.0, %v1754
    %1756 = vdwg.mxu0
    %1757 = vmatpush.msra.mxu0 0.0
    %1758 = vmatpush.msra.mxu0 0.0
    %1759 = vmatpush.msra.mxu0 0.0
    %1760 = vmatpush.msra.mxu0 0.0
    %1761 = vmatpush.msra.mxu0 0.0
    %1762 = vmatpush.msra.mxu0 0.0
    %1763 = vmatpush.msra.mxu0 0.0
    %1764 = vmatpush.msra.mxu0 0.0
    %1765 = vmatpush.msra.mxu0 %v667
    %1766 = vmatpush.msra.mxu0 %v659
    %1767 = vmatpush.msra.mxu0 %v651
    %1768 = vmatpush.msra.mxu0 %v643
    %1769 = vmatpush.msra.mxu0 %v635
    %1770 = vmatpush.msra.mxu0 %v627
    %1771 = vmatpush.msra.mxu0 %v619
    %1772 = vmatpush.msra.mxu0 %v611
    %1773 = vmatmul.f32.gmra.mxu0 %v1695
    %v1774 = vpop.f32.mrf.mxu0
    %v1775 = vadd.f32 0.0, %v1774
    %1776 = vdwg.mxu0
    %1777 = vmatpush.msra.mxu0 0.0
    %1778 = vmatpush.msra.mxu0 0.0
    %1779 = vmatpush.msra.mxu0 0.0
    %1780 = vmatpush.msra.mxu0 0.0
    %1781 = vmatpush.msra.mxu0 0.0
    %1782 = vmatpush.msra.mxu0 0.0
    %1783 = vmatpush.msra.mxu0 0.0
    %1784 = vmatpush.msra.mxu0 0.0
    %1785 = vmatpush.msra.mxu0 %v668
    %1786 = vmatpush.msra.mxu0 %v660
    %1787 = vmatpush.msra.mxu0 %v652
    %1788 = vmatpush.msra.mxu0 %v644
    %1789 = vmatpush.msra.mxu0 %v636
    %1790 = vmatpush.msra.mxu0 %v628
    %1791 = vmatpush.msra.mxu0 %v620
    %1792 = vmatpush.msra.mxu0 %v612
    %1793 = vmatmul.f32.gmra.mxu0 %v1695
    %v1794 = vpop.f32.mrf.mxu0
    %v1795 = vadd.f32 0.0, %v1794
    %1796 = vdwg.mxu0
    %1797 = vmatpush.msra.mxu0 0.0
    %1798 = vmatpush.msra.mxu0 0.0
    %1799 = vmatpush.msra.mxu0 0.0
    %1800 = vmatpush.msra.mxu0 0.0
    %1801 = vmatpush.msra.mxu0 0.0
    %1802 = vmatpush.msra.mxu0 0.0
    %1803 = vmatpush.msra.mxu0 0.0
    %1804 = vmatpush.msra.mxu0 0.0
    %1805 = vmatpush.msra.mxu0 %v669
    %1806 = vmatpush.msra.mxu0 %v661
    %1807 = vmatpush.msra.mxu0 %v653
    %1808 = vmatpush.msra.mxu0 %v645
    %1809 = vmatpush.msra.mxu0 %v637
    %1810 = vmatpush.msra.mxu0 %v629
    %1811 = vmatpush.msra.mxu0 %v621
    %1812 = vmatpush.msra.mxu0 %v613
    %1813 = vmatmul.f32.gmra.mxu0 %v1695
    %v1814 = vpop.f32.mrf.mxu0
    %v1815 = vadd.f32 0.0, %v1814
    %1816 = vdwg.mxu0
    %1817 = vmatpush.msra.mxu0 0.0
    %1818 = vmatpush.msra.mxu0 0.0
    %1819 = vmatpush.msra.mxu0 0.0
    %1820 = vmatpush.msra.mxu0 0.0
    %1821 = vmatpush.msra.mxu0 0.0
    %1822 = vmatpush.msra.mxu0 0.0
    %1823 = vmatpush.msra.mxu0 0.0
    %1824 = vmatpush.msra.mxu0 0.0
    %1825 = vmatpush.msra.mxu0 %v670
    %1826 = vmatpush.msra.mxu0 %v662
    %1827 = vmatpush.msra.mxu0 %v654
    %1828 = vmatpush.msra.mxu0 %v646
    %1829 = vmatpush.msra.mxu0 %v638
    %1830 = vmatpush.msra.mxu0 %v630
    %1831 = vmatpush.msra.mxu0 %v622
    %1832 = vmatpush.msra.mxu0 %v614
    %1833 = vmatmul.f32.gmra.mxu0 %v1695
    %v1834 = vpop.f32.mrf.mxu0
    %v1835 = vadd.f32 0.0, %v1834
    %1836 = vdwg.mxu0
    %1837 = vmatpush.msra.mxu0 0.0
    %1838 = vmatpush.msra.mxu0 0.0
    %1839 = vmatpush.msra.mxu0 0.0
    %1840 = vmatpush.msra.mxu0 0.0
    %1841 = vmatpush.msra.mxu0 0.0
    %1842 = vmatpush.msra.mxu0 0.0
    %1843 = vmatpush.msra.mxu0 0.0
    %1844 = vmatpush.msra.mxu0 0.0
    %1845 = vmatpush.msra.mxu0 %v671
    %1846 = vmatpush.msra.mxu0 %v663
    %1847 = vmatpush.msra.mxu0 %v655
    %1848 = vmatpush.msra.mxu0 %v647
    %1849 = vmatpush.msra.mxu0 %v639
    %1850 = vmatpush.msra.mxu0 %v631
    %1851 = vmatpush.msra.mxu0 %v623
    %1852 = vmatpush.msra.mxu0 %v615
    %1853 = vmatmul.f32.gmra.mxu0 %v1695
    %v1854 = vpop.f32.mrf.mxu0
    %v1855 = vadd.f32 0.0, %v1854
    %1856 = vdwg.mxu0
    %v1857 = vmax.f32 %v1686, %v1715
    %v1858 = vmax.f32 %v1687, %v1735
    %v1859 = vmax.f32 %v1688, %v1755
    %v1860 = vmax.f32 %v1689, %v1775
    %v1861 = vmax.f32 %v1690, %v1795
    %v1862 = vmax.f32 %v1691, %v1815
    %v1863 = vmax.f32 %v1692, %v1835
    %v1864 = vmax.f32 %v1693, %v1855
    %1865 = vrot.lane.b32.xlu0 %v601, 64
    %v1866 = vpop.permute.xlu0 %1865
    %v1867 = vsel %vm672, %v1866, 0
    %1869 = vmatpush.msra.mxu0 0.0
    %1870 = vmatpush.msra.mxu0 0.0
    %1871 = vmatpush.msra.mxu0 0.0
    %1872 = vmatpush.msra.mxu0 0.0
    %1873 = vmatpush.msra.mxu0 0.0
    %1874 = vmatpush.msra.mxu0 0.0
    %1875 = vmatpush.msra.mxu0 0.0
    %1876 = vmatpush.msra.mxu0 0.0
    %1877 = vmatpush.msra.mxu0 %v664
    %1878 = vmatpush.msra.mxu0 %v656
    %1879 = vmatpush.msra.mxu0 %v648
    %1880 = vmatpush.msra.mxu0 %v640
    %1881 = vmatpush.msra.mxu0 %v632
    %1882 = vmatpush.msra.mxu0 %v624
    %1883 = vmatpush.msra.mxu0 %v616
    %1884 = vmatpush.msra.mxu0 %v608
    %1885 = vmatmul.f32.gmra.mxu0 %v1867
    %v1886 = vpop.f32.mrf.mxu0
    %v1887 = vadd.f32 0.0, %v1886
    %1888 = vdwg.mxu0
    %1889 = vmatpush.msra.mxu0 0.0
    %1890 = vmatpush.msra.mxu0 0.0
    %1891 = vmatpush.msra.mxu0 0.0
    %1892 = vmatpush.msra.mxu0 0.0
    %1893 = vmatpush.msra.mxu0 0.0
    %1894 = vmatpush.msra.mxu0 0.0
    %1895 = vmatpush.msra.mxu0 0.0
    %1896 = vmatpush.msra.mxu0 0.0
    %1897 = vmatpush.msra.mxu0 %v665
    %1898 = vmatpush.msra.mxu0 %v657
    %1899 = vmatpush.msra.mxu0 %v649
    %1900 = vmatpush.msra.mxu0 %v641
    %1901 = vmatpush.msra.mxu0 %v633
    %1902 = vmatpush.msra.mxu0 %v625
    %1903 = vmatpush.msra.mxu0 %v617
    %1904 = vmatpush.msra.mxu0 %v609
    %1905 = vmatmul.f32.gmra.mxu0 %v1867
    %v1906 = vpop.f32.mrf.mxu0
    %v1907 = vadd.f32 0.0, %v1906
    %1908 = vdwg.mxu0
    %1909 = vmatpush.msra.mxu0 0.0
    %1910 = vmatpush.msra.mxu0 0.0
    %1911 = vmatpush.msra.mxu0 0.0
    %1912 = vmatpush.msra.mxu0 0.0
    %1913 = vmatpush.msra.mxu0 0.0
    %1914 = vmatpush.msra.mxu0 0.0
    %1915 = vmatpush.msra.mxu0 0.0
    %1916 = vmatpush.msra.mxu0 0.0
    %1917 = vmatpush.msra.mxu0 %v666
    %1918 = vmatpush.msra.mxu0 %v658
    %1919 = vmatpush.msra.mxu0 %v650
    %1920 = vmatpush.msra.mxu0 %v642
    %1921 = vmatpush.msra.mxu0 %v634
    %1922 = vmatpush.msra.mxu0 %v626
    %1923 = vmatpush.msra.mxu0 %v618
    %1924 = vmatpush.msra.mxu0 %v610
    %1925 = vmatmul.f32.gmra.mxu0 %v1867
    %v1926 = vpop.f32.mrf.mxu0
    %v1927 = vadd.f32 0.0, %v1926
    %1928 = vdwg.mxu0
    %1929 = vmatpush.msra.mxu0 0.0
    %1930 = vmatpush.msra.mxu0 0.0
    %1931 = vmatpush.msra.mxu0 0.0
    %1932 = vmatpush.msra.mxu0 0.0
    %1933 = vmatpush.msra.mxu0 0.0
    %1934 = vmatpush.msra.mxu0 0.0
    %1935 = vmatpush.msra.mxu0 0.0
    %1936 = vmatpush.msra.mxu0 0.0
    %1937 = vmatpush.msra.mxu0 %v667
    %1938 = vmatpush.msra.mxu0 %v659
    %1939 = vmatpush.msra.mxu0 %v651
    %1940 = vmatpush.msra.mxu0 %v643
    %1941 = vmatpush.msra.mxu0 %v635
    %1942 = vmatpush.msra.mxu0 %v627
    %1943 = vmatpush.msra.mxu0 %v619
    %1944 = vmatpush.msra.mxu0 %v611
    %1945 = vmatmul.f32.gmra.mxu0 %v1867
    %v1946 = vpop.f32.mrf.mxu0
    %v1947 = vadd.f32 0.0, %v1946
    %1948 = vdwg.mxu0
    %1949 = vmatpush.msra.mxu0 0.0
    %1950 = vmatpush.msra.mxu0 0.0
    %1951 = vmatpush.msra.mxu0 0.0
    %1952 = vmatpush.msra.mxu0 0.0
    %1953 = vmatpush.msra.mxu0 0.0
    %1954 = vmatpush.msra.mxu0 0.0
    %1955 = vmatpush.msra.mxu0 0.0
    %1956 = vmatpush.msra.mxu0 0.0
    %1957 = vmatpush.msra.mxu0 %v668
    %1958 = vmatpush.msra.mxu0 %v660
    %1959 = vmatpush.msra.mxu0 %v652
    %1960 = vmatpush.msra.mxu0 %v644
    %1961 = vmatpush.msra.mxu0 %v636
    %1962 = vmatpush.msra.mxu0 %v628
    %1963 = vmatpush.msra.mxu0 %v620
    %1964 = vmatpush.msra.mxu0 %v612
    %1965 = vmatmul.f32.gmra.mxu0 %v1867
    %v1966 = vpop.f32.mrf.mxu0
    %v1967 = vadd.f32 0.0, %v1966
    %1968 = vdwg.mxu0
    %1969 = vmatpush.msra.mxu0 0.0
    %1970 = vmatpush.msra.mxu0 0.0
    %1971 = vmatpush.msra.mxu0 0.0
    %1972 = vmatpush.msra.mxu0 0.0
    %1973 = vmatpush.msra.mxu0 0.0
    %1974 = vmatpush.msra.mxu0 0.0
    %1975 = vmatpush.msra.mxu0 0.0
    %1976 = vmatpush.msra.mxu0 0.0
    %1977 = vmatpush.msra.mxu0 %v669
    %1978 = vmatpush.msra.mxu0 %v661
    %1979 = vmatpush.msra.mxu0 %v653
    %1980 = vmatpush.msra.mxu0 %v645
    %1981 = vmatpush.msra.mxu0 %v637
    %1982 = vmatpush.msra.mxu0 %v629
    %1983 = vmatpush.msra.mxu0 %v621
    %1984 = vmatpush.msra.mxu0 %v613
    %1985 = vmatmul.f32.gmra.mxu0 %v1867
    %v1986 = vpop.f32.mrf.mxu0
    %v1987 = vadd.f32 0.0, %v1986
    %1988 = vdwg.mxu0
    %1989 = vmatpush.msra.mxu0 0.0
    %1990 = vmatpush.msra.mxu0 0.0
    %1991 = vmatpush.msra.mxu0 0.0
    %1992 = vmatpush.msra.mxu0 0.0
    %1993 = vmatpush.msra.mxu0 0.0
    %1994 = vmatpush.msra.mxu0 0.0
    %1995 = vmatpush.msra.mxu0 0.0
    %1996 = vmatpush.msra.mxu0 0.0
    %1997 = vmatpush.msra.mxu0 %v670
    %1998 = vmatpush.msra.mxu0 %v662
    %1999 = vmatpush.msra.mxu0 %v654
    %2000 = vmatpush.msra.mxu0 %v646
    %2001 = vmatpush.msra.mxu0 %v638
    %2002 = vmatpush.msra.mxu0 %v630
    %2003 = vmatpush.msra.mxu0 %v622
    %2004 = vmatpush.msra.mxu0 %v614
    %2005 = vmatmul.f32.gmra.mxu0 %v1867
    %v2006 = vpop.f32.mrf.mxu0
    %v2007 = vadd.f32 0.0, %v2006
    %2008 = vdwg.mxu0
    %2009 = vmatpush.msra.mxu0 0.0
    %2010 = vmatpush.msra.mxu0 0.0
    %2011 = vmatpush.msra.mxu0 0.0
    %2012 = vmatpush.msra.mxu0 0.0
    %2013 = vmatpush.msra.mxu0 0.0
    %2014 = vmatpush.msra.mxu0 0.0
    %2015 = vmatpush.msra.mxu0 0.0
    %2016 = vmatpush.msra.mxu0 0.0
    %2017 = vmatpush.msra.mxu0 %v671
    %2018 = vmatpush.msra.mxu0 %v663
    %2019 = vmatpush.msra.mxu0 %v655
    %2020 = vmatpush.msra.mxu0 %v647
    %2021 = vmatpush.msra.mxu0 %v639
    %2022 = vmatpush.msra.mxu0 %v631
    %2023 = vmatpush.msra.mxu0 %v623
    %2024 = vmatpush.msra.mxu0 %v615
    %2025 = vmatmul.f32.gmra.mxu0 %v1867
    %v2026 = vpop.f32.mrf.mxu0
    %v2027 = vadd.f32 0.0, %v2026
    %2028 = vdwg.mxu0
    %v2029 = vmax.f32 %v1857, %v1887
    %v2030 = vmax.f32 %v1858, %v1907
    %v2031 = vmax.f32 %v1859, %v1927
    %v2032 = vmax.f32 %v1860, %v1947
    %v2033 = vmax.f32 %v1861, %v1967
    %v2034 = vmax.f32 %v1862, %v1987
    %v2035 = vmax.f32 %v1863, %v2007
    %v2036 = vmax.f32 %v1864, %v2027
    %v2038 = vsel %vm672, %v602, 0
    %2040 = vmatpush.msra.mxu0 0.0
    %2041 = vmatpush.msra.mxu0 0.0
    %2042 = vmatpush.msra.mxu0 0.0
    %2043 = vmatpush.msra.mxu0 0.0
    %2044 = vmatpush.msra.mxu0 0.0
    %2045 = vmatpush.msra.mxu0 0.0
    %2046 = vmatpush.msra.mxu0 0.0
    %2047 = vmatpush.msra.mxu0 0.0
    %2048 = vmatpush.msra.mxu0 %v664
    %2049 = vmatpush.msra.mxu0 %v656
    %2050 = vmatpush.msra.mxu0 %v648
    %2051 = vmatpush.msra.mxu0 %v640
    %2052 = vmatpush.msra.mxu0 %v632
    %2053 = vmatpush.msra.mxu0 %v624
    %2054 = vmatpush.msra.mxu0 %v616
    %2055 = vmatpush.msra.mxu0 %v608
    %2056 = vmatmul.f32.gmra.mxu0 %v2038
    %v2057 = vpop.f32.mrf.mxu0
    %v2058 = vadd.f32 0.0, %v2057
    %2059 = vdwg.mxu0
    %2060 = vmatpush.msra.mxu0 0.0
    %2061 = vmatpush.msra.mxu0 0.0
    %2062 = vmatpush.msra.mxu0 0.0
    %2063 = vmatpush.msra.mxu0 0.0
    %2064 = vmatpush.msra.mxu0 0.0
    %2065 = vmatpush.msra.mxu0 0.0
    %2066 = vmatpush.msra.mxu0 0.0
    %2067 = vmatpush.msra.mxu0 0.0
    %2068 = vmatpush.msra.mxu0 %v665
    %2069 = vmatpush.msra.mxu0 %v657
    %2070 = vmatpush.msra.mxu0 %v649
    %2071 = vmatpush.msra.mxu0 %v641
    %2072 = vmatpush.msra.mxu0 %v633
    %2073 = vmatpush.msra.mxu0 %v625
    %2074 = vmatpush.msra.mxu0 %v617
    %2075 = vmatpush.msra.mxu0 %v609
    %2076 = vmatmul.f32.gmra.mxu0 %v2038
    %v2077 = vpop.f32.mrf.mxu0
    %v2078 = vadd.f32 0.0, %v2077
    %2079 = vdwg.mxu0
    %2080 = vmatpush.msra.mxu0 0.0
    %2081 = vmatpush.msra.mxu0 0.0
    %2082 = vmatpush.msra.mxu0 0.0
    %2083 = vmatpush.msra.mxu0 0.0
    %2084 = vmatpush.msra.mxu0 0.0
    %2085 = vmatpush.msra.mxu0 0.0
    %2086 = vmatpush.msra.mxu0 0.0
    %2087 = vmatpush.msra.mxu0 0.0
    %2088 = vmatpush.msra.mxu0 %v666
    %2089 = vmatpush.msra.mxu0 %v658
    %2090 = vmatpush.msra.mxu0 %v650
    %2091 = vmatpush.msra.mxu0 %v642
    %2092 = vmatpush.msra.mxu0 %v634
    %2093 = vmatpush.msra.mxu0 %v626
    %2094 = vmatpush.msra.mxu0 %v618
    %2095 = vmatpush.msra.mxu0 %v610
    %2096 = vmatmul.f32.gmra.mxu0 %v2038
    %v2097 = vpop.f32.mrf.mxu0
    %v2098 = vadd.f32 0.0, %v2097
    %2099 = vdwg.mxu0
    %2100 = vmatpush.msra.mxu0 0.0
    %2101 = vmatpush.msra.mxu0 0.0
    %2102 = vmatpush.msra.mxu0 0.0
    %2103 = vmatpush.msra.mxu0 0.0
    %2104 = vmatpush.msra.mxu0 0.0
    %2105 = vmatpush.msra.mxu0 0.0
    %2106 = vmatpush.msra.mxu0 0.0
    %2107 = vmatpush.msra.mxu0 0.0
    %2108 = vmatpush.msra.mxu0 %v667
    %2109 = vmatpush.msra.mxu0 %v659
    %2110 = vmatpush.msra.mxu0 %v651
    %2111 = vmatpush.msra.mxu0 %v643
    %2112 = vmatpush.msra.mxu0 %v635
    %2113 = vmatpush.msra.mxu0 %v627
    %2114 = vmatpush.msra.mxu0 %v619
    %2115 = vmatpush.msra.mxu0 %v611
    %2116 = vmatmul.f32.gmra.mxu0 %v2038
    %v2117 = vpop.f32.mrf.mxu0
    %v2118 = vadd.f32 0.0, %v2117
    %2119 = vdwg.mxu0
    %2120 = vmatpush.msra.mxu0 0.0
    %2121 = vmatpush.msra.mxu0 0.0
    %2122 = vmatpush.msra.mxu0 0.0
    %2123 = vmatpush.msra.mxu0 0.0
    %2124 = vmatpush.msra.mxu0 0.0
    %2125 = vmatpush.msra.mxu0 0.0
    %2126 = vmatpush.msra.mxu0 0.0
    %2127 = vmatpush.msra.mxu0 0.0
    %2128 = vmatpush.msra.mxu0 %v668
    %2129 = vmatpush.msra.mxu0 %v660
    %2130 = vmatpush.msra.mxu0 %v652
    %2131 = vmatpush.msra.mxu0 %v644
    %2132 = vmatpush.msra.mxu0 %v636
    %2133 = vmatpush.msra.mxu0 %v628
    %2134 = vmatpush.msra.mxu0 %v620
    %2135 = vmatpush.msra.mxu0 %v612
    %2136 = vmatmul.f32.gmra.mxu0 %v2038
    %v2137 = vpop.f32.mrf.mxu0
    %v2138 = vadd.f32 0.0, %v2137
    %2139 = vdwg.mxu0
    %2140 = vmatpush.msra.mxu0 0.0
    %2141 = vmatpush.msra.mxu0 0.0
    %2142 = vmatpush.msra.mxu0 0.0
    %2143 = vmatpush.msra.mxu0 0.0
    %2144 = vmatpush.msra.mxu0 0.0
    %2145 = vmatpush.msra.mxu0 0.0
    %2146 = vmatpush.msra.mxu0 0.0
    %2147 = vmatpush.msra.mxu0 0.0
    %2148 = vmatpush.msra.mxu0 %v669
    %2149 = vmatpush.msra.mxu0 %v661
    %2150 = vmatpush.msra.mxu0 %v653
    %2151 = vmatpush.msra.mxu0 %v645
    %2152 = vmatpush.msra.mxu0 %v637
    %2153 = vmatpush.msra.mxu0 %v629
    %2154 = vmatpush.msra.mxu0 %v621
    %2155 = vmatpush.msra.mxu0 %v613
    %2156 = vmatmul.f32.gmra.mxu0 %v2038
    %v2157 = vpop.f32.mrf.mxu0
    %v2158 = vadd.f32 0.0, %v2157
    %2159 = vdwg.mxu0
    %2160 = vmatpush.msra.mxu0 0.0
    %2161 = vmatpush.msra.mxu0 0.0
    %2162 = vmatpush.msra.mxu0 0.0
    %2163 = vmatpush.msra.mxu0 0.0
    %2164 = vmatpush.msra.mxu0 0.0
    %2165 = vmatpush.msra.mxu0 0.0
    %2166 = vmatpush.msra.mxu0 0.0
    %2167 = vmatpush.msra.mxu0 0.0
    %2168 = vmatpush.msra.mxu0 %v670
    %2169 = vmatpush.msra.mxu0 %v662
    %2170 = vmatpush.msra.mxu0 %v654
    %2171 = vmatpush.msra.mxu0 %v646
    %2172 = vmatpush.msra.mxu0 %v638
    %2173 = vmatpush.msra.mxu0 %v630
    %2174 = vmatpush.msra.mxu0 %v622
    %2175 = vmatpush.msra.mxu0 %v614
    %2176 = vmatmul.f32.gmra.mxu0 %v2038
    %v2177 = vpop.f32.mrf.mxu0
    %v2178 = vadd.f32 0.0, %v2177
    %2179 = vdwg.mxu0
    %2180 = vmatpush.msra.mxu0 0.0
    %2181 = vmatpush.msra.mxu0 0.0
    %2182 = vmatpush.msra.mxu0 0.0
    %2183 = vmatpush.msra.mxu0 0.0
    %2184 = vmatpush.msra.mxu0 0.0
    %2185 = vmatpush.msra.mxu0 0.0
    %2186 = vmatpush.msra.mxu0 0.0
    %2187 = vmatpush.msra.mxu0 0.0
    %2188 = vmatpush.msra.mxu0 %v671
    %2189 = vmatpush.msra.mxu0 %v663
    %2190 = vmatpush.msra.mxu0 %v655
    %2191 = vmatpush.msra.mxu0 %v647
    %2192 = vmatpush.msra.mxu0 %v639
    %2193 = vmatpush.msra.mxu0 %v631
    %2194 = vmatpush.msra.mxu0 %v623
    %2195 = vmatpush.msra.mxu0 %v615
    %2196 = vmatmul.f32.gmra.mxu0 %v2038
    %v2197 = vpop.f32.mrf.mxu0
    %v2198 = vadd.f32 0.0, %v2197
    %2199 = vdwg.mxu0
    %v2200 = vmax.f32 %v2029, %v2058
    %v2201 = vmax.f32 %v2030, %v2078
    %v2202 = vmax.f32 %v2031, %v2098
    %v2203 = vmax.f32 %v2032, %v2118
    %v2204 = vmax.f32 %v2033, %v2138
    %v2205 = vmax.f32 %v2034, %v2158
    %v2206 = vmax.f32 %v2035, %v2178
    %v2207 = vmax.f32 %v2036, %v2198
    %2208 = vrot.lane.b32.xlu0 %v602, 64
    %v2209 = vpop.permute.xlu0 %2208
    %v2210 = vsel %vm672, %v2209, 0
    %2212 = vmatpush.msra.mxu0 0.0
    %2213 = vmatpush.msra.mxu0 0.0
    %2214 = vmatpush.msra.mxu0 0.0
    %2215 = vmatpush.msra.mxu0 0.0
    %2216 = vmatpush.msra.mxu0 0.0
    %2217 = vmatpush.msra.mxu0 0.0
    %2218 = vmatpush.msra.mxu0 0.0
    %2219 = vmatpush.msra.mxu0 0.0
    %2220 = vmatpush.msra.mxu0 %v664
    %2221 = vmatpush.msra.mxu0 %v656
    %2222 = vmatpush.msra.mxu0 %v648
    %2223 = vmatpush.msra.mxu0 %v640
    %2224 = vmatpush.msra.mxu0 %v632
    %2225 = vmatpush.msra.mxu0 %v624
    %2226 = vmatpush.msra.mxu0 %v616
    %2227 = vmatpush.msra.mxu0 %v608
    %2228 = vmatmul.f32.gmra.mxu0 %v2210
    %v2229 = vpop.f32.mrf.mxu0
    %v2230 = vadd.f32 0.0, %v2229
    %2231 = vdwg.mxu0
    %2232 = vmatpush.msra.mxu0 0.0
    %2233 = vmatpush.msra.mxu0 0.0
    %2234 = vmatpush.msra.mxu0 0.0
    %2235 = vmatpush.msra.mxu0 0.0
    %2236 = vmatpush.msra.mxu0 0.0
    %2237 = vmatpush.msra.mxu0 0.0
    %2238 = vmatpush.msra.mxu0 0.0
    %2239 = vmatpush.msra.mxu0 0.0
    %2240 = vmatpush.msra.mxu0 %v665
    %2241 = vmatpush.msra.mxu0 %v657
    %2242 = vmatpush.msra.mxu0 %v649
    %2243 = vmatpush.msra.mxu0 %v641
    %2244 = vmatpush.msra.mxu0 %v633
    %2245 = vmatpush.msra.mxu0 %v625
    %2246 = vmatpush.msra.mxu0 %v617
    %2247 = vmatpush.msra.mxu0 %v609
    %2248 = vmatmul.f32.gmra.mxu0 %v2210
    %v2249 = vpop.f32.mrf.mxu0
    %v2250 = vadd.f32 0.0, %v2249
    %2251 = vdwg.mxu0
    %2252 = vmatpush.msra.mxu0 0.0
    %2253 = vmatpush.msra.mxu0 0.0
    %2254 = vmatpush.msra.mxu0 0.0
    %2255 = vmatpush.msra.mxu0 0.0
    %2256 = vmatpush.msra.mxu0 0.0
    %2257 = vmatpush.msra.mxu0 0.0
    %2258 = vmatpush.msra.mxu0 0.0
    %2259 = vmatpush.msra.mxu0 0.0
    %2260 = vmatpush.msra.mxu0 %v666
    %2261 = vmatpush.msra.mxu0 %v658
    %2262 = vmatpush.msra.mxu0 %v650
    %2263 = vmatpush.msra.mxu0 %v642
    %2264 = vmatpush.msra.mxu0 %v634
    %2265 = vmatpush.msra.mxu0 %v626
    %2266 = vmatpush.msra.mxu0 %v618
    %2267 = vmatpush.msra.mxu0 %v610
    %2268 = vmatmul.f32.gmra.mxu0 %v2210
    %v2269 = vpop.f32.mrf.mxu0
    %v2270 = vadd.f32 0.0, %v2269
    %2271 = vdwg.mxu0
    %2272 = vmatpush.msra.mxu0 0.0
    %2273 = vmatpush.msra.mxu0 0.0
    %2274 = vmatpush.msra.mxu0 0.0
    %2275 = vmatpush.msra.mxu0 0.0
    %2276 = vmatpush.msra.mxu0 0.0
    %2277 = vmatpush.msra.mxu0 0.0
    %2278 = vmatpush.msra.mxu0 0.0
    %2279 = vmatpush.msra.mxu0 0.0
    %2280 = vmatpush.msra.mxu0 %v667
    %2281 = vmatpush.msra.mxu0 %v659
    %2282 = vmatpush.msra.mxu0 %v651
    %2283 = vmatpush.msra.mxu0 %v643
    %2284 = vmatpush.msra.mxu0 %v635
    %2285 = vmatpush.msra.mxu0 %v627
    %2286 = vmatpush.msra.mxu0 %v619
    %2287 = vmatpush.msra.mxu0 %v611
    %2288 = vmatmul.f32.gmra.mxu0 %v2210
    %v2289 = vpop.f32.mrf.mxu0
    %v2290 = vadd.f32 0.0, %v2289
    %2291 = vdwg.mxu0
    %2292 = vmatpush.msra.mxu0 0.0
    %2293 = vmatpush.msra.mxu0 0.0
    %2294 = vmatpush.msra.mxu0 0.0
    %2295 = vmatpush.msra.mxu0 0.0
    %2296 = vmatpush.msra.mxu0 0.0
    %2297 = vmatpush.msra.mxu0 0.0
    %2298 = vmatpush.msra.mxu0 0.0
    %2299 = vmatpush.msra.mxu0 0.0
    %2300 = vmatpush.msra.mxu0 %v668
    %2301 = vmatpush.msra.mxu0 %v660
    %2302 = vmatpush.msra.mxu0 %v652
    %2303 = vmatpush.msra.mxu0 %v644
    %2304 = vmatpush.msra.mxu0 %v636
    %2305 = vmatpush.msra.mxu0 %v628
    %2306 = vmatpush.msra.mxu0 %v620
    %2307 = vmatpush.msra.mxu0 %v612
    %2308 = vmatmul.f32.gmra.mxu0 %v2210
    %v2309 = vpop.f32.mrf.mxu0
    %v2310 = vadd.f32 0.0, %v2309
    %2311 = vdwg.mxu0
    %2312 = vmatpush.msra.mxu0 0.0
    %2313 = vmatpush.msra.mxu0 0.0
    %2314 = vmatpush.msra.mxu0 0.0
    %2315 = vmatpush.msra.mxu0 0.0
    %2316 = vmatpush.msra.mxu0 0.0
    %2317 = vmatpush.msra.mxu0 0.0
    %2318 = vmatpush.msra.mxu0 0.0
    %2319 = vmatpush.msra.mxu0 0.0
    %2320 = vmatpush.msra.mxu0 %v669
    %2321 = vmatpush.msra.mxu0 %v661
    %2322 = vmatpush.msra.mxu0 %v653
    %2323 = vmatpush.msra.mxu0 %v645
    %2324 = vmatpush.msra.mxu0 %v637
    %2325 = vmatpush.msra.mxu0 %v629
    %2326 = vmatpush.msra.mxu0 %v621
    %2327 = vmatpush.msra.mxu0 %v613
    %2328 = vmatmul.f32.gmra.mxu0 %v2210
    %v2329 = vpop.f32.mrf.mxu0
    %v2330 = vadd.f32 0.0, %v2329
    %2331 = vdwg.mxu0
    %2332 = vmatpush.msra.mxu0 0.0
    %2333 = vmatpush.msra.mxu0 0.0
    %2334 = vmatpush.msra.mxu0 0.0
    %2335 = vmatpush.msra.mxu0 0.0
    %2336 = vmatpush.msra.mxu0 0.0
    %2337 = vmatpush.msra.mxu0 0.0
    %2338 = vmatpush.msra.mxu0 0.0
    %2339 = vmatpush.msra.mxu0 0.0
    %2340 = vmatpush.msra.mxu0 %v670
    %2341 = vmatpush.msra.mxu0 %v662
    %2342 = vmatpush.msra.mxu0 %v654
    %2343 = vmatpush.msra.mxu0 %v646
    %2344 = vmatpush.msra.mxu0 %v638
    %2345 = vmatpush.msra.mxu0 %v630
    %2346 = vmatpush.msra.mxu0 %v622
    %2347 = vmatpush.msra.mxu0 %v614
    %2348 = vmatmul.f32.gmra.mxu0 %v2210
    %v2349 = vpop.f32.mrf.mxu0
    %v2350 = vadd.f32 0.0, %v2349
    %2351 = vdwg.mxu0
    %2352 = vmatpush.msra.mxu0 0.0
    %2353 = vmatpush.msra.mxu0 0.0
    %2354 = vmatpush.msra.mxu0 0.0
    %2355 = vmatpush.msra.mxu0 0.0
    %2356 = vmatpush.msra.mxu0 0.0
    %2357 = vmatpush.msra.mxu0 0.0
    %2358 = vmatpush.msra.mxu0 0.0
    %2359 = vmatpush.msra.mxu0 0.0
    %2360 = vmatpush.msra.mxu0 %v671
    %2361 = vmatpush.msra.mxu0 %v663
    %2362 = vmatpush.msra.mxu0 %v655
    %2363 = vmatpush.msra.mxu0 %v647
    %2364 = vmatpush.msra.mxu0 %v639
    %2365 = vmatpush.msra.mxu0 %v631
    %2366 = vmatpush.msra.mxu0 %v623
    %2367 = vmatpush.msra.mxu0 %v615
    %2368 = vmatmul.f32.gmra.mxu0 %v2210
    %v2369 = vpop.f32.mrf.mxu0
    %v2370 = vadd.f32 0.0, %v2369
    %2371 = vdwg.mxu0
    %v2372 = vmax.f32 %v2200, %v2230
    %v2373 = vmax.f32 %v2201, %v2250
    %v2374 = vmax.f32 %v2202, %v2270
    %v2375 = vmax.f32 %v2203, %v2290
    %v2376 = vmax.f32 %v2204, %v2310
    %v2377 = vmax.f32 %v2205, %v2330
    %v2378 = vmax.f32 %v2206, %v2350
    %v2379 = vmax.f32 %v2207, %v2370
    %v2381 = vsel %vm672, %v603, 0
    %2383 = vmatpush.msra.mxu0 0.0
    %2384 = vmatpush.msra.mxu0 0.0
    %2385 = vmatpush.msra.mxu0 0.0
    %2386 = vmatpush.msra.mxu0 0.0
    %2387 = vmatpush.msra.mxu0 0.0
    %2388 = vmatpush.msra.mxu0 0.0
    %2389 = vmatpush.msra.mxu0 0.0
    %2390 = vmatpush.msra.mxu0 0.0
    %2391 = vmatpush.msra.mxu0 %v664
    %2392 = vmatpush.msra.mxu0 %v656
    %2393 = vmatpush.msra.mxu0 %v648
    %2394 = vmatpush.msra.mxu0 %v640
    %2395 = vmatpush.msra.mxu0 %v632
    %2396 = vmatpush.msra.mxu0 %v624
    %2397 = vmatpush.msra.mxu0 %v616
    %2398 = vmatpush.msra.mxu0 %v608
    %2399 = vmatmul.f32.gmra.mxu0 %v2381
    %v2400 = vpop.f32.mrf.mxu0
    %v2401 = vadd.f32 0.0, %v2400
    %2402 = vdwg.mxu0
    %2403 = vmatpush.msra.mxu0 0.0
    %2404 = vmatpush.msra.mxu0 0.0
    %2405 = vmatpush.msra.mxu0 0.0
    %2406 = vmatpush.msra.mxu0 0.0
    %2407 = vmatpush.msra.mxu0 0.0
    %2408 = vmatpush.msra.mxu0 0.0
    %2409 = vmatpush.msra.mxu0 0.0
    %2410 = vmatpush.msra.mxu0 0.0
    %2411 = vmatpush.msra.mxu0 %v665
    %2412 = vmatpush.msra.mxu0 %v657
    %2413 = vmatpush.msra.mxu0 %v649
    %2414 = vmatpush.msra.mxu0 %v641
    %2415 = vmatpush.msra.mxu0 %v633
    %2416 = vmatpush.msra.mxu0 %v625
    %2417 = vmatpush.msra.mxu0 %v617
    %2418 = vmatpush.msra.mxu0 %v609
    %2419 = vmatmul.f32.gmra.mxu0 %v2381
    %v2420 = vpop.f32.mrf.mxu0
    %v2421 = vadd.f32 0.0, %v2420
    %2422 = vdwg.mxu0
    %2423 = vmatpush.msra.mxu0 0.0
    %2424 = vmatpush.msra.mxu0 0.0
    %2425 = vmatpush.msra.mxu0 0.0
    %2426 = vmatpush.msra.mxu0 0.0
    %2427 = vmatpush.msra.mxu0 0.0
    %2428 = vmatpush.msra.mxu0 0.0
    %2429 = vmatpush.msra.mxu0 0.0
    %2430 = vmatpush.msra.mxu0 0.0
    %2431 = vmatpush.msra.mxu0 %v666
    %2432 = vmatpush.msra.mxu0 %v658
    %2433 = vmatpush.msra.mxu0 %v650
    %2434 = vmatpush.msra.mxu0 %v642
    %2435 = vmatpush.msra.mxu0 %v634
    %2436 = vmatpush.msra.mxu0 %v626
    %2437 = vmatpush.msra.mxu0 %v618
    %2438 = vmatpush.msra.mxu0 %v610
    %2439 = vmatmul.f32.gmra.mxu0 %v2381
    %v2440 = vpop.f32.mrf.mxu0
    %v2441 = vadd.f32 0.0, %v2440
    %2442 = vdwg.mxu0
    %2443 = vmatpush.msra.mxu0 0.0
    %2444 = vmatpush.msra.mxu0 0.0
    %2445 = vmatpush.msra.mxu0 0.0
    %2446 = vmatpush.msra.mxu0 0.0
    %2447 = vmatpush.msra.mxu0 0.0
    %2448 = vmatpush.msra.mxu0 0.0
    %2449 = vmatpush.msra.mxu0 0.0
    %2450 = vmatpush.msra.mxu0 0.0
    %2451 = vmatpush.msra.mxu0 %v667
    %2452 = vmatpush.msra.mxu0 %v659
    %2453 = vmatpush.msra.mxu0 %v651
    %2454 = vmatpush.msra.mxu0 %v643
    %2455 = vmatpush.msra.mxu0 %v635
    %2456 = vmatpush.msra.mxu0 %v627
    %2457 = vmatpush.msra.mxu0 %v619
    %2458 = vmatpush.msra.mxu0 %v611
    %2459 = vmatmul.f32.gmra.mxu0 %v2381
    %v2460 = vpop.f32.mrf.mxu0
    %v2461 = vadd.f32 0.0, %v2460
    %2462 = vdwg.mxu0
    %2463 = vmatpush.msra.mxu0 0.0
    %2464 = vmatpush.msra.mxu0 0.0
    %2465 = vmatpush.msra.mxu0 0.0
    %2466 = vmatpush.msra.mxu0 0.0
    %2467 = vmatpush.msra.mxu0 0.0
    %2468 = vmatpush.msra.mxu0 0.0
    %2469 = vmatpush.msra.mxu0 0.0
    %2470 = vmatpush.msra.mxu0 0.0
    %2471 = vmatpush.msra.mxu0 %v668
    %2472 = vmatpush.msra.mxu0 %v660
    %2473 = vmatpush.msra.mxu0 %v652
    %2474 = vmatpush.msra.mxu0 %v644
    %2475 = vmatpush.msra.mxu0 %v636
    %2476 = vmatpush.msra.mxu0 %v628
    %2477 = vmatpush.msra.mxu0 %v620
    %2478 = vmatpush.msra.mxu0 %v612
    %2479 = vmatmul.f32.gmra.mxu0 %v2381
    %v2480 = vpop.f32.mrf.mxu0
    %v2481 = vadd.f32 0.0, %v2480
    %2482 = vdwg.mxu0
    %2483 = vmatpush.msra.mxu0 0.0
    %2484 = vmatpush.msra.mxu0 0.0
    %2485 = vmatpush.msra.mxu0 0.0
    %2486 = vmatpush.msra.mxu0 0.0
    %2487 = vmatpush.msra.mxu0 0.0
    %2488 = vmatpush.msra.mxu0 0.0
    %2489 = vmatpush.msra.mxu0 0.0
    %2490 = vmatpush.msra.mxu0 0.0
    %2491 = vmatpush.msra.mxu0 %v669
    %2492 = vmatpush.msra.mxu0 %v661
    %2493 = vmatpush.msra.mxu0 %v653
    %2494 = vmatpush.msra.mxu0 %v645
    %2495 = vmatpush.msra.mxu0 %v637
    %2496 = vmatpush.msra.mxu0 %v629
    %2497 = vmatpush.msra.mxu0 %v621
    %2498 = vmatpush.msra.mxu0 %v613
    %2499 = vmatmul.f32.gmra.mxu0 %v2381
    %v2500 = vpop.f32.mrf.mxu0
    %v2501 = vadd.f32 0.0, %v2500
    %2502 = vdwg.mxu0
    %2503 = vmatpush.msra.mxu0 0.0
    %2504 = vmatpush.msra.mxu0 0.0
    %2505 = vmatpush.msra.mxu0 0.0
    %2506 = vmatpush.msra.mxu0 0.0
    %2507 = vmatpush.msra.mxu0 0.0
    %2508 = vmatpush.msra.mxu0 0.0
    %2509 = vmatpush.msra.mxu0 0.0
    %2510 = vmatpush.msra.mxu0 0.0
    %2511 = vmatpush.msra.mxu0 %v670
    %2512 = vmatpush.msra.mxu0 %v662
    %2513 = vmatpush.msra.mxu0 %v654
    %2514 = vmatpush.msra.mxu0 %v646
    %2515 = vmatpush.msra.mxu0 %v638
    %2516 = vmatpush.msra.mxu0 %v630
    %2517 = vmatpush.msra.mxu0 %v622
    %2518 = vmatpush.msra.mxu0 %v614
    %2519 = vmatmul.f32.gmra.mxu0 %v2381
    %v2520 = vpop.f32.mrf.mxu0
    %v2521 = vadd.f32 0.0, %v2520
    %2522 = vdwg.mxu0
    %2523 = vmatpush.msra.mxu0 0.0
    %2524 = vmatpush.msra.mxu0 0.0
    %2525 = vmatpush.msra.mxu0 0.0
    %2526 = vmatpush.msra.mxu0 0.0
    %2527 = vmatpush.msra.mxu0 0.0
    %2528 = vmatpush.msra.mxu0 0.0
    %2529 = vmatpush.msra.mxu0 0.0
    %2530 = vmatpush.msra.mxu0 0.0
    %2531 = vmatpush.msra.mxu0 %v671
    %2532 = vmatpush.msra.mxu0 %v663
    %2533 = vmatpush.msra.mxu0 %v655
    %2534 = vmatpush.msra.mxu0 %v647
    %2535 = vmatpush.msra.mxu0 %v639
    %2536 = vmatpush.msra.mxu0 %v631
    %2537 = vmatpush.msra.mxu0 %v623
    %2538 = vmatpush.msra.mxu0 %v615
    %2539 = vmatmul.f32.gmra.mxu0 %v2381
    %v2540 = vpop.f32.mrf.mxu0
    %v2541 = vadd.f32 0.0, %v2540
    %2542 = vdwg.mxu0
    %v2543 = vmax.f32 %v2372, %v2401
    %v2544 = vmax.f32 %v2373, %v2421
    %v2545 = vmax.f32 %v2374, %v2441
    %v2546 = vmax.f32 %v2375, %v2461
    %v2547 = vmax.f32 %v2376, %v2481
    %v2548 = vmax.f32 %v2377, %v2501
    %v2549 = vmax.f32 %v2378, %v2521
    %v2550 = vmax.f32 %v2379, %v2541
    %2551 = vrot.lane.b32.xlu0 %v603, 64
    %v2552 = vpop.permute.xlu0 %2551
    %v2553 = vsel %vm672, %v2552, 0
    %2555 = vmatpush.msra.mxu0 0.0
    %2556 = vmatpush.msra.mxu0 0.0
    %2557 = vmatpush.msra.mxu0 0.0
    %2558 = vmatpush.msra.mxu0 0.0
    %2559 = vmatpush.msra.mxu0 0.0
    %2560 = vmatpush.msra.mxu0 0.0
    %2561 = vmatpush.msra.mxu0 0.0
    %2562 = vmatpush.msra.mxu0 0.0
    %2563 = vmatpush.msra.mxu0 %v664
    %2564 = vmatpush.msra.mxu0 %v656
    %2565 = vmatpush.msra.mxu0 %v648
    %2566 = vmatpush.msra.mxu0 %v640
    %2567 = vmatpush.msra.mxu0 %v632
    %2568 = vmatpush.msra.mxu0 %v624
    %2569 = vmatpush.msra.mxu0 %v616
    %2570 = vmatpush.msra.mxu0 %v608
    %2571 = vmatmul.f32.gmra.mxu0 %v2553
    %v2572 = vpop.f32.mrf.mxu0
    %v2573 = vadd.f32 0.0, %v2572
    %2574 = vdwg.mxu0
    %2575 = vmatpush.msra.mxu0 0.0
    %2576 = vmatpush.msra.mxu0 0.0
    %2577 = vmatpush.msra.mxu0 0.0
    %2578 = vmatpush.msra.mxu0 0.0
    %2579 = vmatpush.msra.mxu0 0.0
    %2580 = vmatpush.msra.mxu0 0.0
    %2581 = vmatpush.msra.mxu0 0.0
    %2582 = vmatpush.msra.mxu0 0.0
    %2583 = vmatpush.msra.mxu0 %v665
    %2584 = vmatpush.msra.mxu0 %v657
    %2585 = vmatpush.msra.mxu0 %v649
    %2586 = vmatpush.msra.mxu0 %v641
    %2587 = vmatpush.msra.mxu0 %v633
    %2588 = vmatpush.msra.mxu0 %v625
    %2589 = vmatpush.msra.mxu0 %v617
    %2590 = vmatpush.msra.mxu0 %v609
    %2591 = vmatmul.f32.gmra.mxu0 %v2553
    %v2592 = vpop.f32.mrf.mxu0
    %v2593 = vadd.f32 0.0, %v2592
    %2594 = vdwg.mxu0
    %2595 = vmatpush.msra.mxu0 0.0
    %2596 = vmatpush.msra.mxu0 0.0
    %2597 = vmatpush.msra.mxu0 0.0
    %2598 = vmatpush.msra.mxu0 0.0
    %2599 = vmatpush.msra.mxu0 0.0
    %2600 = vmatpush.msra.mxu0 0.0
    %2601 = vmatpush.msra.mxu0 0.0
    %2602 = vmatpush.msra.mxu0 0.0
    %2603 = vmatpush.msra.mxu0 %v666
    %2604 = vmatpush.msra.mxu0 %v658
    %2605 = vmatpush.msra.mxu0 %v650
    %2606 = vmatpush.msra.mxu0 %v642
    %2607 = vmatpush.msra.mxu0 %v634
    %2608 = vmatpush.msra.mxu0 %v626
    %2609 = vmatpush.msra.mxu0 %v618
    %2610 = vmatpush.msra.mxu0 %v610
    %2611 = vmatmul.f32.gmra.mxu0 %v2553
    %v2612 = vpop.f32.mrf.mxu0
    %v2613 = vadd.f32 0.0, %v2612
    %2614 = vdwg.mxu0
    %2615 = vmatpush.msra.mxu0 0.0
    %2616 = vmatpush.msra.mxu0 0.0
    %2617 = vmatpush.msra.mxu0 0.0
    %2618 = vmatpush.msra.mxu0 0.0
    %2619 = vmatpush.msra.mxu0 0.0
    %2620 = vmatpush.msra.mxu0 0.0
    %2621 = vmatpush.msra.mxu0 0.0
    %2622 = vmatpush.msra.mxu0 0.0
    %2623 = vmatpush.msra.mxu0 %v667
    %2624 = vmatpush.msra.mxu0 %v659
    %2625 = vmatpush.msra.mxu0 %v651
    %2626 = vmatpush.msra.mxu0 %v643
    %2627 = vmatpush.msra.mxu0 %v635
    %2628 = vmatpush.msra.mxu0 %v627
    %2629 = vmatpush.msra.mxu0 %v619
    %2630 = vmatpush.msra.mxu0 %v611
    %2631 = vmatmul.f32.gmra.mxu0 %v2553
    %v2632 = vpop.f32.mrf.mxu0
    %v2633 = vadd.f32 0.0, %v2632
    %2634 = vdwg.mxu0
    %2635 = vmatpush.msra.mxu0 0.0
    %2636 = vmatpush.msra.mxu0 0.0
    %2637 = vmatpush.msra.mxu0 0.0
    %2638 = vmatpush.msra.mxu0 0.0
    %2639 = vmatpush.msra.mxu0 0.0
    %2640 = vmatpush.msra.mxu0 0.0
    %2641 = vmatpush.msra.mxu0 0.0
    %2642 = vmatpush.msra.mxu0 0.0
    %2643 = vmatpush.msra.mxu0 %v668
    %2644 = vmatpush.msra.mxu0 %v660
    %2645 = vmatpush.msra.mxu0 %v652
    %2646 = vmatpush.msra.mxu0 %v644
    %2647 = vmatpush.msra.mxu0 %v636
    %2648 = vmatpush.msra.mxu0 %v628
    %2649 = vmatpush.msra.mxu0 %v620
    %2650 = vmatpush.msra.mxu0 %v612
    %2651 = vmatmul.f32.gmra.mxu0 %v2553
    %v2652 = vpop.f32.mrf.mxu0
    %v2653 = vadd.f32 0.0, %v2652
    %2654 = vdwg.mxu0
    %2655 = vmatpush.msra.mxu0 0.0
    %2656 = vmatpush.msra.mxu0 0.0
    %2657 = vmatpush.msra.mxu0 0.0
    %2658 = vmatpush.msra.mxu0 0.0
    %2659 = vmatpush.msra.mxu0 0.0
    %2660 = vmatpush.msra.mxu0 0.0
    %2661 = vmatpush.msra.mxu0 0.0
    %2662 = vmatpush.msra.mxu0 0.0
    %2663 = vmatpush.msra.mxu0 %v669
    %2664 = vmatpush.msra.mxu0 %v661
    %2665 = vmatpush.msra.mxu0 %v653
    %2666 = vmatpush.msra.mxu0 %v645
    %2667 = vmatpush.msra.mxu0 %v637
    %2668 = vmatpush.msra.mxu0 %v629
    %2669 = vmatpush.msra.mxu0 %v621
    %2670 = vmatpush.msra.mxu0 %v613
    %2671 = vmatmul.f32.gmra.mxu0 %v2553
    %v2672 = vpop.f32.mrf.mxu0
    %v2673 = vadd.f32 0.0, %v2672
    %2674 = vdwg.mxu0
    %2675 = vmatpush.msra.mxu0 0.0
    %2676 = vmatpush.msra.mxu0 0.0
    %2677 = vmatpush.msra.mxu0 0.0
    %2678 = vmatpush.msra.mxu0 0.0
    %2679 = vmatpush.msra.mxu0 0.0
    %2680 = vmatpush.msra.mxu0 0.0
    %2681 = vmatpush.msra.mxu0 0.0
    %2682 = vmatpush.msra.mxu0 0.0
    %2683 = vmatpush.msra.mxu0 %v670
    %2684 = vmatpush.msra.mxu0 %v662
    %2685 = vmatpush.msra.mxu0 %v654
    %2686 = vmatpush.msra.mxu0 %v646
    %2687 = vmatpush.msra.mxu0 %v638
    %2688 = vmatpush.msra.mxu0 %v630
    %2689 = vmatpush.msra.mxu0 %v622
    %2690 = vmatpush.msra.mxu0 %v614
    %2691 = vmatmul.f32.gmra.mxu0 %v2553
    %v2692 = vpop.f32.mrf.mxu0
    %v2693 = vadd.f32 0.0, %v2692
    %2694 = vdwg.mxu0
    %2695 = vmatpush.msra.mxu0 0.0
    %2696 = vmatpush.msra.mxu0 0.0
    %2697 = vmatpush.msra.mxu0 0.0
    %2698 = vmatpush.msra.mxu0 0.0
    %2699 = vmatpush.msra.mxu0 0.0
    %2700 = vmatpush.msra.mxu0 0.0
    %2701 = vmatpush.msra.mxu0 0.0
    %2702 = vmatpush.msra.mxu0 0.0
    %2703 = vmatpush.msra.mxu0 %v671
    %2704 = vmatpush.msra.mxu0 %v663
    %2705 = vmatpush.msra.mxu0 %v655
    %2706 = vmatpush.msra.mxu0 %v647
    %2707 = vmatpush.msra.mxu0 %v639
    %2708 = vmatpush.msra.mxu0 %v631
    %2709 = vmatpush.msra.mxu0 %v623
    %2710 = vmatpush.msra.mxu0 %v615
    %2711 = vmatmul.f32.gmra.mxu0 %v2553
    %v2712 = vpop.f32.mrf.mxu0
    %v2713 = vadd.f32 0.0, %v2712
    %2714 = vdwg.mxu0
    %v2715 = vmax.f32 %v2543, %v2573
    %v2716 = vmax.f32 %v2544, %v2593
    %v2717 = vmax.f32 %v2545, %v2613
    %v2718 = vmax.f32 %v2546, %v2633
    %v2719 = vmax.f32 %v2547, %v2653
    %v2720 = vmax.f32 %v2548, %v2673
    %v2721 = vmax.f32 %v2549, %v2693
    %v2722 = vmax.f32 %v2550, %v2713
    %v2724 = vsel %vm672, %v604, 0
    %2726 = vmatpush.msra.mxu0 0.0
    %2727 = vmatpush.msra.mxu0 0.0
    %2728 = vmatpush.msra.mxu0 0.0
    %2729 = vmatpush.msra.mxu0 0.0
    %2730 = vmatpush.msra.mxu0 0.0
    %2731 = vmatpush.msra.mxu0 0.0
    %2732 = vmatpush.msra.mxu0 0.0
    %2733 = vmatpush.msra.mxu0 0.0
    %2734 = vmatpush.msra.mxu0 %v664
    %2735 = vmatpush.msra.mxu0 %v656
    %2736 = vmatpush.msra.mxu0 %v648
    %2737 = vmatpush.msra.mxu0 %v640
    %2738 = vmatpush.msra.mxu0 %v632
    %2739 = vmatpush.msra.mxu0 %v624
    %2740 = vmatpush.msra.mxu0 %v616
    %2741 = vmatpush.msra.mxu0 %v608
    %2742 = vmatmul.f32.gmra.mxu0 %v2724
    %v2743 = vpop.f32.mrf.mxu0
    %v2744 = vadd.f32 0.0, %v2743
    %2745 = vdwg.mxu0
    %2746 = vmatpush.msra.mxu0 0.0
    %2747 = vmatpush.msra.mxu0 0.0
    %2748 = vmatpush.msra.mxu0 0.0
    %2749 = vmatpush.msra.mxu0 0.0
    %2750 = vmatpush.msra.mxu0 0.0
    %2751 = vmatpush.msra.mxu0 0.0
    %2752 = vmatpush.msra.mxu0 0.0
    %2753 = vmatpush.msra.mxu0 0.0
    %2754 = vmatpush.msra.mxu0 %v665
    %2755 = vmatpush.msra.mxu0 %v657
    %2756 = vmatpush.msra.mxu0 %v649
    %2757 = vmatpush.msra.mxu0 %v641
    %2758 = vmatpush.msra.mxu0 %v633
    %2759 = vmatpush.msra.mxu0 %v625
    %2760 = vmatpush.msra.mxu0 %v617
    %2761 = vmatpush.msra.mxu0 %v609
    %2762 = vmatmul.f32.gmra.mxu0 %v2724
    %v2763 = vpop.f32.mrf.mxu0
    %v2764 = vadd.f32 0.0, %v2763
    %2765 = vdwg.mxu0
    %2766 = vmatpush.msra.mxu0 0.0
    %2767 = vmatpush.msra.mxu0 0.0
    %2768 = vmatpush.msra.mxu0 0.0
    %2769 = vmatpush.msra.mxu0 0.0
    %2770 = vmatpush.msra.mxu0 0.0
    %2771 = vmatpush.msra.mxu0 0.0
    %2772 = vmatpush.msra.mxu0 0.0
    %2773 = vmatpush.msra.mxu0 0.0
    %2774 = vmatpush.msra.mxu0 %v666
    %2775 = vmatpush.msra.mxu0 %v658
    %2776 = vmatpush.msra.mxu0 %v650
    %2777 = vmatpush.msra.mxu0 %v642
    %2778 = vmatpush.msra.mxu0 %v634
    %2779 = vmatpush.msra.mxu0 %v626
    %2780 = vmatpush.msra.mxu0 %v618
    %2781 = vmatpush.msra.mxu0 %v610
    %2782 = vmatmul.f32.gmra.mxu0 %v2724
    %v2783 = vpop.f32.mrf.mxu0
    %v2784 = vadd.f32 0.0, %v2783
    %2785 = vdwg.mxu0
    %2786 = vmatpush.msra.mxu0 0.0
    %2787 = vmatpush.msra.mxu0 0.0
    %2788 = vmatpush.msra.mxu0 0.0
    %2789 = vmatpush.msra.mxu0 0.0
    %2790 = vmatpush.msra.mxu0 0.0
    %2791 = vmatpush.msra.mxu0 0.0
    %2792 = vmatpush.msra.mxu0 0.0
    %2793 = vmatpush.msra.mxu0 0.0
    %2794 = vmatpush.msra.mxu0 %v667
    %2795 = vmatpush.msra.mxu0 %v659
    %2796 = vmatpush.msra.mxu0 %v651
    %2797 = vmatpush.msra.mxu0 %v643
    %2798 = vmatpush.msra.mxu0 %v635
    %2799 = vmatpush.msra.mxu0 %v627
    %2800 = vmatpush.msra.mxu0 %v619
    %2801 = vmatpush.msra.mxu0 %v611
    %2802 = vmatmul.f32.gmra.mxu0 %v2724
    %v2803 = vpop.f32.mrf.mxu0
    %v2804 = vadd.f32 0.0, %v2803
    %2805 = vdwg.mxu0
    %2806 = vmatpush.msra.mxu0 0.0
    %2807 = vmatpush.msra.mxu0 0.0
    %2808 = vmatpush.msra.mxu0 0.0
    %2809 = vmatpush.msra.mxu0 0.0
    %2810 = vmatpush.msra.mxu0 0.0
    %2811 = vmatpush.msra.mxu0 0.0
    %2812 = vmatpush.msra.mxu0 0.0
    %2813 = vmatpush.msra.mxu0 0.0
    %2814 = vmatpush.msra.mxu0 %v668
    %2815 = vmatpush.msra.mxu0 %v660
    %2816 = vmatpush.msra.mxu0 %v652
    %2817 = vmatpush.msra.mxu0 %v644
    %2818 = vmatpush.msra.mxu0 %v636
    %2819 = vmatpush.msra.mxu0 %v628
    %2820 = vmatpush.msra.mxu0 %v620
    %2821 = vmatpush.msra.mxu0 %v612
    %2822 = vmatmul.f32.gmra.mxu0 %v2724
    %v2823 = vpop.f32.mrf.mxu0
    %v2824 = vadd.f32 0.0, %v2823
    %2825 = vdwg.mxu0
    %2826 = vmatpush.msra.mxu0 0.0
    %2827 = vmatpush.msra.mxu0 0.0
    %2828 = vmatpush.msra.mxu0 0.0
    %2829 = vmatpush.msra.mxu0 0.0
    %2830 = vmatpush.msra.mxu0 0.0
    %2831 = vmatpush.msra.mxu0 0.0
    %2832 = vmatpush.msra.mxu0 0.0
    %2833 = vmatpush.msra.mxu0 0.0
    %2834 = vmatpush.msra.mxu0 %v669
    %2835 = vmatpush.msra.mxu0 %v661
    %2836 = vmatpush.msra.mxu0 %v653
    %2837 = vmatpush.msra.mxu0 %v645
    %2838 = vmatpush.msra.mxu0 %v637
    %2839 = vmatpush.msra.mxu0 %v629
    %2840 = vmatpush.msra.mxu0 %v621
    %2841 = vmatpush.msra.mxu0 %v613
    %2842 = vmatmul.f32.gmra.mxu0 %v2724
    %v2843 = vpop.f32.mrf.mxu0
    %v2844 = vadd.f32 0.0, %v2843
    %2845 = vdwg.mxu0
    %2846 = vmatpush.msra.mxu0 0.0
    %2847 = vmatpush.msra.mxu0 0.0
    %2848 = vmatpush.msra.mxu0 0.0
    %2849 = vmatpush.msra.mxu0 0.0
    %2850 = vmatpush.msra.mxu0 0.0
    %2851 = vmatpush.msra.mxu0 0.0
    %2852 = vmatpush.msra.mxu0 0.0
    %2853 = vmatpush.msra.mxu0 0.0
    %2854 = vmatpush.msra.mxu0 %v670
    %2855 = vmatpush.msra.mxu0 %v662
    %2856 = vmatpush.msra.mxu0 %v654
    %2857 = vmatpush.msra.mxu0 %v646
    %2858 = vmatpush.msra.mxu0 %v638
    %2859 = vmatpush.msra.mxu0 %v630
    %2860 = vmatpush.msra.mxu0 %v622
    %2861 = vmatpush.msra.mxu0 %v614
    %2862 = vmatmul.f32.gmra.mxu0 %v2724
    %v2863 = vpop.f32.mrf.mxu0
    %v2864 = vadd.f32 0.0, %v2863
    %2865 = vdwg.mxu0
    %2866 = vmatpush.msra.mxu0 0.0
    %2867 = vmatpush.msra.mxu0 0.0
    %2868 = vmatpush.msra.mxu0 0.0
    %2869 = vmatpush.msra.mxu0 0.0
    %2870 = vmatpush.msra.mxu0 0.0
    %2871 = vmatpush.msra.mxu0 0.0
    %2872 = vmatpush.msra.mxu0 0.0
    %2873 = vmatpush.msra.mxu0 0.0
    %2874 = vmatpush.msra.mxu0 %v671
    %2875 = vmatpush.msra.mxu0 %v663
    %2876 = vmatpush.msra.mxu0 %v655
    %2877 = vmatpush.msra.mxu0 %v647
    %2878 = vmatpush.msra.mxu0 %v639
    %2879 = vmatpush.msra.mxu0 %v631
    %2880 = vmatpush.msra.mxu0 %v623
    %2881 = vmatpush.msra.mxu0 %v615
    %2882 = vmatmul.f32.gmra.mxu0 %v2724
    %v2883 = vpop.f32.mrf.mxu0
    %v2884 = vadd.f32 0.0, %v2883
    %2885 = vdwg.mxu0
    %v2886 = vmax.f32 %v2715, %v2744
    %v2887 = vmax.f32 %v2716, %v2764
    %v2888 = vmax.f32 %v2717, %v2784
    %v2889 = vmax.f32 %v2718, %v2804
    %v2890 = vmax.f32 %v2719, %v2824
    %v2891 = vmax.f32 %v2720, %v2844
    %v2892 = vmax.f32 %v2721, %v2864
    %v2893 = vmax.f32 %v2722, %v2884
    %2894 = vrot.lane.b32.xlu0 %v604, 64
    %v2895 = vpop.permute.xlu0 %2894
    %v2896 = vsel %vm672, %v2895, 0
    %2898 = vmatpush.msra.mxu0 0.0
    %2899 = vmatpush.msra.mxu0 0.0
    %2900 = vmatpush.msra.mxu0 0.0
    %2901 = vmatpush.msra.mxu0 0.0
    %2902 = vmatpush.msra.mxu0 0.0
    %2903 = vmatpush.msra.mxu0 0.0
    %2904 = vmatpush.msra.mxu0 0.0
    %2905 = vmatpush.msra.mxu0 0.0
    %2906 = vmatpush.msra.mxu0 %v664
    %2907 = vmatpush.msra.mxu0 %v656
    %2908 = vmatpush.msra.mxu0 %v648
    %2909 = vmatpush.msra.mxu0 %v640
    %2910 = vmatpush.msra.mxu0 %v632
    %2911 = vmatpush.msra.mxu0 %v624
    %2912 = vmatpush.msra.mxu0 %v616
    %2913 = vmatpush.msra.mxu0 %v608
    %2914 = vmatmul.f32.gmra.mxu0 %v2896
    %v2915 = vpop.f32.mrf.mxu0
    %v2916 = vadd.f32 0.0, %v2915
    %2917 = vdwg.mxu0
    %2918 = vmatpush.msra.mxu0 0.0
    %2919 = vmatpush.msra.mxu0 0.0
    %2920 = vmatpush.msra.mxu0 0.0
    %2921 = vmatpush.msra.mxu0 0.0
    %2922 = vmatpush.msra.mxu0 0.0
    %2923 = vmatpush.msra.mxu0 0.0
    %2924 = vmatpush.msra.mxu0 0.0
    %2925 = vmatpush.msra.mxu0 0.0
    %2926 = vmatpush.msra.mxu0 %v665
    %2927 = vmatpush.msra.mxu0 %v657
    %2928 = vmatpush.msra.mxu0 %v649
    %2929 = vmatpush.msra.mxu0 %v641
    %2930 = vmatpush.msra.mxu0 %v633
    %2931 = vmatpush.msra.mxu0 %v625
    %2932 = vmatpush.msra.mxu0 %v617
    %2933 = vmatpush.msra.mxu0 %v609
    %2934 = vmatmul.f32.gmra.mxu0 %v2896
    %v2935 = vpop.f32.mrf.mxu0
    %v2936 = vadd.f32 0.0, %v2935
    %2937 = vdwg.mxu0
    %2938 = vmatpush.msra.mxu0 0.0
    %2939 = vmatpush.msra.mxu0 0.0
    %2940 = vmatpush.msra.mxu0 0.0
    %2941 = vmatpush.msra.mxu0 0.0
    %2942 = vmatpush.msra.mxu0 0.0
    %2943 = vmatpush.msra.mxu0 0.0
    %2944 = vmatpush.msra.mxu0 0.0
    %2945 = vmatpush.msra.mxu0 0.0
    %2946 = vmatpush.msra.mxu0 %v666
    %2947 = vmatpush.msra.mxu0 %v658
    %2948 = vmatpush.msra.mxu0 %v650
    %2949 = vmatpush.msra.mxu0 %v642
    %2950 = vmatpush.msra.mxu0 %v634
    %2951 = vmatpush.msra.mxu0 %v626
    %2952 = vmatpush.msra.mxu0 %v618
    %2953 = vmatpush.msra.mxu0 %v610
    %2954 = vmatmul.f32.gmra.mxu0 %v2896
    %v2955 = vpop.f32.mrf.mxu0
    %v2956 = vadd.f32 0.0, %v2955
    %2957 = vdwg.mxu0
    %2958 = vmatpush.msra.mxu0 0.0
    %2959 = vmatpush.msra.mxu0 0.0
    %2960 = vmatpush.msra.mxu0 0.0
    %2961 = vmatpush.msra.mxu0 0.0
    %2962 = vmatpush.msra.mxu0 0.0
    %2963 = vmatpush.msra.mxu0 0.0
    %2964 = vmatpush.msra.mxu0 0.0
    %2965 = vmatpush.msra.mxu0 0.0
    %2966 = vmatpush.msra.mxu0 %v667
    %2967 = vmatpush.msra.mxu0 %v659
    %2968 = vmatpush.msra.mxu0 %v651
    %2969 = vmatpush.msra.mxu0 %v643
    %2970 = vmatpush.msra.mxu0 %v635
    %2971 = vmatpush.msra.mxu0 %v627
    %2972 = vmatpush.msra.mxu0 %v619
    %2973 = vmatpush.msra.mxu0 %v611
    %2974 = vmatmul.f32.gmra.mxu0 %v2896
    %v2975 = vpop.f32.mrf.mxu0
    %v2976 = vadd.f32 0.0, %v2975
    %2977 = vdwg.mxu0
    %2978 = vmatpush.msra.mxu0 0.0
    %2979 = vmatpush.msra.mxu0 0.0
    %2980 = vmatpush.msra.mxu0 0.0
    %2981 = vmatpush.msra.mxu0 0.0
    %2982 = vmatpush.msra.mxu0 0.0
    %2983 = vmatpush.msra.mxu0 0.0
    %2984 = vmatpush.msra.mxu0 0.0
    %2985 = vmatpush.msra.mxu0 0.0
    %2986 = vmatpush.msra.mxu0 %v668
    %2987 = vmatpush.msra.mxu0 %v660
    %2988 = vmatpush.msra.mxu0 %v652
    %2989 = vmatpush.msra.mxu0 %v644
    %2990 = vmatpush.msra.mxu0 %v636
    %2991 = vmatpush.msra.mxu0 %v628
    %2992 = vmatpush.msra.mxu0 %v620
    %2993 = vmatpush.msra.mxu0 %v612
    %2994 = vmatmul.f32.gmra.mxu0 %v2896
    %v2995 = vpop.f32.mrf.mxu0
    %v2996 = vadd.f32 0.0, %v2995
    %2997 = vdwg.mxu0
    %2998 = vmatpush.msra.mxu0 0.0
    %2999 = vmatpush.msra.mxu0 0.0
    %3000 = vmatpush.msra.mxu0 0.0
    %3001 = vmatpush.msra.mxu0 0.0
    %3002 = vmatpush.msra.mxu0 0.0
    %3003 = vmatpush.msra.mxu0 0.0
    %3004 = vmatpush.msra.mxu0 0.0
    %3005 = vmatpush.msra.mxu0 0.0
    %3006 = vmatpush.msra.mxu0 %v669
    %3007 = vmatpush.msra.mxu0 %v661
    %3008 = vmatpush.msra.mxu0 %v653
    %3009 = vmatpush.msra.mxu0 %v645
    %3010 = vmatpush.msra.mxu0 %v637
    %3011 = vmatpush.msra.mxu0 %v629
    %3012 = vmatpush.msra.mxu0 %v621
    %3013 = vmatpush.msra.mxu0 %v613
    %3014 = vmatmul.f32.gmra.mxu0 %v2896
    %v3015 = vpop.f32.mrf.mxu0
    %v3016 = vadd.f32 0.0, %v3015
    %3017 = vdwg.mxu0
    %3018 = vmatpush.msra.mxu0 0.0
    %3019 = vmatpush.msra.mxu0 0.0
    %3020 = vmatpush.msra.mxu0 0.0
    %3021 = vmatpush.msra.mxu0 0.0
    %3022 = vmatpush.msra.mxu0 0.0
    %3023 = vmatpush.msra.mxu0 0.0
    %3024 = vmatpush.msra.mxu0 0.0
    %3025 = vmatpush.msra.mxu0 0.0
    %3026 = vmatpush.msra.mxu0 %v670
    %3027 = vmatpush.msra.mxu0 %v662
    %3028 = vmatpush.msra.mxu0 %v654
    %3029 = vmatpush.msra.mxu0 %v646
    %3030 = vmatpush.msra.mxu0 %v638
    %3031 = vmatpush.msra.mxu0 %v630
    %3032 = vmatpush.msra.mxu0 %v622
    %3033 = vmatpush.msra.mxu0 %v614
    %3034 = vmatmul.f32.gmra.mxu0 %v2896
    %v3035 = vpop.f32.mrf.mxu0
    %v3036 = vadd.f32 0.0, %v3035
    %3037 = vdwg.mxu0
    %3038 = vmatpush.msra.mxu0 0.0
    %3039 = vmatpush.msra.mxu0 0.0
    %3040 = vmatpush.msra.mxu0 0.0
    %3041 = vmatpush.msra.mxu0 0.0
    %3042 = vmatpush.msra.mxu0 0.0
    %3043 = vmatpush.msra.mxu0 0.0
    %3044 = vmatpush.msra.mxu0 0.0
    %3045 = vmatpush.msra.mxu0 0.0
    %3046 = vmatpush.msra.mxu0 %v671
    %3047 = vmatpush.msra.mxu0 %v663
    %3048 = vmatpush.msra.mxu0 %v655
    %3049 = vmatpush.msra.mxu0 %v647
    %3050 = vmatpush.msra.mxu0 %v639
    %3051 = vmatpush.msra.mxu0 %v631
    %3052 = vmatpush.msra.mxu0 %v623
    %3053 = vmatpush.msra.mxu0 %v615
    %3054 = vmatmul.f32.gmra.mxu0 %v2896
    %v3055 = vpop.f32.mrf.mxu0
    %v3056 = vadd.f32 0.0, %v3055
    %3057 = vdwg.mxu0
    %v3058 = vmax.f32 %v2886, %v2916
    %v3059 = vmax.f32 %v2887, %v2936
    %v3060 = vmax.f32 %v2888, %v2956
    %v3061 = vmax.f32 %v2889, %v2976
    %v3062 = vmax.f32 %v2890, %v2996
    %v3063 = vmax.f32 %v2891, %v3016
    %v3064 = vmax.f32 %v2892, %v3036
    %v3065 = vmax.f32 %v2893, %v3056
    %v3067 = vsel %vm672, %v605, 0
    %3069 = vmatpush.msra.mxu0 0.0
    %3070 = vmatpush.msra.mxu0 0.0
    %3071 = vmatpush.msra.mxu0 0.0
    %3072 = vmatpush.msra.mxu0 0.0
    %3073 = vmatpush.msra.mxu0 0.0
    %3074 = vmatpush.msra.mxu0 0.0
    %3075 = vmatpush.msra.mxu0 0.0
    %3076 = vmatpush.msra.mxu0 0.0
    %3077 = vmatpush.msra.mxu0 %v664
    %3078 = vmatpush.msra.mxu0 %v656
    %3079 = vmatpush.msra.mxu0 %v648
    %3080 = vmatpush.msra.mxu0 %v640
    %3081 = vmatpush.msra.mxu0 %v632
    %3082 = vmatpush.msra.mxu0 %v624
    %3083 = vmatpush.msra.mxu0 %v616
    %3084 = vmatpush.msra.mxu0 %v608
    %3085 = vmatmul.f32.gmra.mxu0 %v3067
    %v3086 = vpop.f32.mrf.mxu0
    %v3087 = vadd.f32 0.0, %v3086
    %3088 = vdwg.mxu0
    %3089 = vmatpush.msra.mxu0 0.0
    %3090 = vmatpush.msra.mxu0 0.0
    %3091 = vmatpush.msra.mxu0 0.0
    %3092 = vmatpush.msra.mxu0 0.0
    %3093 = vmatpush.msra.mxu0 0.0
    %3094 = vmatpush.msra.mxu0 0.0
    %3095 = vmatpush.msra.mxu0 0.0
    %3096 = vmatpush.msra.mxu0 0.0
    %3097 = vmatpush.msra.mxu0 %v665
    %3098 = vmatpush.msra.mxu0 %v657
    %3099 = vmatpush.msra.mxu0 %v649
    %3100 = vmatpush.msra.mxu0 %v641
    %3101 = vmatpush.msra.mxu0 %v633
    %3102 = vmatpush.msra.mxu0 %v625
    %3103 = vmatpush.msra.mxu0 %v617
    %3104 = vmatpush.msra.mxu0 %v609
    %3105 = vmatmul.f32.gmra.mxu0 %v3067
    %v3106 = vpop.f32.mrf.mxu0
    %v3107 = vadd.f32 0.0, %v3106
    %3108 = vdwg.mxu0
    %3109 = vmatpush.msra.mxu0 0.0
    %3110 = vmatpush.msra.mxu0 0.0
    %3111 = vmatpush.msra.mxu0 0.0
    %3112 = vmatpush.msra.mxu0 0.0
    %3113 = vmatpush.msra.mxu0 0.0
    %3114 = vmatpush.msra.mxu0 0.0
    %3115 = vmatpush.msra.mxu0 0.0
    %3116 = vmatpush.msra.mxu0 0.0
    %3117 = vmatpush.msra.mxu0 %v666
    %3118 = vmatpush.msra.mxu0 %v658
    %3119 = vmatpush.msra.mxu0 %v650
    %3120 = vmatpush.msra.mxu0 %v642
    %3121 = vmatpush.msra.mxu0 %v634
    %3122 = vmatpush.msra.mxu0 %v626
    %3123 = vmatpush.msra.mxu0 %v618
    %3124 = vmatpush.msra.mxu0 %v610
    %3125 = vmatmul.f32.gmra.mxu0 %v3067
    %v3126 = vpop.f32.mrf.mxu0
    %v3127 = vadd.f32 0.0, %v3126
    %3128 = vdwg.mxu0
    %3129 = vmatpush.msra.mxu0 0.0
    %3130 = vmatpush.msra.mxu0 0.0
    %3131 = vmatpush.msra.mxu0 0.0
    %3132 = vmatpush.msra.mxu0 0.0
    %3133 = vmatpush.msra.mxu0 0.0
    %3134 = vmatpush.msra.mxu0 0.0
    %3135 = vmatpush.msra.mxu0 0.0
    %3136 = vmatpush.msra.mxu0 0.0
    %3137 = vmatpush.msra.mxu0 %v667
    %3138 = vmatpush.msra.mxu0 %v659
    %3139 = vmatpush.msra.mxu0 %v651
    %3140 = vmatpush.msra.mxu0 %v643
    %3141 = vmatpush.msra.mxu0 %v635
    %3142 = vmatpush.msra.mxu0 %v627
    %3143 = vmatpush.msra.mxu0 %v619
    %3144 = vmatpush.msra.mxu0 %v611
    %3145 = vmatmul.f32.gmra.mxu0 %v3067
    %v3146 = vpop.f32.mrf.mxu0
    %v3147 = vadd.f32 0.0, %v3146
    %3148 = vdwg.mxu0
    %3149 = vmatpush.msra.mxu0 0.0
    %3150 = vmatpush.msra.mxu0 0.0
    %3151 = vmatpush.msra.mxu0 0.0
    %3152 = vmatpush.msra.mxu0 0.0
    %3153 = vmatpush.msra.mxu0 0.0
    %3154 = vmatpush.msra.mxu0 0.0
    %3155 = vmatpush.msra.mxu0 0.0
    %3156 = vmatpush.msra.mxu0 0.0
    %3157 = vmatpush.msra.mxu0 %v668
    %3158 = vmatpush.msra.mxu0 %v660
    %3159 = vmatpush.msra.mxu0 %v652
    %3160 = vmatpush.msra.mxu0 %v644
    %3161 = vmatpush.msra.mxu0 %v636
    %3162 = vmatpush.msra.mxu0 %v628
    %3163 = vmatpush.msra.mxu0 %v620
    %3164 = vmatpush.msra.mxu0 %v612
    %3165 = vmatmul.f32.gmra.mxu0 %v3067
    %v3166 = vpop.f32.mrf.mxu0
    %v3167 = vadd.f32 0.0, %v3166
    %3168 = vdwg.mxu0
    %3169 = vmatpush.msra.mxu0 0.0
    %3170 = vmatpush.msra.mxu0 0.0
    %3171 = vmatpush.msra.mxu0 0.0
    %3172 = vmatpush.msra.mxu0 0.0
    %3173 = vmatpush.msra.mxu0 0.0
    %3174 = vmatpush.msra.mxu0 0.0
    %3175 = vmatpush.msra.mxu0 0.0
    %3176 = vmatpush.msra.mxu0 0.0
    %3177 = vmatpush.msra.mxu0 %v669
    %3178 = vmatpush.msra.mxu0 %v661
    %3179 = vmatpush.msra.mxu0 %v653
    %3180 = vmatpush.msra.mxu0 %v645
    %3181 = vmatpush.msra.mxu0 %v637
    %3182 = vmatpush.msra.mxu0 %v629
    %3183 = vmatpush.msra.mxu0 %v621
    %3184 = vmatpush.msra.mxu0 %v613
    %3185 = vmatmul.f32.gmra.mxu0 %v3067
    %v3186 = vpop.f32.mrf.mxu0
    %v3187 = vadd.f32 0.0, %v3186
    %3188 = vdwg.mxu0
    %3189 = vmatpush.msra.mxu0 0.0
    %3190 = vmatpush.msra.mxu0 0.0
    %3191 = vmatpush.msra.mxu0 0.0
    %3192 = vmatpush.msra.mxu0 0.0
    %3193 = vmatpush.msra.mxu0 0.0
    %3194 = vmatpush.msra.mxu0 0.0
    %3195 = vmatpush.msra.mxu0 0.0
    %3196 = vmatpush.msra.mxu0 0.0
    %3197 = vmatpush.msra.mxu0 %v670
    %3198 = vmatpush.msra.mxu0 %v662
    %3199 = vmatpush.msra.mxu0 %v654
    %3200 = vmatpush.msra.mxu0 %v646
    %3201 = vmatpush.msra.mxu0 %v638
    %3202 = vmatpush.msra.mxu0 %v630
    %3203 = vmatpush.msra.mxu0 %v622
    %3204 = vmatpush.msra.mxu0 %v614
    %3205 = vmatmul.f32.gmra.mxu0 %v3067
    %v3206 = vpop.f32.mrf.mxu0
    %v3207 = vadd.f32 0.0, %v3206
    %3208 = vdwg.mxu0
    %3209 = vmatpush.msra.mxu0 0.0
    %3210 = vmatpush.msra.mxu0 0.0
    %3211 = vmatpush.msra.mxu0 0.0
    %3212 = vmatpush.msra.mxu0 0.0
    %3213 = vmatpush.msra.mxu0 0.0
    %3214 = vmatpush.msra.mxu0 0.0
    %3215 = vmatpush.msra.mxu0 0.0
    %3216 = vmatpush.msra.mxu0 0.0
    %3217 = vmatpush.msra.mxu0 %v671
    %3218 = vmatpush.msra.mxu0 %v663
    %3219 = vmatpush.msra.mxu0 %v655
    %3220 = vmatpush.msra.mxu0 %v647
    %3221 = vmatpush.msra.mxu0 %v639
    %3222 = vmatpush.msra.mxu0 %v631
    %3223 = vmatpush.msra.mxu0 %v623
    %3224 = vmatpush.msra.mxu0 %v615
    %3225 = vmatmul.f32.gmra.mxu0 %v3067
    %v3226 = vpop.f32.mrf.mxu0
    %v3227 = vadd.f32 0.0, %v3226
    %3228 = vdwg.mxu0
    %v3229 = vmax.f32 %v3058, %v3087
    %v3230 = vmax.f32 %v3059, %v3107
    %v3231 = vmax.f32 %v3060, %v3127
    %v3232 = vmax.f32 %v3061, %v3147
    %v3233 = vmax.f32 %v3062, %v3167
    %v3234 = vmax.f32 %v3063, %v3187
    %v3235 = vmax.f32 %v3064, %v3207
    %v3236 = vmax.f32 %v3065, %v3227
    %3237 = vrot.lane.b32.xlu0 %v605, 64
    %v3238 = vpop.permute.xlu0 %3237
    %v3239 = vsel %vm672, %v3238, 0
    %3241 = vmatpush.msra.mxu0 0.0
    %3242 = vmatpush.msra.mxu0 0.0
    %3243 = vmatpush.msra.mxu0 0.0
    %3244 = vmatpush.msra.mxu0 0.0
    %3245 = vmatpush.msra.mxu0 0.0
    %3246 = vmatpush.msra.mxu0 0.0
    %3247 = vmatpush.msra.mxu0 0.0
    %3248 = vmatpush.msra.mxu0 0.0
    %3249 = vmatpush.msra.mxu0 %v664
    %3250 = vmatpush.msra.mxu0 %v656
    %3251 = vmatpush.msra.mxu0 %v648
    %3252 = vmatpush.msra.mxu0 %v640
    %3253 = vmatpush.msra.mxu0 %v632
    %3254 = vmatpush.msra.mxu0 %v624
    %3255 = vmatpush.msra.mxu0 %v616
    %3256 = vmatpush.msra.mxu0 %v608
    %3257 = vmatmul.f32.gmra.mxu0 %v3239
    %v3258 = vpop.f32.mrf.mxu0
    %v3259 = vadd.f32 0.0, %v3258
    %3260 = vdwg.mxu0
    %3261 = vmatpush.msra.mxu0 0.0
    %3262 = vmatpush.msra.mxu0 0.0
    %3263 = vmatpush.msra.mxu0 0.0
    %3264 = vmatpush.msra.mxu0 0.0
    %3265 = vmatpush.msra.mxu0 0.0
    %3266 = vmatpush.msra.mxu0 0.0
    %3267 = vmatpush.msra.mxu0 0.0
    %3268 = vmatpush.msra.mxu0 0.0
    %3269 = vmatpush.msra.mxu0 %v665
    %3270 = vmatpush.msra.mxu0 %v657
    %3271 = vmatpush.msra.mxu0 %v649
    %3272 = vmatpush.msra.mxu0 %v641
    %3273 = vmatpush.msra.mxu0 %v633
    %3274 = vmatpush.msra.mxu0 %v625
    %3275 = vmatpush.msra.mxu0 %v617
    %3276 = vmatpush.msra.mxu0 %v609
    %3277 = vmatmul.f32.gmra.mxu0 %v3239
    %v3278 = vpop.f32.mrf.mxu0
    %v3279 = vadd.f32 0.0, %v3278
    %3280 = vdwg.mxu0
    %3281 = vmatpush.msra.mxu0 0.0
    %3282 = vmatpush.msra.mxu0 0.0
    %3283 = vmatpush.msra.mxu0 0.0
    %3284 = vmatpush.msra.mxu0 0.0
    %3285 = vmatpush.msra.mxu0 0.0
    %3286 = vmatpush.msra.mxu0 0.0
    %3287 = vmatpush.msra.mxu0 0.0
    %3288 = vmatpush.msra.mxu0 0.0
    %3289 = vmatpush.msra.mxu0 %v666
    %3290 = vmatpush.msra.mxu0 %v658
    %3291 = vmatpush.msra.mxu0 %v650
    %3292 = vmatpush.msra.mxu0 %v642
    %3293 = vmatpush.msra.mxu0 %v634
    %3294 = vmatpush.msra.mxu0 %v626
    %3295 = vmatpush.msra.mxu0 %v618
    %3296 = vmatpush.msra.mxu0 %v610
    %3297 = vmatmul.f32.gmra.mxu0 %v3239
    %v3298 = vpop.f32.mrf.mxu0
    %v3299 = vadd.f32 0.0, %v3298
    %3300 = vdwg.mxu0
    %3301 = vmatpush.msra.mxu0 0.0
    %3302 = vmatpush.msra.mxu0 0.0
    %3303 = vmatpush.msra.mxu0 0.0
    %3304 = vmatpush.msra.mxu0 0.0
    %3305 = vmatpush.msra.mxu0 0.0
    %3306 = vmatpush.msra.mxu0 0.0
    %3307 = vmatpush.msra.mxu0 0.0
    %3308 = vmatpush.msra.mxu0 0.0
    %3309 = vmatpush.msra.mxu0 %v667
    %3310 = vmatpush.msra.mxu0 %v659
    %3311 = vmatpush.msra.mxu0 %v651
    %3312 = vmatpush.msra.mxu0 %v643
    %3313 = vmatpush.msra.mxu0 %v635
    %3314 = vmatpush.msra.mxu0 %v627
    %3315 = vmatpush.msra.mxu0 %v619
    %3316 = vmatpush.msra.mxu0 %v611
    %3317 = vmatmul.f32.gmra.mxu0 %v3239
    %v3318 = vpop.f32.mrf.mxu0
    %v3319 = vadd.f32 0.0, %v3318
    %3320 = vdwg.mxu0
    %3321 = vmatpush.msra.mxu0 0.0
    %3322 = vmatpush.msra.mxu0 0.0
    %3323 = vmatpush.msra.mxu0 0.0
    %3324 = vmatpush.msra.mxu0 0.0
    %3325 = vmatpush.msra.mxu0 0.0
    %3326 = vmatpush.msra.mxu0 0.0
    %3327 = vmatpush.msra.mxu0 0.0
    %3328 = vmatpush.msra.mxu0 0.0
    %3329 = vmatpush.msra.mxu0 %v668
    %3330 = vmatpush.msra.mxu0 %v660
    %3331 = vmatpush.msra.mxu0 %v652
    %3332 = vmatpush.msra.mxu0 %v644
    %3333 = vmatpush.msra.mxu0 %v636
    %3334 = vmatpush.msra.mxu0 %v628
    %3335 = vmatpush.msra.mxu0 %v620
    %3336 = vmatpush.msra.mxu0 %v612
    %3337 = vmatmul.f32.gmra.mxu0 %v3239
    %v3338 = vpop.f32.mrf.mxu0
    %v3339 = vadd.f32 0.0, %v3338
    %3340 = vdwg.mxu0
    %3341 = vmatpush.msra.mxu0 0.0
    %3342 = vmatpush.msra.mxu0 0.0
    %3343 = vmatpush.msra.mxu0 0.0
    %3344 = vmatpush.msra.mxu0 0.0
    %3345 = vmatpush.msra.mxu0 0.0
    %3346 = vmatpush.msra.mxu0 0.0
    %3347 = vmatpush.msra.mxu0 0.0
    %3348 = vmatpush.msra.mxu0 0.0
    %3349 = vmatpush.msra.mxu0 %v669
    %3350 = vmatpush.msra.mxu0 %v661
    %3351 = vmatpush.msra.mxu0 %v653
    %3352 = vmatpush.msra.mxu0 %v645
    %3353 = vmatpush.msra.mxu0 %v637
    %3354 = vmatpush.msra.mxu0 %v629
    %3355 = vmatpush.msra.mxu0 %v621
    %3356 = vmatpush.msra.mxu0 %v613
    %3357 = vmatmul.f32.gmra.mxu0 %v3239
    %v3358 = vpop.f32.mrf.mxu0
    %v3359 = vadd.f32 0.0, %v3358
    %3360 = vdwg.mxu0
    %3361 = vmatpush.msra.mxu0 0.0
    %3362 = vmatpush.msra.mxu0 0.0
    %3363 = vmatpush.msra.mxu0 0.0
    %3364 = vmatpush.msra.mxu0 0.0
    %3365 = vmatpush.msra.mxu0 0.0
    %3366 = vmatpush.msra.mxu0 0.0
    %3367 = vmatpush.msra.mxu0 0.0
    %3368 = vmatpush.msra.mxu0 0.0
    %3369 = vmatpush.msra.mxu0 %v670
    %3370 = vmatpush.msra.mxu0 %v662
    %3371 = vmatpush.msra.mxu0 %v654
    %3372 = vmatpush.msra.mxu0 %v646
    %3373 = vmatpush.msra.mxu0 %v638
    %3374 = vmatpush.msra.mxu0 %v630
    %3375 = vmatpush.msra.mxu0 %v622
    %3376 = vmatpush.msra.mxu0 %v614
    %3377 = vmatmul.f32.gmra.mxu0 %v3239
    %v3378 = vpop.f32.mrf.mxu0
    %v3379 = vadd.f32 0.0, %v3378
    %3380 = vdwg.mxu0
    %3381 = vmatpush.msra.mxu0 0.0
    %3382 = vmatpush.msra.mxu0 0.0
    %3383 = vmatpush.msra.mxu0 0.0
    %3384 = vmatpush.msra.mxu0 0.0
    %3385 = vmatpush.msra.mxu0 0.0
    %3386 = vmatpush.msra.mxu0 0.0
    %3387 = vmatpush.msra.mxu0 0.0
    %3388 = vmatpush.msra.mxu0 0.0
    %3389 = vmatpush.msra.mxu0 %v671
    %3390 = vmatpush.msra.mxu0 %v663
    %3391 = vmatpush.msra.mxu0 %v655
    %3392 = vmatpush.msra.mxu0 %v647
    %3393 = vmatpush.msra.mxu0 %v639
    %3394 = vmatpush.msra.mxu0 %v631
    %3395 = vmatpush.msra.mxu0 %v623
    %3396 = vmatpush.msra.mxu0 %v615
    %3397 = vmatmul.f32.gmra.mxu0 %v3239
    %v3398 = vpop.f32.mrf.mxu0
    %v3399 = vadd.f32 0.0, %v3398
    %3400 = vdwg.mxu0
    %v3401 = vmax.f32 %v3229, %v3259
    %v3402 = vmax.f32 %v3230, %v3279
    %v3403 = vmax.f32 %v3231, %v3299
    %v3404 = vmax.f32 %v3232, %v3319
    %v3405 = vmax.f32 %v3233, %v3339
    %v3406 = vmax.f32 %v3234, %v3359
    %v3407 = vmax.f32 %v3235, %v3379
    %v3408 = vmax.f32 %v3236, %v3399
    %v3410 = vsel %vm672, %v606, 0
    %3412 = vmatpush.msra.mxu0 0.0
    %3413 = vmatpush.msra.mxu0 0.0
    %3414 = vmatpush.msra.mxu0 0.0
    %3415 = vmatpush.msra.mxu0 0.0
    %3416 = vmatpush.msra.mxu0 0.0
    %3417 = vmatpush.msra.mxu0 0.0
    %3418 = vmatpush.msra.mxu0 0.0
    %3419 = vmatpush.msra.mxu0 0.0
    %3420 = vmatpush.msra.mxu0 %v664
    %3421 = vmatpush.msra.mxu0 %v656
    %3422 = vmatpush.msra.mxu0 %v648
    %3423 = vmatpush.msra.mxu0 %v640
    %3424 = vmatpush.msra.mxu0 %v632
    %3425 = vmatpush.msra.mxu0 %v624
    %3426 = vmatpush.msra.mxu0 %v616
    %3427 = vmatpush.msra.mxu0 %v608
    %3428 = vmatmul.f32.gmra.mxu0 %v3410
    %v3429 = vpop.f32.mrf.mxu0
    %v3430 = vadd.f32 0.0, %v3429
    %3431 = vdwg.mxu0
    %3432 = vmatpush.msra.mxu0 0.0
    %3433 = vmatpush.msra.mxu0 0.0
    %3434 = vmatpush.msra.mxu0 0.0
    %3435 = vmatpush.msra.mxu0 0.0
    %3436 = vmatpush.msra.mxu0 0.0
    %3437 = vmatpush.msra.mxu0 0.0
    %3438 = vmatpush.msra.mxu0 0.0
    %3439 = vmatpush.msra.mxu0 0.0
    %3440 = vmatpush.msra.mxu0 %v665
    %3441 = vmatpush.msra.mxu0 %v657
    %3442 = vmatpush.msra.mxu0 %v649
    %3443 = vmatpush.msra.mxu0 %v641
    %3444 = vmatpush.msra.mxu0 %v633
    %3445 = vmatpush.msra.mxu0 %v625
    %3446 = vmatpush.msra.mxu0 %v617
    %3447 = vmatpush.msra.mxu0 %v609
    %3448 = vmatmul.f32.gmra.mxu0 %v3410
    %v3449 = vpop.f32.mrf.mxu0
    %v3450 = vadd.f32 0.0, %v3449
    %3451 = vdwg.mxu0
    %3452 = vmatpush.msra.mxu0 0.0
    %3453 = vmatpush.msra.mxu0 0.0
    %3454 = vmatpush.msra.mxu0 0.0
    %3455 = vmatpush.msra.mxu0 0.0
    %3456 = vmatpush.msra.mxu0 0.0
    %3457 = vmatpush.msra.mxu0 0.0
    %3458 = vmatpush.msra.mxu0 0.0
    %3459 = vmatpush.msra.mxu0 0.0
    %3460 = vmatpush.msra.mxu0 %v666
    %3461 = vmatpush.msra.mxu0 %v658
    %3462 = vmatpush.msra.mxu0 %v650
    %3463 = vmatpush.msra.mxu0 %v642
    %3464 = vmatpush.msra.mxu0 %v634
    %3465 = vmatpush.msra.mxu0 %v626
    %3466 = vmatpush.msra.mxu0 %v618
    %3467 = vmatpush.msra.mxu0 %v610
    %3468 = vmatmul.f32.gmra.mxu0 %v3410
    %v3469 = vpop.f32.mrf.mxu0
    %v3470 = vadd.f32 0.0, %v3469
    %3471 = vdwg.mxu0
    %3472 = vmatpush.msra.mxu0 0.0
    %3473 = vmatpush.msra.mxu0 0.0
    %3474 = vmatpush.msra.mxu0 0.0
    %3475 = vmatpush.msra.mxu0 0.0
    %3476 = vmatpush.msra.mxu0 0.0
    %3477 = vmatpush.msra.mxu0 0.0
    %3478 = vmatpush.msra.mxu0 0.0
    %3479 = vmatpush.msra.mxu0 0.0
    %3480 = vmatpush.msra.mxu0 %v667
    %3481 = vmatpush.msra.mxu0 %v659
    %3482 = vmatpush.msra.mxu0 %v651
    %3483 = vmatpush.msra.mxu0 %v643
    %3484 = vmatpush.msra.mxu0 %v635
    %3485 = vmatpush.msra.mxu0 %v627
    %3486 = vmatpush.msra.mxu0 %v619
    %3487 = vmatpush.msra.mxu0 %v611
    %3488 = vmatmul.f32.gmra.mxu0 %v3410
    %v3489 = vpop.f32.mrf.mxu0
    %v3490 = vadd.f32 0.0, %v3489
    %3491 = vdwg.mxu0
    %3492 = vmatpush.msra.mxu0 0.0
    %3493 = vmatpush.msra.mxu0 0.0
    %3494 = vmatpush.msra.mxu0 0.0
    %3495 = vmatpush.msra.mxu0 0.0
    %3496 = vmatpush.msra.mxu0 0.0
    %3497 = vmatpush.msra.mxu0 0.0
    %3498 = vmatpush.msra.mxu0 0.0
    %3499 = vmatpush.msra.mxu0 0.0
    %3500 = vmatpush.msra.mxu0 %v668
    %3501 = vmatpush.msra.mxu0 %v660
    %3502 = vmatpush.msra.mxu0 %v652
    %3503 = vmatpush.msra.mxu0 %v644
    %3504 = vmatpush.msra.mxu0 %v636
    %3505 = vmatpush.msra.mxu0 %v628
    %3506 = vmatpush.msra.mxu0 %v620
    %3507 = vmatpush.msra.mxu0 %v612
    %3508 = vmatmul.f32.gmra.mxu0 %v3410
    %v3509 = vpop.f32.mrf.mxu0
    %v3510 = vadd.f32 0.0, %v3509
    %3511 = vdwg.mxu0
    %3512 = vmatpush.msra.mxu0 0.0
    %3513 = vmatpush.msra.mxu0 0.0
    %3514 = vmatpush.msra.mxu0 0.0
    %3515 = vmatpush.msra.mxu0 0.0
    %3516 = vmatpush.msra.mxu0 0.0
    %3517 = vmatpush.msra.mxu0 0.0
    %3518 = vmatpush.msra.mxu0 0.0
    %3519 = vmatpush.msra.mxu0 0.0
    %3520 = vmatpush.msra.mxu0 %v669
    %3521 = vmatpush.msra.mxu0 %v661
    %3522 = vmatpush.msra.mxu0 %v653
    %3523 = vmatpush.msra.mxu0 %v645
    %3524 = vmatpush.msra.mxu0 %v637
    %3525 = vmatpush.msra.mxu0 %v629
    %3526 = vmatpush.msra.mxu0 %v621
    %3527 = vmatpush.msra.mxu0 %v613
    %3528 = vmatmul.f32.gmra.mxu0 %v3410
    %v3529 = vpop.f32.mrf.mxu0
    %v3530 = vadd.f32 0.0, %v3529
    %3531 = vdwg.mxu0
    %3532 = vmatpush.msra.mxu0 0.0
    %3533 = vmatpush.msra.mxu0 0.0
    %3534 = vmatpush.msra.mxu0 0.0
    %3535 = vmatpush.msra.mxu0 0.0
    %3536 = vmatpush.msra.mxu0 0.0
    %3537 = vmatpush.msra.mxu0 0.0
    %3538 = vmatpush.msra.mxu0 0.0
    %3539 = vmatpush.msra.mxu0 0.0
    %3540 = vmatpush.msra.mxu0 %v670
    %3541 = vmatpush.msra.mxu0 %v662
    %3542 = vmatpush.msra.mxu0 %v654
    %3543 = vmatpush.msra.mxu0 %v646
    %3544 = vmatpush.msra.mxu0 %v638
    %3545 = vmatpush.msra.mxu0 %v630
    %3546 = vmatpush.msra.mxu0 %v622
    %3547 = vmatpush.msra.mxu0 %v614
    %3548 = vmatmul.f32.gmra.mxu0 %v3410
    %v3549 = vpop.f32.mrf.mxu0
    %v3550 = vadd.f32 0.0, %v3549
    %3551 = vdwg.mxu0
    %3552 = vmatpush.msra.mxu0 0.0
    %3553 = vmatpush.msra.mxu0 0.0
    %3554 = vmatpush.msra.mxu0 0.0
    %3555 = vmatpush.msra.mxu0 0.0
    %3556 = vmatpush.msra.mxu0 0.0
    %3557 = vmatpush.msra.mxu0 0.0
    %3558 = vmatpush.msra.mxu0 0.0
    %3559 = vmatpush.msra.mxu0 0.0
    %3560 = vmatpush.msra.mxu0 %v671
    %3561 = vmatpush.msra.mxu0 %v663
    %3562 = vmatpush.msra.mxu0 %v655
    %3563 = vmatpush.msra.mxu0 %v647
    %3564 = vmatpush.msra.mxu0 %v639
    %3565 = vmatpush.msra.mxu0 %v631
    %3566 = vmatpush.msra.mxu0 %v623
    %3567 = vmatpush.msra.mxu0 %v615
    %3568 = vmatmul.f32.gmra.mxu0 %v3410
    %v3569 = vpop.f32.mrf.mxu0
    %v3570 = vadd.f32 0.0, %v3569
    %3571 = vdwg.mxu0
    %v3572 = vmax.f32 %v3401, %v3430
    %v3573 = vmax.f32 %v3402, %v3450
    %v3574 = vmax.f32 %v3403, %v3470
    %v3575 = vmax.f32 %v3404, %v3490
    %v3576 = vmax.f32 %v3405, %v3510
    %v3577 = vmax.f32 %v3406, %v3530
    %v3578 = vmax.f32 %v3407, %v3550
    %v3579 = vmax.f32 %v3408, %v3570
    %3580 = vrot.lane.b32.xlu0 %v606, 64
    %v3581 = vpop.permute.xlu0 %3580
    %v3582 = vsel %vm672, %v3581, 0
    %3584 = vmatpush.msra.mxu0 0.0
    %3585 = vmatpush.msra.mxu0 0.0
    %3586 = vmatpush.msra.mxu0 0.0
    %3587 = vmatpush.msra.mxu0 0.0
    %3588 = vmatpush.msra.mxu0 0.0
    %3589 = vmatpush.msra.mxu0 0.0
    %3590 = vmatpush.msra.mxu0 0.0
    %3591 = vmatpush.msra.mxu0 0.0
    %3592 = vmatpush.msra.mxu0 %v664
    %3593 = vmatpush.msra.mxu0 %v656
    %3594 = vmatpush.msra.mxu0 %v648
    %3595 = vmatpush.msra.mxu0 %v640
    %3596 = vmatpush.msra.mxu0 %v632
    %3597 = vmatpush.msra.mxu0 %v624
    %3598 = vmatpush.msra.mxu0 %v616
    %3599 = vmatpush.msra.mxu0 %v608
    %3600 = vmatmul.f32.gmra.mxu0 %v3582
    %v3601 = vpop.f32.mrf.mxu0
    %v3602 = vadd.f32 0.0, %v3601
    %3603 = vdwg.mxu0
    %3604 = vmatpush.msra.mxu0 0.0
    %3605 = vmatpush.msra.mxu0 0.0
    %3606 = vmatpush.msra.mxu0 0.0
    %3607 = vmatpush.msra.mxu0 0.0
    %3608 = vmatpush.msra.mxu0 0.0
    %3609 = vmatpush.msra.mxu0 0.0
    %3610 = vmatpush.msra.mxu0 0.0
    %3611 = vmatpush.msra.mxu0 0.0
    %3612 = vmatpush.msra.mxu0 %v665
    %3613 = vmatpush.msra.mxu0 %v657
    %3614 = vmatpush.msra.mxu0 %v649
    %3615 = vmatpush.msra.mxu0 %v641
    %3616 = vmatpush.msra.mxu0 %v633
    %3617 = vmatpush.msra.mxu0 %v625
    %3618 = vmatpush.msra.mxu0 %v617
    %3619 = vmatpush.msra.mxu0 %v609
    %3620 = vmatmul.f32.gmra.mxu0 %v3582
    %v3621 = vpop.f32.mrf.mxu0
    %v3622 = vadd.f32 0.0, %v3621
    %3623 = vdwg.mxu0
    %3624 = vmatpush.msra.mxu0 0.0
    %3625 = vmatpush.msra.mxu0 0.0
    %3626 = vmatpush.msra.mxu0 0.0
    %3627 = vmatpush.msra.mxu0 0.0
    %3628 = vmatpush.msra.mxu0 0.0
    %3629 = vmatpush.msra.mxu0 0.0
    %3630 = vmatpush.msra.mxu0 0.0
    %3631 = vmatpush.msra.mxu0 0.0
    %3632 = vmatpush.msra.mxu0 %v666
    %3633 = vmatpush.msra.mxu0 %v658
    %3634 = vmatpush.msra.mxu0 %v650
    %3635 = vmatpush.msra.mxu0 %v642
    %3636 = vmatpush.msra.mxu0 %v634
    %3637 = vmatpush.msra.mxu0 %v626
    %3638 = vmatpush.msra.mxu0 %v618
    %3639 = vmatpush.msra.mxu0 %v610
    %3640 = vmatmul.f32.gmra.mxu0 %v3582
    %v3641 = vpop.f32.mrf.mxu0
    %v3642 = vadd.f32 0.0, %v3641
    %3643 = vdwg.mxu0
    %3644 = vmatpush.msra.mxu0 0.0
    %3645 = vmatpush.msra.mxu0 0.0
    %3646 = vmatpush.msra.mxu0 0.0
    %3647 = vmatpush.msra.mxu0 0.0
    %3648 = vmatpush.msra.mxu0 0.0
    %3649 = vmatpush.msra.mxu0 0.0
    %3650 = vmatpush.msra.mxu0 0.0
    %3651 = vmatpush.msra.mxu0 0.0
    %3652 = vmatpush.msra.mxu0 %v667
    %3653 = vmatpush.msra.mxu0 %v659
    %3654 = vmatpush.msra.mxu0 %v651
    %3655 = vmatpush.msra.mxu0 %v643
    %3656 = vmatpush.msra.mxu0 %v635
    %3657 = vmatpush.msra.mxu0 %v627
    %3658 = vmatpush.msra.mxu0 %v619
    %3659 = vmatpush.msra.mxu0 %v611
    %3660 = vmatmul.f32.gmra.mxu0 %v3582
    %v3661 = vpop.f32.mrf.mxu0
    %v3662 = vadd.f32 0.0, %v3661
    %3663 = vdwg.mxu0
    %3664 = vmatpush.msra.mxu0 0.0
    %3665 = vmatpush.msra.mxu0 0.0
    %3666 = vmatpush.msra.mxu0 0.0
    %3667 = vmatpush.msra.mxu0 0.0
    %3668 = vmatpush.msra.mxu0 0.0
    %3669 = vmatpush.msra.mxu0 0.0
    %3670 = vmatpush.msra.mxu0 0.0
    %3671 = vmatpush.msra.mxu0 0.0
    %3672 = vmatpush.msra.mxu0 %v668
    %3673 = vmatpush.msra.mxu0 %v660
    %3674 = vmatpush.msra.mxu0 %v652
    %3675 = vmatpush.msra.mxu0 %v644
    %3676 = vmatpush.msra.mxu0 %v636
    %3677 = vmatpush.msra.mxu0 %v628
    %3678 = vmatpush.msra.mxu0 %v620
    %3679 = vmatpush.msra.mxu0 %v612
    %3680 = vmatmul.f32.gmra.mxu0 %v3582
    %v3681 = vpop.f32.mrf.mxu0
    %v3682 = vadd.f32 0.0, %v3681
    %3683 = vdwg.mxu0
    %3684 = vmatpush.msra.mxu0 0.0
    %3685 = vmatpush.msra.mxu0 0.0
    %3686 = vmatpush.msra.mxu0 0.0
    %3687 = vmatpush.msra.mxu0 0.0
    %3688 = vmatpush.msra.mxu0 0.0
    %3689 = vmatpush.msra.mxu0 0.0
    %3690 = vmatpush.msra.mxu0 0.0
    %3691 = vmatpush.msra.mxu0 0.0
    %3692 = vmatpush.msra.mxu0 %v669
    %3693 = vmatpush.msra.mxu0 %v661
    %3694 = vmatpush.msra.mxu0 %v653
    %3695 = vmatpush.msra.mxu0 %v645
    %3696 = vmatpush.msra.mxu0 %v637
    %3697 = vmatpush.msra.mxu0 %v629
    %3698 = vmatpush.msra.mxu0 %v621
    %3699 = vmatpush.msra.mxu0 %v613
    %3700 = vmatmul.f32.gmra.mxu0 %v3582
    %v3701 = vpop.f32.mrf.mxu0
    %v3702 = vadd.f32 0.0, %v3701
    %3703 = vdwg.mxu0
    %3704 = vmatpush.msra.mxu0 0.0
    %3705 = vmatpush.msra.mxu0 0.0
    %3706 = vmatpush.msra.mxu0 0.0
    %3707 = vmatpush.msra.mxu0 0.0
    %3708 = vmatpush.msra.mxu0 0.0
    %3709 = vmatpush.msra.mxu0 0.0
    %3710 = vmatpush.msra.mxu0 0.0
    %3711 = vmatpush.msra.mxu0 0.0
    %3712 = vmatpush.msra.mxu0 %v670
    %3713 = vmatpush.msra.mxu0 %v662
    %3714 = vmatpush.msra.mxu0 %v654
    %3715 = vmatpush.msra.mxu0 %v646
    %3716 = vmatpush.msra.mxu0 %v638
    %3717 = vmatpush.msra.mxu0 %v630
    %3718 = vmatpush.msra.mxu0 %v622
    %3719 = vmatpush.msra.mxu0 %v614
    %3720 = vmatmul.f32.gmra.mxu0 %v3582
    %v3721 = vpop.f32.mrf.mxu0
    %v3722 = vadd.f32 0.0, %v3721
    %3723 = vdwg.mxu0
    %3724 = vmatpush.msra.mxu0 0.0
    %3725 = vmatpush.msra.mxu0 0.0
    %3726 = vmatpush.msra.mxu0 0.0
    %3727 = vmatpush.msra.mxu0 0.0
    %3728 = vmatpush.msra.mxu0 0.0
    %3729 = vmatpush.msra.mxu0 0.0
    %3730 = vmatpush.msra.mxu0 0.0
    %3731 = vmatpush.msra.mxu0 0.0
    %3732 = vmatpush.msra.mxu0 %v671
    %3733 = vmatpush.msra.mxu0 %v663
    %3734 = vmatpush.msra.mxu0 %v655
    %3735 = vmatpush.msra.mxu0 %v647
    %3736 = vmatpush.msra.mxu0 %v639
    %3737 = vmatpush.msra.mxu0 %v631
    %3738 = vmatpush.msra.mxu0 %v623
    %3739 = vmatpush.msra.mxu0 %v615
    %3740 = vmatmul.f32.gmra.mxu0 %v3582
    %v3741 = vpop.f32.mrf.mxu0
    %v3742 = vadd.f32 0.0, %v3741
    %3743 = vdwg.mxu0
    %v3744 = vmax.f32 %v3572, %v3602
    %v3745 = vmax.f32 %v3573, %v3622
    %v3746 = vmax.f32 %v3574, %v3642
    %v3747 = vmax.f32 %v3575, %v3662
    %v3748 = vmax.f32 %v3576, %v3682
    %v3749 = vmax.f32 %v3577, %v3702
    %v3750 = vmax.f32 %v3578, %v3722
    %v3751 = vmax.f32 %v3579, %v3742
    %v3753 = vsel %vm672, %v607, 0
    %3755 = vmatpush.msra.mxu0 0.0
    %3756 = vmatpush.msra.mxu0 0.0
    %3757 = vmatpush.msra.mxu0 0.0
    %3758 = vmatpush.msra.mxu0 0.0
    %3759 = vmatpush.msra.mxu0 0.0
    %3760 = vmatpush.msra.mxu0 0.0
    %3761 = vmatpush.msra.mxu0 0.0
    %3762 = vmatpush.msra.mxu0 0.0
    %3763 = vmatpush.msra.mxu0 %v664
    %3764 = vmatpush.msra.mxu0 %v656
    %3765 = vmatpush.msra.mxu0 %v648
    %3766 = vmatpush.msra.mxu0 %v640
    %3767 = vmatpush.msra.mxu0 %v632
    %3768 = vmatpush.msra.mxu0 %v624
    %3769 = vmatpush.msra.mxu0 %v616
    %3770 = vmatpush.msra.mxu0 %v608
    %3771 = vmatmul.f32.gmra.mxu0 %v3753
    %v3772 = vpop.f32.mrf.mxu0
    %v3773 = vadd.f32 0.0, %v3772
    %3774 = vdwg.mxu0
    %3775 = vmatpush.msra.mxu0 0.0
    %3776 = vmatpush.msra.mxu0 0.0
    %3777 = vmatpush.msra.mxu0 0.0
    %3778 = vmatpush.msra.mxu0 0.0
    %3779 = vmatpush.msra.mxu0 0.0
    %3780 = vmatpush.msra.mxu0 0.0
    %3781 = vmatpush.msra.mxu0 0.0
    %3782 = vmatpush.msra.mxu0 0.0
    %3783 = vmatpush.msra.mxu0 %v665
    %3784 = vmatpush.msra.mxu0 %v657
    %3785 = vmatpush.msra.mxu0 %v649
    %3786 = vmatpush.msra.mxu0 %v641
    %3787 = vmatpush.msra.mxu0 %v633
    %3788 = vmatpush.msra.mxu0 %v625
    %3789 = vmatpush.msra.mxu0 %v617
    %3790 = vmatpush.msra.mxu0 %v609
    %3791 = vmatmul.f32.gmra.mxu0 %v3753
    %v3792 = vpop.f32.mrf.mxu0
    %v3793 = vadd.f32 0.0, %v3792
    %3794 = vdwg.mxu0
    %3795 = vmatpush.msra.mxu0 0.0
    %3796 = vmatpush.msra.mxu0 0.0
    %3797 = vmatpush.msra.mxu0 0.0
    %3798 = vmatpush.msra.mxu0 0.0
    %3799 = vmatpush.msra.mxu0 0.0
    %3800 = vmatpush.msra.mxu0 0.0
    %3801 = vmatpush.msra.mxu0 0.0
    %3802 = vmatpush.msra.mxu0 0.0
    %3803 = vmatpush.msra.mxu0 %v666
    %3804 = vmatpush.msra.mxu0 %v658
    %3805 = vmatpush.msra.mxu0 %v650
    %3806 = vmatpush.msra.mxu0 %v642
    %3807 = vmatpush.msra.mxu0 %v634
    %3808 = vmatpush.msra.mxu0 %v626
    %3809 = vmatpush.msra.mxu0 %v618
    %3810 = vmatpush.msra.mxu0 %v610
    %3811 = vmatmul.f32.gmra.mxu0 %v3753
    %v3812 = vpop.f32.mrf.mxu0
    %v3813 = vadd.f32 0.0, %v3812
    %3814 = vdwg.mxu0
    %3815 = vmatpush.msra.mxu0 0.0
    %3816 = vmatpush.msra.mxu0 0.0
    %3817 = vmatpush.msra.mxu0 0.0
    %3818 = vmatpush.msra.mxu0 0.0
    %3819 = vmatpush.msra.mxu0 0.0
    %3820 = vmatpush.msra.mxu0 0.0
    %3821 = vmatpush.msra.mxu0 0.0
    %3822 = vmatpush.msra.mxu0 0.0
    %3823 = vmatpush.msra.mxu0 %v667
    %3824 = vmatpush.msra.mxu0 %v659
    %3825 = vmatpush.msra.mxu0 %v651
    %3826 = vmatpush.msra.mxu0 %v643
    %3827 = vmatpush.msra.mxu0 %v635
    %3828 = vmatpush.msra.mxu0 %v627
    %3829 = vmatpush.msra.mxu0 %v619
    %3830 = vmatpush.msra.mxu0 %v611
    %3831 = vmatmul.f32.gmra.mxu0 %v3753
    %v3832 = vpop.f32.mrf.mxu0
    %v3833 = vadd.f32 0.0, %v3832
    %3834 = vdwg.mxu0
    %3835 = vmatpush.msra.mxu0 0.0
    %3836 = vmatpush.msra.mxu0 0.0
    %3837 = vmatpush.msra.mxu0 0.0
    %3838 = vmatpush.msra.mxu0 0.0
    %3839 = vmatpush.msra.mxu0 0.0
    %3840 = vmatpush.msra.mxu0 0.0
    %3841 = vmatpush.msra.mxu0 0.0
    %3842 = vmatpush.msra.mxu0 0.0
    %3843 = vmatpush.msra.mxu0 %v668
    %3844 = vmatpush.msra.mxu0 %v660
    %3845 = vmatpush.msra.mxu0 %v652
    %3846 = vmatpush.msra.mxu0 %v644
    %3847 = vmatpush.msra.mxu0 %v636
    %3848 = vmatpush.msra.mxu0 %v628
    %3849 = vmatpush.msra.mxu0 %v620
    %3850 = vmatpush.msra.mxu0 %v612
    %3851 = vmatmul.f32.gmra.mxu0 %v3753
    %v3852 = vpop.f32.mrf.mxu0
    %v3853 = vadd.f32 0.0, %v3852
    %3854 = vdwg.mxu0
    %3855 = vmatpush.msra.mxu0 0.0
    %3856 = vmatpush.msra.mxu0 0.0
    %3857 = vmatpush.msra.mxu0 0.0
    %3858 = vmatpush.msra.mxu0 0.0
    %3859 = vmatpush.msra.mxu0 0.0
    %3860 = vmatpush.msra.mxu0 0.0
    %3861 = vmatpush.msra.mxu0 0.0
    %3862 = vmatpush.msra.mxu0 0.0
    %3863 = vmatpush.msra.mxu0 %v669
    %3864 = vmatpush.msra.mxu0 %v661
    %3865 = vmatpush.msra.mxu0 %v653
    %3866 = vmatpush.msra.mxu0 %v645
    %3867 = vmatpush.msra.mxu0 %v637
    %3868 = vmatpush.msra.mxu0 %v629
    %3869 = vmatpush.msra.mxu0 %v621
    %3870 = vmatpush.msra.mxu0 %v613
    %3871 = vmatmul.f32.gmra.mxu0 %v3753
    %v3872 = vpop.f32.mrf.mxu0
    %v3873 = vadd.f32 0.0, %v3872
    %3874 = vdwg.mxu0
    %3875 = vmatpush.msra.mxu0 0.0
    %3876 = vmatpush.msra.mxu0 0.0
    %3877 = vmatpush.msra.mxu0 0.0
    %3878 = vmatpush.msra.mxu0 0.0
    %3879 = vmatpush.msra.mxu0 0.0
    %3880 = vmatpush.msra.mxu0 0.0
    %3881 = vmatpush.msra.mxu0 0.0
    %3882 = vmatpush.msra.mxu0 0.0
    %3883 = vmatpush.msra.mxu0 %v670
    %3884 = vmatpush.msra.mxu0 %v662
    %3885 = vmatpush.msra.mxu0 %v654
    %3886 = vmatpush.msra.mxu0 %v646
    %3887 = vmatpush.msra.mxu0 %v638
    %3888 = vmatpush.msra.mxu0 %v630
    %3889 = vmatpush.msra.mxu0 %v622
    %3890 = vmatpush.msra.mxu0 %v614
    %3891 = vmatmul.f32.gmra.mxu0 %v3753
    %v3892 = vpop.f32.mrf.mxu0
    %v3893 = vadd.f32 0.0, %v3892
    %3894 = vdwg.mxu0
    %3895 = vmatpush.msra.mxu0 0.0
    %3896 = vmatpush.msra.mxu0 0.0
    %3897 = vmatpush.msra.mxu0 0.0
    %3898 = vmatpush.msra.mxu0 0.0
    %3899 = vmatpush.msra.mxu0 0.0
    %3900 = vmatpush.msra.mxu0 0.0
    %3901 = vmatpush.msra.mxu0 0.0
    %3902 = vmatpush.msra.mxu0 0.0
    %3903 = vmatpush.msra.mxu0 %v671
    %3904 = vmatpush.msra.mxu0 %v663
    %3905 = vmatpush.msra.mxu0 %v655
    %3906 = vmatpush.msra.mxu0 %v647
    %3907 = vmatpush.msra.mxu0 %v639
    %3908 = vmatpush.msra.mxu0 %v631
    %3909 = vmatpush.msra.mxu0 %v623
    %3910 = vmatpush.msra.mxu0 %v615
    %3911 = vmatmul.f32.gmra.mxu0 %v3753
    %v3912 = vpop.f32.mrf.mxu0
    %v3913 = vadd.f32 0.0, %v3912
    %3914 = vdwg.mxu0
    %v3915 = vmax.f32 %v3744, %v3773
    %v3916 = vmax.f32 %v3745, %v3793
    %v3917 = vmax.f32 %v3746, %v3813
    %v3918 = vmax.f32 %v3747, %v3833
    %v3919 = vmax.f32 %v3748, %v3853
    %v3920 = vmax.f32 %v3749, %v3873
    %v3921 = vmax.f32 %v3750, %v3893
    %v3922 = vmax.f32 %v3751, %v3913
    %3923 = vrot.lane.b32.xlu0 %v607, 64
    %v3924 = vpop.permute.xlu0 %3923
    %v3925 = vsel %vm672, %v3924, 0
    %3927 = vmatpush.msra.mxu0 0.0
    %3928 = vmatpush.msra.mxu0 0.0
    %3929 = vmatpush.msra.mxu0 0.0
    %3930 = vmatpush.msra.mxu0 0.0
    %3931 = vmatpush.msra.mxu0 0.0
    %3932 = vmatpush.msra.mxu0 0.0
    %3933 = vmatpush.msra.mxu0 0.0
    %3934 = vmatpush.msra.mxu0 0.0
    %3935 = vmatpush.msra.mxu0 %v664
    %3936 = vmatpush.msra.mxu0 %v656
    %3937 = vmatpush.msra.mxu0 %v648
    %3938 = vmatpush.msra.mxu0 %v640
    %3939 = vmatpush.msra.mxu0 %v632
    %3940 = vmatpush.msra.mxu0 %v624
    %3941 = vmatpush.msra.mxu0 %v616
    %3942 = vmatpush.msra.mxu0 %v608
    %3943 = vmatmul.f32.gmra.mxu0 %v3925
    %v3944 = vpop.f32.mrf.mxu0
    %v3945 = vadd.f32 0.0, %v3944
    %3946 = vdwg.mxu0
    %3947 = vmatpush.msra.mxu0 0.0
    %3948 = vmatpush.msra.mxu0 0.0
    %3949 = vmatpush.msra.mxu0 0.0
    %3950 = vmatpush.msra.mxu0 0.0
    %3951 = vmatpush.msra.mxu0 0.0
    %3952 = vmatpush.msra.mxu0 0.0
    %3953 = vmatpush.msra.mxu0 0.0
    %3954 = vmatpush.msra.mxu0 0.0
    %3955 = vmatpush.msra.mxu0 %v665
    %3956 = vmatpush.msra.mxu0 %v657
    %3957 = vmatpush.msra.mxu0 %v649
    %3958 = vmatpush.msra.mxu0 %v641
    %3959 = vmatpush.msra.mxu0 %v633
    %3960 = vmatpush.msra.mxu0 %v625
    %3961 = vmatpush.msra.mxu0 %v617
    %3962 = vmatpush.msra.mxu0 %v609
    %3963 = vmatmul.f32.gmra.mxu0 %v3925
    %v3964 = vpop.f32.mrf.mxu0
    %v3965 = vadd.f32 0.0, %v3964
    %3966 = vdwg.mxu0
    %3967 = vmatpush.msra.mxu0 0.0
    %3968 = vmatpush.msra.mxu0 0.0
    %3969 = vmatpush.msra.mxu0 0.0
    %3970 = vmatpush.msra.mxu0 0.0
    %3971 = vmatpush.msra.mxu0 0.0
    %3972 = vmatpush.msra.mxu0 0.0
    %3973 = vmatpush.msra.mxu0 0.0
    %3974 = vmatpush.msra.mxu0 0.0
    %3975 = vmatpush.msra.mxu0 %v666
    %3976 = vmatpush.msra.mxu0 %v658
    %3977 = vmatpush.msra.mxu0 %v650
    %3978 = vmatpush.msra.mxu0 %v642
    %3979 = vmatpush.msra.mxu0 %v634
    %3980 = vmatpush.msra.mxu0 %v626
    %3981 = vmatpush.msra.mxu0 %v618
    %3982 = vmatpush.msra.mxu0 %v610
    %3983 = vmatmul.f32.gmra.mxu0 %v3925
    %v3984 = vpop.f32.mrf.mxu0
    %v3985 = vadd.f32 0.0, %v3984
    %3986 = vdwg.mxu0
    %3987 = vmatpush.msra.mxu0 0.0
    %3988 = vmatpush.msra.mxu0 0.0
    %3989 = vmatpush.msra.mxu0 0.0
    %3990 = vmatpush.msra.mxu0 0.0
    %3991 = vmatpush.msra.mxu0 0.0
    %3992 = vmatpush.msra.mxu0 0.0
    %3993 = vmatpush.msra.mxu0 0.0
    %3994 = vmatpush.msra.mxu0 0.0
    %3995 = vmatpush.msra.mxu0 %v667
    %3996 = vmatpush.msra.mxu0 %v659
    %3997 = vmatpush.msra.mxu0 %v651
    %3998 = vmatpush.msra.mxu0 %v643
    %3999 = vmatpush.msra.mxu0 %v635
    %4000 = vmatpush.msra.mxu0 %v627
    %4001 = vmatpush.msra.mxu0 %v619
    %4002 = vmatpush.msra.mxu0 %v611
    %4003 = vmatmul.f32.gmra.mxu0 %v3925
    %v4004 = vpop.f32.mrf.mxu0
    %v4005 = vadd.f32 0.0, %v4004
    %4006 = vdwg.mxu0
    %4007 = vmatpush.msra.mxu0 0.0
    %4008 = vmatpush.msra.mxu0 0.0
    %4009 = vmatpush.msra.mxu0 0.0
    %4010 = vmatpush.msra.mxu0 0.0
    %4011 = vmatpush.msra.mxu0 0.0
    %4012 = vmatpush.msra.mxu0 0.0
    %4013 = vmatpush.msra.mxu0 0.0
    %4014 = vmatpush.msra.mxu0 0.0
    %4015 = vmatpush.msra.mxu0 %v668
    %4016 = vmatpush.msra.mxu0 %v660
    %4017 = vmatpush.msra.mxu0 %v652
    %4018 = vmatpush.msra.mxu0 %v644
    %4019 = vmatpush.msra.mxu0 %v636
    %4020 = vmatpush.msra.mxu0 %v628
    %4021 = vmatpush.msra.mxu0 %v620
    %4022 = vmatpush.msra.mxu0 %v612
    %4023 = vmatmul.f32.gmra.mxu0 %v3925
    %v4024 = vpop.f32.mrf.mxu0
    %v4025 = vadd.f32 0.0, %v4024
    %4026 = vdwg.mxu0
    %4027 = vmatpush.msra.mxu0 0.0
    %4028 = vmatpush.msra.mxu0 0.0
    %4029 = vmatpush.msra.mxu0 0.0
    %4030 = vmatpush.msra.mxu0 0.0
    %4031 = vmatpush.msra.mxu0 0.0
    %4032 = vmatpush.msra.mxu0 0.0
    %4033 = vmatpush.msra.mxu0 0.0
    %4034 = vmatpush.msra.mxu0 0.0
    %4035 = vmatpush.msra.mxu0 %v669
    %4036 = vmatpush.msra.mxu0 %v661
    %4037 = vmatpush.msra.mxu0 %v653
    %4038 = vmatpush.msra.mxu0 %v645
    %4039 = vmatpush.msra.mxu0 %v637
    %4040 = vmatpush.msra.mxu0 %v629
    %4041 = vmatpush.msra.mxu0 %v621
    %4042 = vmatpush.msra.mxu0 %v613
    %4043 = vmatmul.f32.gmra.mxu0 %v3925
    %v4044 = vpop.f32.mrf.mxu0
    %v4045 = vadd.f32 0.0, %v4044
    %4046 = vdwg.mxu0
    %4047 = vmatpush.msra.mxu0 0.0
    %4048 = vmatpush.msra.mxu0 0.0
    %4049 = vmatpush.msra.mxu0 0.0
    %4050 = vmatpush.msra.mxu0 0.0
    %4051 = vmatpush.msra.mxu0 0.0
    %4052 = vmatpush.msra.mxu0 0.0
    %4053 = vmatpush.msra.mxu0 0.0
    %4054 = vmatpush.msra.mxu0 0.0
    %4055 = vmatpush.msra.mxu0 %v670
    %4056 = vmatpush.msra.mxu0 %v662
    %4057 = vmatpush.msra.mxu0 %v654
    %4058 = vmatpush.msra.mxu0 %v646
    %4059 = vmatpush.msra.mxu0 %v638
    %4060 = vmatpush.msra.mxu0 %v630
    %4061 = vmatpush.msra.mxu0 %v622
    %4062 = vmatpush.msra.mxu0 %v614
    %4063 = vmatmul.f32.gmra.mxu0 %v3925
    %v4064 = vpop.f32.mrf.mxu0
    %v4065 = vadd.f32 0.0, %v4064
    %4066 = vdwg.mxu0
    %4067 = vmatpush.msra.mxu0 0.0
    %4068 = vmatpush.msra.mxu0 0.0
    %4069 = vmatpush.msra.mxu0 0.0
    %4070 = vmatpush.msra.mxu0 0.0
    %4071 = vmatpush.msra.mxu0 0.0
    %4072 = vmatpush.msra.mxu0 0.0
    %4073 = vmatpush.msra.mxu0 0.0
    %4074 = vmatpush.msra.mxu0 0.0
    %4075 = vmatpush.msra.mxu0 %v671
    %4076 = vmatpush.msra.mxu0 %v663
    %4077 = vmatpush.msra.mxu0 %v655
    %4078 = vmatpush.msra.mxu0 %v647
    %4079 = vmatpush.msra.mxu0 %v639
    %4080 = vmatpush.msra.mxu0 %v631
    %4081 = vmatpush.msra.mxu0 %v623
    %4082 = vmatpush.msra.mxu0 %v615
    %4083 = vmatmul.f32.gmra.mxu0 %v3925
    %v4084 = vpop.f32.mrf.mxu0
    %v4085 = vadd.f32 0.0, %v4084
    %4086 = vdwg.mxu0
    %v4087 = vmax.f32 %v3915, %v3945
    %v4088 = vmax.f32 %v3916, %v3965
    %v4089 = vmax.f32 %v3917, %v3985
    %v4090 = vmax.f32 %v3918, %v4005
    %v4091 = vmax.f32 %v3919, %v4025
    %v4092 = vmax.f32 %v3920, %v4045
    %v4093 = vmax.f32 %v3921, %v4065
    %v4094 = vmax.f32 %v3922, %v4085
    %v4095 = vld [vmem:[#allocation10] sm:$0xff]
    %v4097 = vperm.slane %v4095, 0
    %v4098 = vperm.slane %v4095, 1
    %v4099 = vperm.slane %v4095, 2
    %v4100 = vperm.slane %v4095, 3
    %v4101 = vperm.slane %v4095, 4
    %v4102 = vperm.slane %v4095, 5
    %v4103 = vperm.slane %v4095, 6
    %v4104 = vperm.slane %v4095, 7
    %v4113 = vadd.f32 %v4087, %v4097
    %v4114 = vadd.f32 %v4088, %v4098
    %v4115 = vadd.f32 %v4089, %v4099
    %v4116 = vadd.f32 %v4090, %v4100
    %v4117 = vadd.f32 %v4091, %v4101
    %v4118 = vadd.f32 %v4092, %v4102
    %v4119 = vadd.f32 %v4093, %v4103
    %v4120 = vadd.f32 %v4094, %v4104
    %v4121 = vld [vmem:[#allocation12] sm:$0xff]
    %v4122 = vld [vmem:[#allocation12 + $0x8] sm:$0xff]
    %v4123 = vld [vmem:[#allocation12 + $0x10] sm:$0xff]
    %v4124 = vld [vmem:[#allocation12 + $0x18] sm:$0xff]
    %v4125 = vld [vmem:[#allocation12 + $0x20] sm:$0xff]
    %v4126 = vld [vmem:[#allocation12 + $0x28] sm:$0xff]
    %v4127 = vld [vmem:[#allocation12 + $0x30] sm:$0xff]
    %v4128 = vld [vmem:[#allocation12 + $0x38] sm:$0xff]
    %v4129 = vld [vmem:[#allocation12 + $0x40] sm:$0xff]
    %v4130 = vld [vmem:[#allocation12 + $0x48] sm:$0xff]
    %v4131 = vld [vmem:[#allocation12 + $0x50] sm:$0xff]
    %v4132 = vld [vmem:[#allocation12 + $0x58] sm:$0xff]
    %v4133 = vld [vmem:[#allocation12 + $0x60] sm:$0xff]
    %v4134 = vld [vmem:[#allocation12 + $0x68] sm:$0xff]
    %v4135 = vld [vmem:[#allocation12 + $0x70] sm:$0xff]
    %v4136 = vld [vmem:[#allocation12 + $0x78] sm:$0xff]
    %v4137 = vld [vmem:[#allocation12 + $0x80] sm:$0xff]
    %v4138 = vld [vmem:[#allocation12 + $0x88] sm:$0xff]
    %v4139 = vld [vmem:[#allocation12 + $0x90] sm:$0xff]
    %v4140 = vld [vmem:[#allocation12 + $0x98] sm:$0xff]
    %v4141 = vld [vmem:[#allocation12 + $0xa0] sm:$0xff]
    %v4142 = vld [vmem:[#allocation12 + $0xa8] sm:$0xff]
    %v4143 = vld [vmem:[#allocation12 + $0xb0] sm:$0xff]
    %v4144 = vld [vmem:[#allocation12 + $0xb8] sm:$0xff]
    %v4145 = vld [vmem:[#allocation12 + $0xc0] sm:$0xff]
    %v4146 = vld [vmem:[#allocation12 + $0xc8] sm:$0xff]
    %v4147 = vld [vmem:[#allocation12 + $0xd0] sm:$0xff]
    %v4148 = vld [vmem:[#allocation12 + $0xd8] sm:$0xff]
    %v4149 = vld [vmem:[#allocation12 + $0xe0] sm:$0xff]
    %v4150 = vld [vmem:[#allocation12 + $0xe8] sm:$0xff]
    %v4151 = vld [vmem:[#allocation12 + $0xf0] sm:$0xff]
    %v4152 = vld [vmem:[#allocation12 + $0xf8] sm:$0xff]
    %v4153 = vld [vmem:[#allocation12 + $0x100] sm:$0xff]
    %v4154 = vld [vmem:[#allocation12 + $0x108] sm:$0xff]
    %v4155 = vld [vmem:[#allocation12 + $0x110] sm:$0xff]
    %v4156 = vld [vmem:[#allocation12 + $0x118] sm:$0xff]
    %v4157 = vld [vmem:[#allocation12 + $0x120] sm:$0xff]
    %v4158 = vld [vmem:[#allocation12 + $0x128] sm:$0xff]
    %v4159 = vld [vmem:[#allocation12 + $0x130] sm:$0xff]
    %v4160 = vld [vmem:[#allocation12 + $0x138] sm:$0xff]
    %v4161 = vld [vmem:[#allocation12 + $0x140] sm:$0xff]
    %v4162 = vld [vmem:[#allocation12 + $0x148] sm:$0xff]
    %v4163 = vld [vmem:[#allocation12 + $0x150] sm:$0xff]
    %v4164 = vld [vmem:[#allocation12 + $0x158] sm:$0xff]
    %v4165 = vld [vmem:[#allocation12 + $0x160] sm:$0xff]
    %v4166 = vld [vmem:[#allocation12 + $0x168] sm:$0xff]
    %v4167 = vld [vmem:[#allocation12 + $0x170] sm:$0xff]
    %v4168 = vld [vmem:[#allocation12 + $0x178] sm:$0xff]
    %v4169 = vld [vmem:[#allocation12 + $0x180] sm:$0xff]
    %v4170 = vld [vmem:[#allocation12 + $0x188] sm:$0xff]
    %v4171 = vld [vmem:[#allocation12 + $0x190] sm:$0xff]
    %v4172 = vld [vmem:[#allocation12 + $0x198] sm:$0xff]
    %v4173 = vld [vmem:[#allocation12 + $0x1a0] sm:$0xff]
    %v4174 = vld [vmem:[#allocation12 + $0x1a8] sm:$0xff]
    %v4175 = vld [vmem:[#allocation12 + $0x1b0] sm:$0xff]
    %v4176 = vld [vmem:[#allocation12 + $0x1b8] sm:$0xff]
    %v4177 = vld [vmem:[#allocation12 + $0x1c0] sm:$0xff]
    %v4178 = vld [vmem:[#allocation12 + $0x1c8] sm:$0xff]
    %v4179 = vld [vmem:[#allocation12 + $0x1d0] sm:$0xff]
    %v4180 = vld [vmem:[#allocation12 + $0x1d8] sm:$0xff]
    %v4181 = vld [vmem:[#allocation12 + $0x1e0] sm:$0xff]
    %v4182 = vld [vmem:[#allocation12 + $0x1e8] sm:$0xff]
    %v4183 = vld [vmem:[#allocation12 + $0x1f0] sm:$0xff]
    %v4184 = vld [vmem:[#allocation12 + $0x1f8] sm:$0xff]
    %v4185 = vld [vmem:[#allocation12 + $0x200] sm:$0xff]
    %v4186 = vld [vmem:[#allocation12 + $0x208] sm:$0xff]
    %v4187 = vld [vmem:[#allocation12 + $0x210] sm:$0xff]
    %v4188 = vld [vmem:[#allocation12 + $0x218] sm:$0xff]
    %v4189 = vld [vmem:[#allocation12 + $0x220] sm:$0xff]
    %v4190 = vld [vmem:[#allocation12 + $0x228] sm:$0xff]
    %v4191 = vld [vmem:[#allocation12 + $0x230] sm:$0xff]
    %v4192 = vld [vmem:[#allocation12 + $0x238] sm:$0xff]
    %v4193 = vld [vmem:[#allocation12 + $0x240] sm:$0xff]
    %v4194 = vld [vmem:[#allocation12 + $0x248] sm:$0xff]
    %v4195 = vld [vmem:[#allocation12 + $0x250] sm:$0xff]
    %v4196 = vld [vmem:[#allocation12 + $0x258] sm:$0xff]
    %v4197 = vld [vmem:[#allocation12 + $0x260] sm:$0xff]
    %v4198 = vld [vmem:[#allocation12 + $0x268] sm:$0xff]
    %v4199 = vld [vmem:[#allocation12 + $0x270] sm:$0xff]
    %v4200 = vld [vmem:[#allocation12 + $0x278] sm:$0xff]
    %v4201 = vld [vmem:[#allocation12 + $0x280] sm:$0xff]
    %v4202 = vld [vmem:[#allocation12 + $0x288] sm:$0xff]
    %v4203 = vld [vmem:[#allocation12 + $0x290] sm:$0xff]
    %v4204 = vld [vmem:[#allocation12 + $0x298] sm:$0xff]
    %v4205 = vld [vmem:[#allocation12 + $0x2a0] sm:$0xff]
    %v4206 = vld [vmem:[#allocation12 + $0x2a8] sm:$0xff]
    %v4207 = vld [vmem:[#allocation12 + $0x2b0] sm:$0xff]
    %v4208 = vld [vmem:[#allocation12 + $0x2b8] sm:$0xff]
    %v4209 = vld [vmem:[#allocation12 + $0x2c0] sm:$0xff]
    %v4210 = vld [vmem:[#allocation12 + $0x2c8] sm:$0xff]
    %v4211 = vld [vmem:[#allocation12 + $0x2d0] sm:$0xff]
    %v4212 = vld [vmem:[#allocation12 + $0x2d8] sm:$0xff]
    %v4213 = vld [vmem:[#allocation12 + $0x2e0] sm:$0xff]
    %v4214 = vld [vmem:[#allocation12 + $0x2e8] sm:$0xff]
    %v4215 = vld [vmem:[#allocation12 + $0x2f0] sm:$0xff]
    %v4216 = vld [vmem:[#allocation12 + $0x2f8] sm:$0xff]
    %v4217 = vld [vmem:[#allocation12 + $0x300] sm:$0xff]
    %v4218 = vld [vmem:[#allocation12 + $0x308] sm:$0xff]
    %v4219 = vld [vmem:[#allocation12 + $0x310] sm:$0xff]
    %v4220 = vld [vmem:[#allocation12 + $0x318] sm:$0xff]
    %v4221 = vld [vmem:[#allocation12 + $0x320] sm:$0xff]
    %v4222 = vld [vmem:[#allocation12 + $0x328] sm:$0xff]
    %v4223 = vld [vmem:[#allocation12 + $0x330] sm:$0xff]
    %v4224 = vld [vmem:[#allocation12 + $0x338] sm:$0xff]
    %v4225 = vld [vmem:[#allocation12 + $0x340] sm:$0xff]
    %v4226 = vld [vmem:[#allocation12 + $0x348] sm:$0xff]
    %v4227 = vld [vmem:[#allocation12 + $0x350] sm:$0xff]
    %v4228 = vld [vmem:[#allocation12 + $0x358] sm:$0xff]
    %v4229 = vld [vmem:[#allocation12 + $0x360] sm:$0xff]
    %v4230 = vld [vmem:[#allocation12 + $0x368] sm:$0xff]
    %v4231 = vld [vmem:[#allocation12 + $0x370] sm:$0xff]
    %v4232 = vld [vmem:[#allocation12 + $0x378] sm:$0xff]
    %v4233 = vld [vmem:[#allocation12 + $0x380] sm:$0xff]
    %v4234 = vld [vmem:[#allocation12 + $0x388] sm:$0xff]
    %v4235 = vld [vmem:[#allocation12 + $0x390] sm:$0xff]
    %v4236 = vld [vmem:[#allocation12 + $0x398] sm:$0xff]
    %v4237 = vld [vmem:[#allocation12 + $0x3a0] sm:$0xff]
    %v4238 = vld [vmem:[#allocation12 + $0x3a8] sm:$0xff]
    %v4239 = vld [vmem:[#allocation12 + $0x3b0] sm:$0xff]
    %v4240 = vld [vmem:[#allocation12 + $0x3b8] sm:$0xff]
    %v4241 = vld [vmem:[#allocation12 + $0x3c0] sm:$0xff]
    %v4242 = vld [vmem:[#allocation12 + $0x3c8] sm:$0xff]
    %v4243 = vld [vmem:[#allocation12 + $0x3d0] sm:$0xff]
    %v4244 = vld [vmem:[#allocation12 + $0x3d8] sm:$0xff]
    %v4245 = vld [vmem:[#allocation12 + $0x3e0] sm:$0xff]
    %v4246 = vld [vmem:[#allocation12 + $0x3e8] sm:$0xff]
    %v4247 = vld [vmem:[#allocation12 + $0x3f0] sm:$0xff]
    %v4248 = vld [vmem:[#allocation12 + $0x3f8] sm:$0xff]
    %v4249 = vld [vmem:[#allocation12 + $0x400] sm:$0xff]
    %v4250 = vld [vmem:[#allocation12 + $0x408] sm:$0xff]
    %v4251 = vld [vmem:[#allocation12 + $0x410] sm:$0xff]
    %v4252 = vld [vmem:[#allocation12 + $0x418] sm:$0xff]
    %v4253 = vld [vmem:[#allocation12 + $0x420] sm:$0xff]
    %v4254 = vld [vmem:[#allocation12 + $0x428] sm:$0xff]
    %v4255 = vld [vmem:[#allocation12 + $0x430] sm:$0xff]
    %v4256 = vld [vmem:[#allocation12 + $0x438] sm:$0xff]
    %v4257 = vld [vmem:[#allocation12 + $0x440] sm:$0xff]
    %v4258 = vld [vmem:[#allocation12 + $0x448] sm:$0xff]
    %v4259 = vld [vmem:[#allocation12 + $0x450] sm:$0xff]
    %v4260 = vld [vmem:[#allocation12 + $0x458] sm:$0xff]
    %v4261 = vld [vmem:[#allocation12 + $0x460] sm:$0xff]
    %v4262 = vld [vmem:[#allocation12 + $0x468] sm:$0xff]
    %v4263 = vld [vmem:[#allocation12 + $0x470] sm:$0xff]
    %v4264 = vld [vmem:[#allocation12 + $0x478] sm:$0xff]
    %v4265 = vld [vmem:[#allocation12 + $0x480] sm:$0xff]
    %v4266 = vld [vmem:[#allocation12 + $0x488] sm:$0xff]
    %v4267 = vld [vmem:[#allocation12 + $0x490] sm:$0xff]
    %v4268 = vld [vmem:[#allocation12 + $0x498] sm:$0xff]
    %v4269 = vld [vmem:[#allocation12 + $0x4a0] sm:$0xff]
    %v4270 = vld [vmem:[#allocation12 + $0x4a8] sm:$0xff]
    %v4271 = vld [vmem:[#allocation12 + $0x4b0] sm:$0xff]
    %v4272 = vld [vmem:[#allocation12 + $0x4b8] sm:$0xff]
    %v4273 = vld [vmem:[#allocation12 + $0x4c0] sm:$0xff]
    %v4274 = vld [vmem:[#allocation12 + $0x4c8] sm:$0xff]
    %v4275 = vld [vmem:[#allocation12 + $0x4d0] sm:$0xff]
    %v4276 = vld [vmem:[#allocation12 + $0x4d8] sm:$0xff]
    %v4277 = vld [vmem:[#allocation12 + $0x4e0] sm:$0xff]
    %v4278 = vld [vmem:[#allocation12 + $0x4e8] sm:$0xff]
    %v4279 = vld [vmem:[#allocation12 + $0x4f0] sm:$0xff]
    %v4280 = vld [vmem:[#allocation12 + $0x4f8] sm:$0xff]
    %v4281 = vld [vmem:[#allocation12 + $0x500] sm:$0xff]
    %v4282 = vld [vmem:[#allocation12 + $0x508] sm:$0xff]
    %v4283 = vld [vmem:[#allocation12 + $0x510] sm:$0xff]
    %v4284 = vld [vmem:[#allocation12 + $0x518] sm:$0xff]
    %v4285 = vld [vmem:[#allocation12 + $0x520] sm:$0xff]
    %v4286 = vld [vmem:[#allocation12 + $0x528] sm:$0xff]
    %v4287 = vld [vmem:[#allocation12 + $0x530] sm:$0xff]
    %v4288 = vld [vmem:[#allocation12 + $0x538] sm:$0xff]
    %v4289 = vld [vmem:[#allocation12 + $0x540] sm:$0xff]
    %v4290 = vld [vmem:[#allocation12 + $0x548] sm:$0xff]
    %v4291 = vld [vmem:[#allocation12 + $0x550] sm:$0xff]
    %v4292 = vld [vmem:[#allocation12 + $0x558] sm:$0xff]
    %v4293 = vld [vmem:[#allocation12 + $0x560] sm:$0xff]
    %v4294 = vld [vmem:[#allocation12 + $0x568] sm:$0xff]
    %v4295 = vld [vmem:[#allocation12 + $0x570] sm:$0xff]
    %v4296 = vld [vmem:[#allocation12 + $0x578] sm:$0xff]
    %v4297 = vld [vmem:[#allocation12 + $0x580] sm:$0xff]
    %v4298 = vld [vmem:[#allocation12 + $0x588] sm:$0xff]
    %v4299 = vld [vmem:[#allocation12 + $0x590] sm:$0xff]
    %v4300 = vld [vmem:[#allocation12 + $0x598] sm:$0xff]
    %v4301 = vld [vmem:[#allocation12 + $0x5a0] sm:$0xff]
    %v4302 = vld [vmem:[#allocation12 + $0x5a8] sm:$0xff]
    %v4303 = vld [vmem:[#allocation12 + $0x5b0] sm:$0xff]
    %v4304 = vld [vmem:[#allocation12 + $0x5b8] sm:$0xff]
    %v4305 = vld [vmem:[#allocation12 + $0x5c0] sm:$0xff]
    %v4306 = vld [vmem:[#allocation12 + $0x5c8] sm:$0xff]
    %v4307 = vld [vmem:[#allocation12 + $0x5d0] sm:$0xff]
    %v4308 = vld [vmem:[#allocation12 + $0x5d8] sm:$0xff]
    %v4309 = vld [vmem:[#allocation12 + $0x5e0] sm:$0xff]
    %v4310 = vld [vmem:[#allocation12 + $0x5e8] sm:$0xff]
    %v4311 = vld [vmem:[#allocation12 + $0x5f0] sm:$0xff]
    %v4312 = vld [vmem:[#allocation12 + $0x5f8] sm:$0xff]
    %v4313 = vld [vmem:[#allocation12 + $0x600] sm:$0xff]
    %v4314 = vld [vmem:[#allocation12 + $0x608] sm:$0xff]
    %v4315 = vld [vmem:[#allocation12 + $0x610] sm:$0xff]
    %v4316 = vld [vmem:[#allocation12 + $0x618] sm:$0xff]
    %v4317 = vld [vmem:[#allocation12 + $0x620] sm:$0xff]
    %v4318 = vld [vmem:[#allocation12 + $0x628] sm:$0xff]
    %v4319 = vld [vmem:[#allocation12 + $0x630] sm:$0xff]
    %v4320 = vld [vmem:[#allocation12 + $0x638] sm:$0xff]
    %v4321 = vld [vmem:[#allocation12 + $0x640] sm:$0xff]
    %v4322 = vld [vmem:[#allocation12 + $0x648] sm:$0xff]
    %v4323 = vld [vmem:[#allocation12 + $0x650] sm:$0xff]
    %v4324 = vld [vmem:[#allocation12 + $0x658] sm:$0xff]
    %v4325 = vld [vmem:[#allocation12 + $0x660] sm:$0xff]
    %v4326 = vld [vmem:[#allocation12 + $0x668] sm:$0xff]
    %v4327 = vld [vmem:[#allocation12 + $0x670] sm:$0xff]
    %v4328 = vld [vmem:[#allocation12 + $0x678] sm:$0xff]
    %v4329 = vld [vmem:[#allocation12 + $0x680] sm:$0xff]
    %v4330 = vld [vmem:[#allocation12 + $0x688] sm:$0xff]
    %v4331 = vld [vmem:[#allocation12 + $0x690] sm:$0xff]
    %v4332 = vld [vmem:[#allocation12 + $0x698] sm:$0xff]
    %v4333 = vld [vmem:[#allocation12 + $0x6a0] sm:$0xff]
    %v4334 = vld [vmem:[#allocation12 + $0x6a8] sm:$0xff]
    %v4335 = vld [vmem:[#allocation12 + $0x6b0] sm:$0xff]
    %v4336 = vld [vmem:[#allocation12 + $0x6b8] sm:$0xff]
    %v4337 = vld [vmem:[#allocation12 + $0x6c0] sm:$0xff]
    %v4338 = vld [vmem:[#allocation12 + $0x6c8] sm:$0xff]
    %v4339 = vld [vmem:[#allocation12 + $0x6d0] sm:$0xff]
    %v4340 = vld [vmem:[#allocation12 + $0x6d8] sm:$0xff]
    %v4341 = vld [vmem:[#allocation12 + $0x6e0] sm:$0xff]
    %v4342 = vld [vmem:[#allocation12 + $0x6e8] sm:$0xff]
    %v4343 = vld [vmem:[#allocation12 + $0x6f0] sm:$0xff]
    %v4344 = vld [vmem:[#allocation12 + $0x6f8] sm:$0xff]
    %v4345 = vld [vmem:[#allocation12 + $0x700] sm:$0xff]
    %v4346 = vld [vmem:[#allocation12 + $0x708] sm:$0xff]
    %v4347 = vld [vmem:[#allocation12 + $0x710] sm:$0xff]
    %v4348 = vld [vmem:[#allocation12 + $0x718] sm:$0xff]
    %v4349 = vld [vmem:[#allocation12 + $0x720] sm:$0xff]
    %v4350 = vld [vmem:[#allocation12 + $0x728] sm:$0xff]
    %v4351 = vld [vmem:[#allocation12 + $0x730] sm:$0xff]
    %v4352 = vld [vmem:[#allocation12 + $0x738] sm:$0xff]
    %v4353 = vld [vmem:[#allocation12 + $0x740] sm:$0xff]
    %v4354 = vld [vmem:[#allocation12 + $0x748] sm:$0xff]
    %v4355 = vld [vmem:[#allocation12 + $0x750] sm:$0xff]
    %v4356 = vld [vmem:[#allocation12 + $0x758] sm:$0xff]
    %v4357 = vld [vmem:[#allocation12 + $0x760] sm:$0xff]
    %v4358 = vld [vmem:[#allocation12 + $0x768] sm:$0xff]
    %v4359 = vld [vmem:[#allocation12 + $0x770] sm:$0xff]
    %v4360 = vld [vmem:[#allocation12 + $0x778] sm:$0xff]
    %v4361 = vld [vmem:[#allocation12 + $0x780] sm:$0xff]
    %v4362 = vld [vmem:[#allocation12 + $0x788] sm:$0xff]
    %v4363 = vld [vmem:[#allocation12 + $0x790] sm:$0xff]
    %v4364 = vld [vmem:[#allocation12 + $0x798] sm:$0xff]
    %v4365 = vld [vmem:[#allocation12 + $0x7a0] sm:$0xff]
    %v4366 = vld [vmem:[#allocation12 + $0x7a8] sm:$0xff]
    %v4367 = vld [vmem:[#allocation12 + $0x7b0] sm:$0xff]
    %v4368 = vld [vmem:[#allocation12 + $0x7b8] sm:$0xff]
    %v4369 = vld [vmem:[#allocation12 + $0x7c0] sm:$0xff]
    %v4370 = vld [vmem:[#allocation12 + $0x7c8] sm:$0xff]
    %v4371 = vld [vmem:[#allocation12 + $0x7d0] sm:$0xff]
    %v4372 = vld [vmem:[#allocation12 + $0x7d8] sm:$0xff]
    %v4373 = vld [vmem:[#allocation12 + $0x7e0] sm:$0xff]
    %v4374 = vld [vmem:[#allocation12 + $0x7e8] sm:$0xff]
    %v4375 = vld [vmem:[#allocation12 + $0x7f0] sm:$0xff]
    %v4376 = vld [vmem:[#allocation12 + $0x7f8] sm:$0xff]
    %v4377 = vld [vmem:[#allocation12 + $0x800] sm:$0xff]
    %v4378 = vld [vmem:[#allocation12 + $0x808] sm:$0xff]
    %v4379 = vld [vmem:[#allocation12 + $0x810] sm:$0xff]
    %v4380 = vld [vmem:[#allocation12 + $0x818] sm:$0xff]
    %v4381 = vld [vmem:[#allocation12 + $0x820] sm:$0xff]
    %v4382 = vld [vmem:[#allocation12 + $0x828] sm:$0xff]
    %v4383 = vld [vmem:[#allocation12 + $0x830] sm:$0xff]
    %v4384 = vld [vmem:[#allocation12 + $0x838] sm:$0xff]
    %v4385 = vld [vmem:[#allocation12 + $0x840] sm:$0xff]
    %v4386 = vld [vmem:[#allocation12 + $0x848] sm:$0xff]
    %v4387 = vld [vmem:[#allocation12 + $0x850] sm:$0xff]
    %v4388 = vld [vmem:[#allocation12 + $0x858] sm:$0xff]
    %v4389 = vld [vmem:[#allocation12 + $0x860] sm:$0xff]
    %v4390 = vld [vmem:[#allocation12 + $0x868] sm:$0xff]
    %v4391 = vld [vmem:[#allocation12 + $0x870] sm:$0xff]
    %v4392 = vld [vmem:[#allocation12 + $0x878] sm:$0xff]
    %v4393 = vld [vmem:[#allocation12 + $0x880] sm:$0xff]
    %v4394 = vld [vmem:[#allocation12 + $0x888] sm:$0xff]
    %v4395 = vld [vmem:[#allocation12 + $0x890] sm:$0xff]
    %v4396 = vld [vmem:[#allocation12 + $0x898] sm:$0xff]
    %v4397 = vld [vmem:[#allocation12 + $0x8a0] sm:$0xff]
    %v4398 = vld [vmem:[#allocation12 + $0x8a8] sm:$0xff]
    %v4399 = vld [vmem:[#allocation12 + $0x8b0] sm:$0xff]
    %v4400 = vld [vmem:[#allocation12 + $0x8b8] sm:$0xff]
    %v4401 = vld [vmem:[#allocation12 + $0x8c0] sm:$0xff]
    %v4402 = vld [vmem:[#allocation12 + $0x8c8] sm:$0xff]
    %v4403 = vld [vmem:[#allocation12 + $0x8d0] sm:$0xff]
    %v4404 = vld [vmem:[#allocation12 + $0x8d8] sm:$0xff]
    %v4405 = vld [vmem:[#allocation12 + $0x8e0] sm:$0xff]
    %v4406 = vld [vmem:[#allocation12 + $0x8e8] sm:$0xff]
    %v4407 = vld [vmem:[#allocation12 + $0x8f0] sm:$0xff]
    %v4408 = vld [vmem:[#allocation12 + $0x8f8] sm:$0xff]
    %v4409 = vld [vmem:[#allocation12 + $0x900] sm:$0xff]
    %v4410 = vld [vmem:[#allocation12 + $0x908] sm:$0xff]
    %v4411 = vld [vmem:[#allocation12 + $0x910] sm:$0xff]
    %v4412 = vld [vmem:[#allocation12 + $0x918] sm:$0xff]
    %v4413 = vld [vmem:[#allocation12 + $0x920] sm:$0xff]
    %v4414 = vld [vmem:[#allocation12 + $0x928] sm:$0xff]
    %v4415 = vld [vmem:[#allocation12 + $0x930] sm:$0xff]
    %v4416 = vld [vmem:[#allocation12 + $0x938] sm:$0xff]
    %v4417 = vld [vmem:[#allocation12 + $0x940] sm:$0xff]
    %v4418 = vld [vmem:[#allocation12 + $0x948] sm:$0xff]
    %v4419 = vld [vmem:[#allocation12 + $0x950] sm:$0xff]
    %v4420 = vld [vmem:[#allocation12 + $0x958] sm:$0xff]
    %v4421 = vld [vmem:[#allocation12 + $0x960] sm:$0xff]
    %v4422 = vld [vmem:[#allocation12 + $0x968] sm:$0xff]
    %v4423 = vld [vmem:[#allocation12 + $0x970] sm:$0xff]
    %v4424 = vld [vmem:[#allocation12 + $0x978] sm:$0xff]
    %v4425 = vld [vmem:[#allocation12 + $0x980] sm:$0xff]
    %v4426 = vld [vmem:[#allocation12 + $0x988] sm:$0xff]
    %v4427 = vld [vmem:[#allocation12 + $0x990] sm:$0xff]
    %v4428 = vld [vmem:[#allocation12 + $0x998] sm:$0xff]
    %v4429 = vld [vmem:[#allocation12 + $0x9a0] sm:$0xff]
    %v4430 = vld [vmem:[#allocation12 + $0x9a8] sm:$0xff]
    %v4431 = vld [vmem:[#allocation12 + $0x9b0] sm:$0xff]
    %v4432 = vld [vmem:[#allocation12 + $0x9b8] sm:$0xff]
    %v4433 = vld [vmem:[#allocation12 + $0x9c0] sm:$0xff]
    %v4434 = vld [vmem:[#allocation12 + $0x9c8] sm:$0xff]
    %v4435 = vld [vmem:[#allocation12 + $0x9d0] sm:$0xff]
    %v4436 = vld [vmem:[#allocation12 + $0x9d8] sm:$0xff]
    %v4437 = vld [vmem:[#allocation12 + $0x9e0] sm:$0xff]
    %v4438 = vld [vmem:[#allocation12 + $0x9e8] sm:$0xff]
    %v4439 = vld [vmem:[#allocation12 + $0x9f0] sm:$0xff]
    %v4440 = vld [vmem:[#allocation12 + $0x9f8] sm:$0xff]
    %v4441 = vld [vmem:[#allocation12 + $0xa00] sm:$0xff]
    %v4442 = vld [vmem:[#allocation12 + $0xa08] sm:$0xff]
    %v4443 = vld [vmem:[#allocation12 + $0xa10] sm:$0xff]
    %v4444 = vld [vmem:[#allocation12 + $0xa18] sm:$0xff]
    %v4445 = vld [vmem:[#allocation12 + $0xa20] sm:$0xff]
    %v4446 = vld [vmem:[#allocation12 + $0xa28] sm:$0xff]
    %v4447 = vld [vmem:[#allocation12 + $0xa30] sm:$0xff]
    %v4448 = vld [vmem:[#allocation12 + $0xa38] sm:$0xff]
    %v4449 = vld [vmem:[#allocation12 + $0xa40] sm:$0xff]
    %v4450 = vld [vmem:[#allocation12 + $0xa48] sm:$0xff]
    %v4451 = vld [vmem:[#allocation12 + $0xa50] sm:$0xff]
    %v4452 = vld [vmem:[#allocation12 + $0xa58] sm:$0xff]
    %v4453 = vld [vmem:[#allocation12 + $0xa60] sm:$0xff]
    %v4454 = vld [vmem:[#allocation12 + $0xa68] sm:$0xff]
    %v4455 = vld [vmem:[#allocation12 + $0xa70] sm:$0xff]
    %v4456 = vld [vmem:[#allocation12 + $0xa78] sm:$0xff]
    %v4457 = vld [vmem:[#allocation12 + $0xa80] sm:$0xff]
    %v4458 = vld [vmem:[#allocation12 + $0xa88] sm:$0xff]
    %v4459 = vld [vmem:[#allocation12 + $0xa90] sm:$0xff]
    %v4460 = vld [vmem:[#allocation12 + $0xa98] sm:$0xff]
    %v4461 = vld [vmem:[#allocation12 + $0xaa0] sm:$0xff]
    %v4462 = vld [vmem:[#allocation12 + $0xaa8] sm:$0xff]
    %v4463 = vld [vmem:[#allocation12 + $0xab0] sm:$0xff]
    %v4464 = vld [vmem:[#allocation12 + $0xab8] sm:$0xff]
    %v4465 = vld [vmem:[#allocation12 + $0xac0] sm:$0xff]
    %v4466 = vld [vmem:[#allocation12 + $0xac8] sm:$0xff]
    %v4467 = vld [vmem:[#allocation12 + $0xad0] sm:$0xff]
    %v4468 = vld [vmem:[#allocation12 + $0xad8] sm:$0xff]
    %v4469 = vld [vmem:[#allocation12 + $0xae0] sm:$0xff]
    %v4470 = vld [vmem:[#allocation12 + $0xae8] sm:$0xff]
    %v4471 = vld [vmem:[#allocation12 + $0xaf0] sm:$0xff]
    %v4472 = vld [vmem:[#allocation12 + $0xaf8] sm:$0xff]
    %v4473 = vld [vmem:[#allocation12 + $0xb00] sm:$0xff]
    %v4474 = vld [vmem:[#allocation12 + $0xb08] sm:$0xff]
    %v4475 = vld [vmem:[#allocation12 + $0xb10] sm:$0xff]
    %v4476 = vld [vmem:[#allocation12 + $0xb18] sm:$0xff]
    %v4477 = vld [vmem:[#allocation12 + $0xb20] sm:$0xff]
    %v4478 = vld [vmem:[#allocation12 + $0xb28] sm:$0xff]
    %v4479 = vld [vmem:[#allocation12 + $0xb30] sm:$0xff]
    %v4480 = vld [vmem:[#allocation12 + $0xb38] sm:$0xff]
    %v4481 = vld [vmem:[#allocation12 + $0xb40] sm:$0xff]
    %v4482 = vld [vmem:[#allocation12 + $0xb48] sm:$0xff]
    %v4483 = vld [vmem:[#allocation12 + $0xb50] sm:$0xff]
    %v4484 = vld [vmem:[#allocation12 + $0xb58] sm:$0xff]
    %v4485 = vld [vmem:[#allocation12 + $0xb60] sm:$0xff]
    %v4486 = vld [vmem:[#allocation12 + $0xb68] sm:$0xff]
    %v4487 = vld [vmem:[#allocation12 + $0xb70] sm:$0xff]
    %v4488 = vld [vmem:[#allocation12 + $0xb78] sm:$0xff]
    %v4489 = vld [vmem:[#allocation12 + $0xb80] sm:$0xff]
    %v4490 = vld [vmem:[#allocation12 + $0xb88] sm:$0xff]
    %v4491 = vld [vmem:[#allocation12 + $0xb90] sm:$0xff]
    %v4492 = vld [vmem:[#allocation12 + $0xb98] sm:$0xff]
    %v4493 = vld [vmem:[#allocation12 + $0xba0] sm:$0xff]
    %v4494 = vld [vmem:[#allocation12 + $0xba8] sm:$0xff]
    %v4495 = vld [vmem:[#allocation12 + $0xbb0] sm:$0xff]
    %v4496 = vld [vmem:[#allocation12 + $0xbb8] sm:$0xff]
    %v4497 = vld [vmem:[#allocation12 + $0xbc0] sm:$0xff]
    %v4498 = vld [vmem:[#allocation12 + $0xbc8] sm:$0xff]
    %v4499 = vld [vmem:[#allocation12 + $0xbd0] sm:$0xff]
    %v4500 = vld [vmem:[#allocation12 + $0xbd8] sm:$0xff]
    %v4501 = vld [vmem:[#allocation12 + $0xbe0] sm:$0xff]
    %v4502 = vld [vmem:[#allocation12 + $0xbe8] sm:$0xff]
    %v4503 = vld [vmem:[#allocation12 + $0xbf0] sm:$0xff]
    %v4504 = vld [vmem:[#allocation12 + $0xbf8] sm:$0xff]
    %v4505 = vld [vmem:[#allocation12 + $0xc00] sm:$0xff]
    %v4506 = vld [vmem:[#allocation12 + $0xc08] sm:$0xff]
    %v4507 = vld [vmem:[#allocation12 + $0xc10] sm:$0xff]
    %v4508 = vld [vmem:[#allocation12 + $0xc18] sm:$0xff]
    %v4509 = vld [vmem:[#allocation12 + $0xc20] sm:$0xff]
    %v4510 = vld [vmem:[#allocation12 + $0xc28] sm:$0xff]
    %v4511 = vld [vmem:[#allocation12 + $0xc30] sm:$0xff]
    %v4512 = vld [vmem:[#allocation12 + $0xc38] sm:$0xff]
    %v4513 = vld [vmem:[#allocation12 + $0xc40] sm:$0xff]
    %v4514 = vld [vmem:[#allocation12 + $0xc48] sm:$0xff]
    %v4515 = vld [vmem:[#allocation12 + $0xc50] sm:$0xff]
    %v4516 = vld [vmem:[#allocation12 + $0xc58] sm:$0xff]
    %v4517 = vld [vmem:[#allocation12 + $0xc60] sm:$0xff]
    %v4518 = vld [vmem:[#allocation12 + $0xc68] sm:$0xff]
    %v4519 = vld [vmem:[#allocation12 + $0xc70] sm:$0xff]
    %v4520 = vld [vmem:[#allocation12 + $0xc78] sm:$0xff]
    %v4521 = vld [vmem:[#allocation12 + $0xc80] sm:$0xff]
    %v4522 = vld [vmem:[#allocation12 + $0xc88] sm:$0xff]
    %v4523 = vld [vmem:[#allocation12 + $0xc90] sm:$0xff]
    %v4524 = vld [vmem:[#allocation12 + $0xc98] sm:$0xff]
    %v4525 = vld [vmem:[#allocation12 + $0xca0] sm:$0xff]
    %v4526 = vld [vmem:[#allocation12 + $0xca8] sm:$0xff]
    %v4527 = vld [vmem:[#allocation12 + $0xcb0] sm:$0xff]
    %v4528 = vld [vmem:[#allocation12 + $0xcb8] sm:$0xff]
    %v4529 = vld [vmem:[#allocation12 + $0xcc0] sm:$0xff]
    %v4530 = vld [vmem:[#allocation12 + $0xcc8] sm:$0xff]
    %v4531 = vld [vmem:[#allocation12 + $0xcd0] sm:$0xff]
    %v4532 = vld [vmem:[#allocation12 + $0xcd8] sm:$0xff]
    %v4533 = vld [vmem:[#allocation12 + $0xce0] sm:$0xff]
    %v4534 = vld [vmem:[#allocation12 + $0xce8] sm:$0xff]
    %v4535 = vld [vmem:[#allocation12 + $0xcf0] sm:$0xff]
    %v4536 = vld [vmem:[#allocation12 + $0xcf8] sm:$0xff]
    %v4537 = vld [vmem:[#allocation12 + $0xd00] sm:$0xff]
    %v4538 = vld [vmem:[#allocation12 + $0xd08] sm:$0xff]
    %v4539 = vld [vmem:[#allocation12 + $0xd10] sm:$0xff]
    %v4540 = vld [vmem:[#allocation12 + $0xd18] sm:$0xff]
    %v4541 = vld [vmem:[#allocation12 + $0xd20] sm:$0xff]
    %v4542 = vld [vmem:[#allocation12 + $0xd28] sm:$0xff]
    %v4543 = vld [vmem:[#allocation12 + $0xd30] sm:$0xff]
    %v4544 = vld [vmem:[#allocation12 + $0xd38] sm:$0xff]
    %v4545 = vld [vmem:[#allocation12 + $0xd40] sm:$0xff]
    %v4546 = vld [vmem:[#allocation12 + $0xd48] sm:$0xff]
    %v4547 = vld [vmem:[#allocation12 + $0xd50] sm:$0xff]
    %v4548 = vld [vmem:[#allocation12 + $0xd58] sm:$0xff]
    %v4549 = vld [vmem:[#allocation12 + $0xd60] sm:$0xff]
    %v4550 = vld [vmem:[#allocation12 + $0xd68] sm:$0xff]
    %v4551 = vld [vmem:[#allocation12 + $0xd70] sm:$0xff]
    %v4552 = vld [vmem:[#allocation12 + $0xd78] sm:$0xff]
    %v4553 = vld [vmem:[#allocation12 + $0xd80] sm:$0xff]
    %v4554 = vld [vmem:[#allocation12 + $0xd88] sm:$0xff]
    %v4555 = vld [vmem:[#allocation12 + $0xd90] sm:$0xff]
    %v4556 = vld [vmem:[#allocation12 + $0xd98] sm:$0xff]
    %v4557 = vld [vmem:[#allocation12 + $0xda0] sm:$0xff]
    %v4558 = vld [vmem:[#allocation12 + $0xda8] sm:$0xff]
    %v4559 = vld [vmem:[#allocation12 + $0xdb0] sm:$0xff]
    %v4560 = vld [vmem:[#allocation12 + $0xdb8] sm:$0xff]
    %v4561 = vld [vmem:[#allocation12 + $0xdc0] sm:$0xff]
    %v4562 = vld [vmem:[#allocation12 + $0xdc8] sm:$0xff]
    %v4563 = vld [vmem:[#allocation12 + $0xdd0] sm:$0xff]
    %v4564 = vld [vmem:[#allocation12 + $0xdd8] sm:$0xff]
    %v4565 = vld [vmem:[#allocation12 + $0xde0] sm:$0xff]
    %v4566 = vld [vmem:[#allocation12 + $0xde8] sm:$0xff]
    %v4567 = vld [vmem:[#allocation12 + $0xdf0] sm:$0xff]
    %v4568 = vld [vmem:[#allocation12 + $0xdf8] sm:$0xff]
    %v4569 = vld [vmem:[#allocation12 + $0xe00] sm:$0xff]
    %v4570 = vld [vmem:[#allocation12 + $0xe08] sm:$0xff]
    %v4571 = vld [vmem:[#allocation12 + $0xe10] sm:$0xff]
    %v4572 = vld [vmem:[#allocation12 + $0xe18] sm:$0xff]
    %v4573 = vld [vmem:[#allocation12 + $0xe20] sm:$0xff]
    %v4574 = vld [vmem:[#allocation12 + $0xe28] sm:$0xff]
    %v4575 = vld [vmem:[#allocation12 + $0xe30] sm:$0xff]
    %v4576 = vld [vmem:[#allocation12 + $0xe38] sm:$0xff]
    %v4577 = vld [vmem:[#allocation12 + $0xe40] sm:$0xff]
    %v4578 = vld [vmem:[#allocation12 + $0xe48] sm:$0xff]
    %v4579 = vld [vmem:[#allocation12 + $0xe50] sm:$0xff]
    %v4580 = vld [vmem:[#allocation12 + $0xe58] sm:$0xff]
    %v4581 = vld [vmem:[#allocation12 + $0xe60] sm:$0xff]
    %v4582 = vld [vmem:[#allocation12 + $0xe68] sm:$0xff]
    %v4583 = vld [vmem:[#allocation12 + $0xe70] sm:$0xff]
    %v4584 = vld [vmem:[#allocation12 + $0xe78] sm:$0xff]
    %v4585 = vld [vmem:[#allocation12 + $0xe80] sm:$0xff]
    %v4586 = vld [vmem:[#allocation12 + $0xe88] sm:$0xff]
    %v4587 = vld [vmem:[#allocation12 + $0xe90] sm:$0xff]
    %v4588 = vld [vmem:[#allocation12 + $0xe98] sm:$0xff]
    %v4589 = vld [vmem:[#allocation12 + $0xea0] sm:$0xff]
    %v4590 = vld [vmem:[#allocation12 + $0xea8] sm:$0xff]
    %v4591 = vld [vmem:[#allocation12 + $0xeb0] sm:$0xff]
    %v4592 = vld [vmem:[#allocation12 + $0xeb8] sm:$0xff]
    %v4593 = vld [vmem:[#allocation12 + $0xec0] sm:$0xff]
    %v4594 = vld [vmem:[#allocation12 + $0xec8] sm:$0xff]
    %v4595 = vld [vmem:[#allocation12 + $0xed0] sm:$0xff]
    %v4596 = vld [vmem:[#allocation12 + $0xed8] sm:$0xff]
    %v4597 = vld [vmem:[#allocation12 + $0xee0] sm:$0xff]
    %v4598 = vld [vmem:[#allocation12 + $0xee8] sm:$0xff]
    %v4599 = vld [vmem:[#allocation12 + $0xef0] sm:$0xff]
    %v4600 = vld [vmem:[#allocation12 + $0xef8] sm:$0xff]
    %v4601 = vld [vmem:[#allocation12 + $0xf00] sm:$0xff]
    %v4602 = vld [vmem:[#allocation12 + $0xf08] sm:$0xff]
    %v4603 = vld [vmem:[#allocation12 + $0xf10] sm:$0xff]
    %v4604 = vld [vmem:[#allocation12 + $0xf18] sm:$0xff]
    %v4605 = vld [vmem:[#allocation12 + $0xf20] sm:$0xff]
    %v4606 = vld [vmem:[#allocation12 + $0xf28] sm:$0xff]
    %v4607 = vld [vmem:[#allocation12 + $0xf30] sm:$0xff]
    %v4608 = vld [vmem:[#allocation12 + $0xf38] sm:$0xff]
    %v4609 = vld [vmem:[#allocation12 + $0xf40] sm:$0xff]
    %v4610 = vld [vmem:[#allocation12 + $0xf48] sm:$0xff]
    %v4611 = vld [vmem:[#allocation12 + $0xf50] sm:$0xff]
    %v4612 = vld [vmem:[#allocation12 + $0xf58] sm:$0xff]
    %v4613 = vld [vmem:[#allocation12 + $0xf60] sm:$0xff]
    %v4614 = vld [vmem:[#allocation12 + $0xf68] sm:$0xff]
    %v4615 = vld [vmem:[#allocation12 + $0xf70] sm:$0xff]
    %v4616 = vld [vmem:[#allocation12 + $0xf78] sm:$0xff]
    %v4617 = vld [vmem:[#allocation12 + $0xf80] sm:$0xff]
    %v4618 = vld [vmem:[#allocation12 + $0xf88] sm:$0xff]
    %v4619 = vld [vmem:[#allocation12 + $0xf90] sm:$0xff]
    %v4620 = vld [vmem:[#allocation12 + $0xf98] sm:$0xff]
    %v4621 = vld [vmem:[#allocation12 + $0xfa0] sm:$0xff]
    %v4622 = vld [vmem:[#allocation12 + $0xfa8] sm:$0xff]
    %v4623 = vld [vmem:[#allocation12 + $0xfb0] sm:$0xff]
    %v4624 = vld [vmem:[#allocation12 + $0xfb8] sm:$0xff]
    %v4625 = vld [vmem:[#allocation12 + $0xfc0] sm:$0xff]
    %v4626 = vld [vmem:[#allocation12 + $0xfc8] sm:$0xff]
    %v4627 = vld [vmem:[#allocation12 + $0xfd0] sm:$0xff]
    %v4628 = vld [vmem:[#allocation12 + $0xfd8] sm:$0xff]
    %v4629 = vld [vmem:[#allocation12 + $0xfe0] sm:$0xff]
    %v4630 = vld [vmem:[#allocation12 + $0xfe8] sm:$0xff]
    %v4631 = vld [vmem:[#allocation12 + $0xff0] sm:$0xff]
    %v4632 = vld [vmem:[#allocation12 + $0xff8] sm:$0xff]
    %v4633 = vld [vmem:[#allocation13] sm:$0xf]
    %v4635 = vperm.slane %v4633, 0
    %v4636 = vperm.slane %v4633, 1
    %v4637 = vperm.slane %v4633, 2
    %v4638 = vperm.slane %v4633, 3
    %4643 = vmatpush.msra.mxu0 %v4181
    %4644 = vmatpush.msra.mxu0 %v4177
    %4645 = vmatpush.msra.mxu0 %v4173
    %4646 = vmatpush.msra.mxu0 %v4169
    %4647 = vmatpush.msra.mxu0 %v4165
    %4648 = vmatpush.msra.mxu0 %v4161
    %4649 = vmatpush.msra.mxu0 %v4157
    %4650 = vmatpush.msra.mxu0 %v4153
    %4651 = vmatpush.msra.mxu0 %v4149
    %4652 = vmatpush.msra.mxu0 %v4145
    %4653 = vmatpush.msra.mxu0 %v4141
    %4654 = vmatpush.msra.mxu0 %v4137
    %4655 = vmatpush.msra.mxu0 %v4133
    %4656 = vmatpush.msra.mxu0 %v4129
    %4657 = vmatpush.msra.mxu0 %v4125
    %4658 = vmatpush.msra.mxu0 %v4121
    %4659 = vmatmul.f32.gmra.mxu0 %v4113
    %v4660 = vpop.f32.mrf.mxu0
    %v4661 = vadd.f32 %v4635, %v4660
    %4662 = vdwg.mxu0
    %4663 = vmatpush.msra.mxu0 %v4245
    %4664 = vmatpush.msra.mxu0 %v4241
    %4665 = vmatpush.msra.mxu0 %v4237
    %4666 = vmatpush.msra.mxu0 %v4233
    %4667 = vmatpush.msra.mxu0 %v4229
    %4668 = vmatpush.msra.mxu0 %v4225
    %4669 = vmatpush.msra.mxu0 %v4221
    %4670 = vmatpush.msra.mxu0 %v4217
    %4671 = vmatpush.msra.mxu0 %v4213
    %4672 = vmatpush.msra.mxu0 %v4209
    %4673 = vmatpush.msra.mxu0 %v4205
    %4674 = vmatpush.msra.mxu0 %v4201
    %4675 = vmatpush.msra.mxu0 %v4197
    %4676 = vmatpush.msra.mxu0 %v4193
    %4677 = vmatpush.msra.mxu0 %v4189
    %4678 = vmatpush.msra.mxu0 %v4185
    %4679 = vmatmul.f32.gmra.mxu0 %v4114
    %v4680 = vpop.f32.mrf.mxu0
    %v4681 = vadd.f32 %v4661, %v4680
    %4682 = vdwg.mxu0
    %4683 = vmatpush.msra.mxu0 %v4309
    %4684 = vmatpush.msra.mxu0 %v4305
    %4685 = vmatpush.msra.mxu0 %v4301
    %4686 = vmatpush.msra.mxu0 %v4297
    %4687 = vmatpush.msra.mxu0 %v4293
    %4688 = vmatpush.msra.mxu0 %v4289
    %4689 = vmatpush.msra.mxu0 %v4285
    %4690 = vmatpush.msra.mxu0 %v4281
    %4691 = vmatpush.msra.mxu0 %v4277
    %4692 = vmatpush.msra.mxu0 %v4273
    %4693 = vmatpush.msra.mxu0 %v4269
    %4694 = vmatpush.msra.mxu0 %v4265
    %4695 = vmatpush.msra.mxu0 %v4261
    %4696 = vmatpush.msra.mxu0 %v4257
    %4697 = vmatpush.msra.mxu0 %v4253
    %4698 = vmatpush.msra.mxu0 %v4249
    %4699 = vmatmul.f32.gmra.mxu0 %v4115
    %v4700 = vpop.f32.mrf.mxu0
    %v4701 = vadd.f32 %v4681, %v4700
    %4702 = vdwg.mxu0
    %4703 = vmatpush.msra.mxu0 %v4373
    %4704 = vmatpush.msra.mxu0 %v4369
    %4705 = vmatpush.msra.mxu0 %v4365
    %4706 = vmatpush.msra.mxu0 %v4361
    %4707 = vmatpush.msra.mxu0 %v4357
    %4708 = vmatpush.msra.mxu0 %v4353
    %4709 = vmatpush.msra.mxu0 %v4349
    %4710 = vmatpush.msra.mxu0 %v4345
    %4711 = vmatpush.msra.mxu0 %v4341
    %4712 = vmatpush.msra.mxu0 %v4337
    %4713 = vmatpush.msra.mxu0 %v4333
    %4714 = vmatpush.msra.mxu0 %v4329
    %4715 = vmatpush.msra.mxu0 %v4325
    %4716 = vmatpush.msra.mxu0 %v4321
    %4717 = vmatpush.msra.mxu0 %v4317
    %4718 = vmatpush.msra.mxu0 %v4313
    %4719 = vmatmul.f32.gmra.mxu0 %v4116
    %v4720 = vpop.f32.mrf.mxu0
    %v4721 = vadd.f32 %v4701, %v4720
    %4722 = vdwg.mxu0
    %4723 = vmatpush.msra.mxu0 %v4437
    %4724 = vmatpush.msra.mxu0 %v4433
    %4725 = vmatpush.msra.mxu0 %v4429
    %4726 = vmatpush.msra.mxu0 %v4425
    %4727 = vmatpush.msra.mxu0 %v4421
    %4728 = vmatpush.msra.mxu0 %v4417
    %4729 = vmatpush.msra.mxu0 %v4413
    %4730 = vmatpush.msra.mxu0 %v4409
    %4731 = vmatpush.msra.mxu0 %v4405
    %4732 = vmatpush.msra.mxu0 %v4401
    %4733 = vmatpush.msra.mxu0 %v4397
    %4734 = vmatpush.msra.mxu0 %v4393
    %4735 = vmatpush.msra.mxu0 %v4389
    %4736 = vmatpush.msra.mxu0 %v4385
    %4737 = vmatpush.msra.mxu0 %v4381
    %4738 = vmatpush.msra.mxu0 %v4377
    %4739 = vmatmul.f32.gmra.mxu0 %v4117
    %v4740 = vpop.f32.mrf.mxu0
    %v4741 = vadd.f32 %v4721, %v4740
    %4742 = vdwg.mxu0
    %4743 = vmatpush.msra.mxu0 %v4501
    %4744 = vmatpush.msra.mxu0 %v4497
    %4745 = vmatpush.msra.mxu0 %v4493
    %4746 = vmatpush.msra.mxu0 %v4489
    %4747 = vmatpush.msra.mxu0 %v4485
    %4748 = vmatpush.msra.mxu0 %v4481
    %4749 = vmatpush.msra.mxu0 %v4477
    %4750 = vmatpush.msra.mxu0 %v4473
    %4751 = vmatpush.msra.mxu0 %v4469
    %4752 = vmatpush.msra.mxu0 %v4465
    %4753 = vmatpush.msra.mxu0 %v4461
    %4754 = vmatpush.msra.mxu0 %v4457
    %4755 = vmatpush.msra.mxu0 %v4453
    %4756 = vmatpush.msra.mxu0 %v4449
    %4757 = vmatpush.msra.mxu0 %v4445
    %4758 = vmatpush.msra.mxu0 %v4441
    %4759 = vmatmul.f32.gmra.mxu0 %v4118
    %v4760 = vpop.f32.mrf.mxu0
    %v4761 = vadd.f32 %v4741, %v4760
    %4762 = vdwg.mxu0
    %4763 = vmatpush.msra.mxu0 %v4565
    %4764 = vmatpush.msra.mxu0 %v4561
    %4765 = vmatpush.msra.mxu0 %v4557
    %4766 = vmatpush.msra.mxu0 %v4553
    %4767 = vmatpush.msra.mxu0 %v4549
    %4768 = vmatpush.msra.mxu0 %v4545
    %4769 = vmatpush.msra.mxu0 %v4541
    %4770 = vmatpush.msra.mxu0 %v4537
    %4771 = vmatpush.msra.mxu0 %v4533
    %4772 = vmatpush.msra.mxu0 %v4529
    %4773 = vmatpush.msra.mxu0 %v4525
    %4774 = vmatpush.msra.mxu0 %v4521
    %4775 = vmatpush.msra.mxu0 %v4517
    %4776 = vmatpush.msra.mxu0 %v4513
    %4777 = vmatpush.msra.mxu0 %v4509
    %4778 = vmatpush.msra.mxu0 %v4505
    %4779 = vmatmul.f32.gmra.mxu0 %v4119
    %v4780 = vpop.f32.mrf.mxu0
    %v4781 = vadd.f32 %v4761, %v4780
    %4782 = vdwg.mxu0
    %4783 = vmatpush.msra.mxu0 %v4629
    %4784 = vmatpush.msra.mxu0 %v4625
    %4785 = vmatpush.msra.mxu0 %v4621
    %4786 = vmatpush.msra.mxu0 %v4617
    %4787 = vmatpush.msra.mxu0 %v4613
    %4788 = vmatpush.msra.mxu0 %v4609
    %4789 = vmatpush.msra.mxu0 %v4605
    %4790 = vmatpush.msra.mxu0 %v4601
    %4791 = vmatpush.msra.mxu0 %v4597
    %4792 = vmatpush.msra.mxu0 %v4593
    %4793 = vmatpush.msra.mxu0 %v4589
    %4794 = vmatpush.msra.mxu0 %v4585
    %4795 = vmatpush.msra.mxu0 %v4581
    %4796 = vmatpush.msra.mxu0 %v4577
    %4797 = vmatpush.msra.mxu0 %v4573
    %4798 = vmatpush.msra.mxu0 %v4569
    %4799 = vmatmul.f32.gmra.mxu0 %v4120
    %v4800 = vpop.f32.mrf.mxu0
    %v4801 = vadd.f32 %v4781, %v4800
    %4802 = vdwg.mxu0
    %4803 = vmatpush.msra.mxu0 %v4182
    %4804 = vmatpush.msra.mxu0 %v4178
    %4805 = vmatpush.msra.mxu0 %v4174
    %4806 = vmatpush.msra.mxu0 %v4170
    %4807 = vmatpush.msra.mxu0 %v4166
    %4808 = vmatpush.msra.mxu0 %v4162
    %4809 = vmatpush.msra.mxu0 %v4158
    %4810 = vmatpush.msra.mxu0 %v4154
    %4811 = vmatpush.msra.mxu0 %v4150
    %4812 = vmatpush.msra.mxu0 %v4146
    %4813 = vmatpush.msra.mxu0 %v4142
    %4814 = vmatpush.msra.mxu0 %v4138
    %4815 = vmatpush.msra.mxu0 %v4134
    %4816 = vmatpush.msra.mxu0 %v4130
    %4817 = vmatpush.msra.mxu0 %v4126
    %4818 = vmatpush.msra.mxu0 %v4122
    %4819 = vmatmul.f32.gmra.mxu0 %v4113
    %v4820 = vpop.f32.mrf.mxu0
    %v4821 = vadd.f32 %v4636, %v4820
    %4822 = vdwg.mxu0
    %4823 = vmatpush.msra.mxu0 %v4246
    %4824 = vmatpush.msra.mxu0 %v4242
    %4825 = vmatpush.msra.mxu0 %v4238
    %4826 = vmatpush.msra.mxu0 %v4234
    %4827 = vmatpush.msra.mxu0 %v4230
    %4828 = vmatpush.msra.mxu0 %v4226
    %4829 = vmatpush.msra.mxu0 %v4222
    %4830 = vmatpush.msra.mxu0 %v4218
    %4831 = vmatpush.msra.mxu0 %v4214
    %4832 = vmatpush.msra.mxu0 %v4210
    %4833 = vmatpush.msra.mxu0 %v4206
    %4834 = vmatpush.msra.mxu0 %v4202
    %4835 = vmatpush.msra.mxu0 %v4198
    %4836 = vmatpush.msra.mxu0 %v4194
    %4837 = vmatpush.msra.mxu0 %v4190
    %4838 = vmatpush.msra.mxu0 %v4186
    %4839 = vmatmul.f32.gmra.mxu0 %v4114
    %v4840 = vpop.f32.mrf.mxu0
    %v4841 = vadd.f32 %v4821, %v4840
    %4842 = vdwg.mxu0
    %4843 = vmatpush.msra.mxu0 %v4310
    %4844 = vmatpush.msra.mxu0 %v4306
    %4845 = vmatpush.msra.mxu0 %v4302
    %4846 = vmatpush.msra.mxu0 %v4298
    %4847 = vmatpush.msra.mxu0 %v4294
    %4848 = vmatpush.msra.mxu0 %v4290
    %4849 = vmatpush.msra.mxu0 %v4286
    %4850 = vmatpush.msra.mxu0 %v4282
    %4851 = vmatpush.msra.mxu0 %v4278
    %4852 = vmatpush.msra.mxu0 %v4274
    %4853 = vmatpush.msra.mxu0 %v4270
    %4854 = vmatpush.msra.mxu0 %v4266
    %4855 = vmatpush.msra.mxu0 %v4262
    %4856 = vmatpush.msra.mxu0 %v4258
    %4857 = vmatpush.msra.mxu0 %v4254
    %4858 = vmatpush.msra.mxu0 %v4250
    %4859 = vmatmul.f32.gmra.mxu0 %v4115
    %v4860 = vpop.f32.mrf.mxu0
    %v4861 = vadd.f32 %v4841, %v4860
    %4862 = vdwg.mxu0
    %4863 = vmatpush.msra.mxu0 %v4374
    %4864 = vmatpush.msra.mxu0 %v4370
    %4865 = vmatpush.msra.mxu0 %v4366
    %4866 = vmatpush.msra.mxu0 %v4362
    %4867 = vmatpush.msra.mxu0 %v4358
    %4868 = vmatpush.msra.mxu0 %v4354
    %4869 = vmatpush.msra.mxu0 %v4350
    %4870 = vmatpush.msra.mxu0 %v4346
    %4871 = vmatpush.msra.mxu0 %v4342
    %4872 = vmatpush.msra.mxu0 %v4338
    %4873 = vmatpush.msra.mxu0 %v4334
    %4874 = vmatpush.msra.mxu0 %v4330
    %4875 = vmatpush.msra.mxu0 %v4326
    %4876 = vmatpush.msra.mxu0 %v4322
    %4877 = vmatpush.msra.mxu0 %v4318
    %4878 = vmatpush.msra.mxu0 %v4314
    %4879 = vmatmul.f32.gmra.mxu0 %v4116
    %v4880 = vpop.f32.mrf.mxu0
    %v4881 = vadd.f32 %v4861, %v4880
    %4882 = vdwg.mxu0
    %4883 = vmatpush.msra.mxu0 %v4438
    %4884 = vmatpush.msra.mxu0 %v4434
    %4885 = vmatpush.msra.mxu0 %v4430
    %4886 = vmatpush.msra.mxu0 %v4426
    %4887 = vmatpush.msra.mxu0 %v4422
    %4888 = vmatpush.msra.mxu0 %v4418
    %4889 = vmatpush.msra.mxu0 %v4414
    %4890 = vmatpush.msra.mxu0 %v4410
    %4891 = vmatpush.msra.mxu0 %v4406
    %4892 = vmatpush.msra.mxu0 %v4402
    %4893 = vmatpush.msra.mxu0 %v4398
    %4894 = vmatpush.msra.mxu0 %v4394
    %4895 = vmatpush.msra.mxu0 %v4390
    %4896 = vmatpush.msra.mxu0 %v4386
    %4897 = vmatpush.msra.mxu0 %v4382
    %4898 = vmatpush.msra.mxu0 %v4378
    %4899 = vmatmul.f32.gmra.mxu0 %v4117
    %v4900 = vpop.f32.mrf.mxu0
    %v4901 = vadd.f32 %v4881, %v4900
    %4902 = vdwg.mxu0
    %4903 = vmatpush.msra.mxu0 %v4502
    %4904 = vmatpush.msra.mxu0 %v4498
    %4905 = vmatpush.msra.mxu0 %v4494
    %4906 = vmatpush.msra.mxu0 %v4490
    %4907 = vmatpush.msra.mxu0 %v4486
    %4908 = vmatpush.msra.mxu0 %v4482
    %4909 = vmatpush.msra.mxu0 %v4478
    %4910 = vmatpush.msra.mxu0 %v4474
    %4911 = vmatpush.msra.mxu0 %v4470
    %4912 = vmatpush.msra.mxu0 %v4466
    %4913 = vmatpush.msra.mxu0 %v4462
    %4914 = vmatpush.msra.mxu0 %v4458
    %4915 = vmatpush.msra.mxu0 %v4454
    %4916 = vmatpush.msra.mxu0 %v4450
    %4917 = vmatpush.msra.mxu0 %v4446
    %4918 = vmatpush.msra.mxu0 %v4442
    %4919 = vmatmul.f32.gmra.mxu0 %v4118
    %v4920 = vpop.f32.mrf.mxu0
    %v4921 = vadd.f32 %v4901, %v4920
    %4922 = vdwg.mxu0
    %4923 = vmatpush.msra.mxu0 %v4566
    %4924 = vmatpush.msra.mxu0 %v4562
    %4925 = vmatpush.msra.mxu0 %v4558
    %4926 = vmatpush.msra.mxu0 %v4554
    %4927 = vmatpush.msra.mxu0 %v4550
    %4928 = vmatpush.msra.mxu0 %v4546
    %4929 = vmatpush.msra.mxu0 %v4542
    %4930 = vmatpush.msra.mxu0 %v4538
    %4931 = vmatpush.msra.mxu0 %v4534
    %4932 = vmatpush.msra.mxu0 %v4530
    %4933 = vmatpush.msra.mxu0 %v4526
    %4934 = vmatpush.msra.mxu0 %v4522
    %4935 = vmatpush.msra.mxu0 %v4518
    %4936 = vmatpush.msra.mxu0 %v4514
    %4937 = vmatpush.msra.mxu0 %v4510
    %4938 = vmatpush.msra.mxu0 %v4506
    %4939 = vmatmul.f32.gmra.mxu0 %v4119
    %v4940 = vpop.f32.mrf.mxu0
    %v4941 = vadd.f32 %v4921, %v4940
    %4942 = vdwg.mxu0
    %4943 = vmatpush.msra.mxu0 %v4630
    %4944 = vmatpush.msra.mxu0 %v4626
    %4945 = vmatpush.msra.mxu0 %v4622
    %4946 = vmatpush.msra.mxu0 %v4618
    %4947 = vmatpush.msra.mxu0 %v4614
    %4948 = vmatpush.msra.mxu0 %v4610
    %4949 = vmatpush.msra.mxu0 %v4606
    %4950 = vmatpush.msra.mxu0 %v4602
    %4951 = vmatpush.msra.mxu0 %v4598
    %4952 = vmatpush.msra.mxu0 %v4594
    %4953 = vmatpush.msra.mxu0 %v4590
    %4954 = vmatpush.msra.mxu0 %v4586
    %4955 = vmatpush.msra.mxu0 %v4582
    %4956 = vmatpush.msra.mxu0 %v4578
    %4957 = vmatpush.msra.mxu0 %v4574
    %4958 = vmatpush.msra.mxu0 %v4570
    %4959 = vmatmul.f32.gmra.mxu0 %v4120
    %v4960 = vpop.f32.mrf.mxu0
    %v4961 = vadd.f32 %v4941, %v4960
    %4962 = vdwg.mxu0
    %4963 = vmatpush.msra.mxu0 %v4183
    %4964 = vmatpush.msra.mxu0 %v4179
    %4965 = vmatpush.msra.mxu0 %v4175
    %4966 = vmatpush.msra.mxu0 %v4171
    %4967 = vmatpush.msra.mxu0 %v4167
    %4968 = vmatpush.msra.mxu0 %v4163
    %4969 = vmatpush.msra.mxu0 %v4159
    %4970 = vmatpush.msra.mxu0 %v4155
    %4971 = vmatpush.msra.mxu0 %v4151
    %4972 = vmatpush.msra.mxu0 %v4147
    %4973 = vmatpush.msra.mxu0 %v4143
    %4974 = vmatpush.msra.mxu0 %v4139
    %4975 = vmatpush.msra.mxu0 %v4135
    %4976 = vmatpush.msra.mxu0 %v4131
    %4977 = vmatpush.msra.mxu0 %v4127
    %4978 = vmatpush.msra.mxu0 %v4123
    %4979 = vmatmul.f32.gmra.mxu0 %v4113
    %v4980 = vpop.f32.mrf.mxu0
    %v4981 = vadd.f32 %v4637, %v4980
    %4982 = vdwg.mxu0
    %4983 = vmatpush.msra.mxu0 %v4247
    %4984 = vmatpush.msra.mxu0 %v4243
    %4985 = vmatpush.msra.mxu0 %v4239
    %4986 = vmatpush.msra.mxu0 %v4235
    %4987 = vmatpush.msra.mxu0 %v4231
    %4988 = vmatpush.msra.mxu0 %v4227
    %4989 = vmatpush.msra.mxu0 %v4223
    %4990 = vmatpush.msra.mxu0 %v4219
    %4991 = vmatpush.msra.mxu0 %v4215
    %4992 = vmatpush.msra.mxu0 %v4211
    %4993 = vmatpush.msra.mxu0 %v4207
    %4994 = vmatpush.msra.mxu0 %v4203
    %4995 = vmatpush.msra.mxu0 %v4199
    %4996 = vmatpush.msra.mxu0 %v4195
    %4997 = vmatpush.msra.mxu0 %v4191
    %4998 = vmatpush.msra.mxu0 %v4187
    %4999 = vmatmul.f32.gmra.mxu0 %v4114
    %v5000 = vpop.f32.mrf.mxu0
    %v5001 = vadd.f32 %v4981, %v5000
    %5002 = vdwg.mxu0
    %5003 = vmatpush.msra.mxu0 %v4311
    %5004 = vmatpush.msra.mxu0 %v4307
    %5005 = vmatpush.msra.mxu0 %v4303
    %5006 = vmatpush.msra.mxu0 %v4299
    %5007 = vmatpush.msra.mxu0 %v4295
    %5008 = vmatpush.msra.mxu0 %v4291
    %5009 = vmatpush.msra.mxu0 %v4287
    %5010 = vmatpush.msra.mxu0 %v4283
    %5011 = vmatpush.msra.mxu0 %v4279
    %5012 = vmatpush.msra.mxu0 %v4275
    %5013 = vmatpush.msra.mxu0 %v4271
    %5014 = vmatpush.msra.mxu0 %v4267
    %5015 = vmatpush.msra.mxu0 %v4263
    %5016 = vmatpush.msra.mxu0 %v4259
    %5017 = vmatpush.msra.mxu0 %v4255
    %5018 = vmatpush.msra.mxu0 %v4251
    %5019 = vmatmul.f32.gmra.mxu0 %v4115
    %v5020 = vpop.f32.mrf.mxu0
    %v5021 = vadd.f32 %v5001, %v5020
    %5022 = vdwg.mxu0
    %5023 = vmatpush.msra.mxu0 %v4375
    %5024 = vmatpush.msra.mxu0 %v4371
    %5025 = vmatpush.msra.mxu0 %v4367
    %5026 = vmatpush.msra.mxu0 %v4363
    %5027 = vmatpush.msra.mxu0 %v4359
    %5028 = vmatpush.msra.mxu0 %v4355
    %5029 = vmatpush.msra.mxu0 %v4351
    %5030 = vmatpush.msra.mxu0 %v4347
    %5031 = vmatpush.msra.mxu0 %v4343
    %5032 = vmatpush.msra.mxu0 %v4339
    %5033 = vmatpush.msra.mxu0 %v4335
    %5034 = vmatpush.msra.mxu0 %v4331
    %5035 = vmatpush.msra.mxu0 %v4327
    %5036 = vmatpush.msra.mxu0 %v4323
    %5037 = vmatpush.msra.mxu0 %v4319
    %5038 = vmatpush.msra.mxu0 %v4315
    %5039 = vmatmul.f32.gmra.mxu0 %v4116
    %v5040 = vpop.f32.mrf.mxu0
    %v5041 = vadd.f32 %v5021, %v5040
    %5042 = vdwg.mxu0
    %5043 = vmatpush.msra.mxu0 %v4439
    %5044 = vmatpush.msra.mxu0 %v4435
    %5045 = vmatpush.msra.mxu0 %v4431
    %5046 = vmatpush.msra.mxu0 %v4427
    %5047 = vmatpush.msra.mxu0 %v4423
    %5048 = vmatpush.msra.mxu0 %v4419
    %5049 = vmatpush.msra.mxu0 %v4415
    %5050 = vmatpush.msra.mxu0 %v4411
    %5051 = vmatpush.msra.mxu0 %v4407
    %5052 = vmatpush.msra.mxu0 %v4403
    %5053 = vmatpush.msra.mxu0 %v4399
    %5054 = vmatpush.msra.mxu0 %v4395
    %5055 = vmatpush.msra.mxu0 %v4391
    %5056 = vmatpush.msra.mxu0 %v4387
    %5057 = vmatpush.msra.mxu0 %v4383
    %5058 = vmatpush.msra.mxu0 %v4379
    %5059 = vmatmul.f32.gmra.mxu0 %v4117
    %v5060 = vpop.f32.mrf.mxu0
    %v5061 = vadd.f32 %v5041, %v5060
    %5062 = vdwg.mxu0
    %5063 = vmatpush.msra.mxu0 %v4503
    %5064 = vmatpush.msra.mxu0 %v4499
    %5065 = vmatpush.msra.mxu0 %v4495
    %5066 = vmatpush.msra.mxu0 %v4491
    %5067 = vmatpush.msra.mxu0 %v4487
    %5068 = vmatpush.msra.mxu0 %v4483
    %5069 = vmatpush.msra.mxu0 %v4479
    %5070 = vmatpush.msra.mxu0 %v4475
    %5071 = vmatpush.msra.mxu0 %v4471
    %5072 = vmatpush.msra.mxu0 %v4467
    %5073 = vmatpush.msra.mxu0 %v4463
    %5074 = vmatpush.msra.mxu0 %v4459
    %5075 = vmatpush.msra.mxu0 %v4455
    %5076 = vmatpush.msra.mxu0 %v4451
    %5077 = vmatpush.msra.mxu0 %v4447
    %5078 = vmatpush.msra.mxu0 %v4443
    %5079 = vmatmul.f32.gmra.mxu0 %v4118
    %v5080 = vpop.f32.mrf.mxu0
    %v5081 = vadd.f32 %v5061, %v5080
    %5082 = vdwg.mxu0
    %5083 = vmatpush.msra.mxu0 %v4567
    %5084 = vmatpush.msra.mxu0 %v4563
    %5085 = vmatpush.msra.mxu0 %v4559
    %5086 = vmatpush.msra.mxu0 %v4555
    %5087 = vmatpush.msra.mxu0 %v4551
    %5088 = vmatpush.msra.mxu0 %v4547
    %5089 = vmatpush.msra.mxu0 %v4543
    %5090 = vmatpush.msra.mxu0 %v4539
    %5091 = vmatpush.msra.mxu0 %v4535
    %5092 = vmatpush.msra.mxu0 %v4531
    %5093 = vmatpush.msra.mxu0 %v4527
    %5094 = vmatpush.msra.mxu0 %v4523
    %5095 = vmatpush.msra.mxu0 %v4519
    %5096 = vmatpush.msra.mxu0 %v4515
    %5097 = vmatpush.msra.mxu0 %v4511
    %5098 = vmatpush.msra.mxu0 %v4507
    %5099 = vmatmul.f32.gmra.mxu0 %v4119
    %v5100 = vpop.f32.mrf.mxu0
    %v5101 = vadd.f32 %v5081, %v5100
    %5102 = vdwg.mxu0
    %5103 = vmatpush.msra.mxu0 %v4631
    %5104 = vmatpush.msra.mxu0 %v4627
    %5105 = vmatpush.msra.mxu0 %v4623
    %5106 = vmatpush.msra.mxu0 %v4619
    %5107 = vmatpush.msra.mxu0 %v4615
    %5108 = vmatpush.msra.mxu0 %v4611
    %5109 = vmatpush.msra.mxu0 %v4607
    %5110 = vmatpush.msra.mxu0 %v4603
    %5111 = vmatpush.msra.mxu0 %v4599
    %5112 = vmatpush.msra.mxu0 %v4595
    %5113 = vmatpush.msra.mxu0 %v4591
    %5114 = vmatpush.msra.mxu0 %v4587
    %5115 = vmatpush.msra.mxu0 %v4583
    %5116 = vmatpush.msra.mxu0 %v4579
    %5117 = vmatpush.msra.mxu0 %v4575
    %5118 = vmatpush.msra.mxu0 %v4571
    %5119 = vmatmul.f32.gmra.mxu0 %v4120
    %v5120 = vpop.f32.mrf.mxu0
    %v5121 = vadd.f32 %v5101, %v5120
    %5122 = vdwg.mxu0
    %5123 = vmatpush.msra.mxu0 %v4184
    %5124 = vmatpush.msra.mxu0 %v4180
    %5125 = vmatpush.msra.mxu0 %v4176
    %5126 = vmatpush.msra.mxu0 %v4172
    %5127 = vmatpush.msra.mxu0 %v4168
    %5128 = vmatpush.msra.mxu0 %v4164
    %5129 = vmatpush.msra.mxu0 %v4160
    %5130 = vmatpush.msra.mxu0 %v4156
    %5131 = vmatpush.msra.mxu0 %v4152
    %5132 = vmatpush.msra.mxu0 %v4148
    %5133 = vmatpush.msra.mxu0 %v4144
    %5134 = vmatpush.msra.mxu0 %v4140
    %5135 = vmatpush.msra.mxu0 %v4136
    %5136 = vmatpush.msra.mxu0 %v4132
    %5137 = vmatpush.msra.mxu0 %v4128
    %5138 = vmatpush.msra.mxu0 %v4124
    %5139 = vmatmul.f32.gmra.mxu0 %v4113
    %v5140 = vpop.f32.mrf.mxu0
    %v5141 = vadd.f32 %v4638, %v5140
    %5142 = vdwg.mxu0
    %5143 = vmatpush.msra.mxu0 %v4248
    %5144 = vmatpush.msra.mxu0 %v4244
    %5145 = vmatpush.msra.mxu0 %v4240
    %5146 = vmatpush.msra.mxu0 %v4236
    %5147 = vmatpush.msra.mxu0 %v4232
    %5148 = vmatpush.msra.mxu0 %v4228
    %5149 = vmatpush.msra.mxu0 %v4224
    %5150 = vmatpush.msra.mxu0 %v4220
    %5151 = vmatpush.msra.mxu0 %v4216
    %5152 = vmatpush.msra.mxu0 %v4212
    %5153 = vmatpush.msra.mxu0 %v4208
    %5154 = vmatpush.msra.mxu0 %v4204
    %5155 = vmatpush.msra.mxu0 %v4200
    %5156 = vmatpush.msra.mxu0 %v4196
    %5157 = vmatpush.msra.mxu0 %v4192
    %5158 = vmatpush.msra.mxu0 %v4188
    %5159 = vmatmul.f32.gmra.mxu0 %v4114
    %v5160 = vpop.f32.mrf.mxu0
    %v5161 = vadd.f32 %v5141, %v5160
    %5162 = vdwg.mxu0
    %5163 = vmatpush.msra.mxu0 %v4312
    %5164 = vmatpush.msra.mxu0 %v4308
    %5165 = vmatpush.msra.mxu0 %v4304
    %5166 = vmatpush.msra.mxu0 %v4300
    %5167 = vmatpush.msra.mxu0 %v4296
    %5168 = vmatpush.msra.mxu0 %v4292
    %5169 = vmatpush.msra.mxu0 %v4288
    %5170 = vmatpush.msra.mxu0 %v4284
    %5171 = vmatpush.msra.mxu0 %v4280
    %5172 = vmatpush.msra.mxu0 %v4276
    %5173 = vmatpush.msra.mxu0 %v4272
    %5174 = vmatpush.msra.mxu0 %v4268
    %5175 = vmatpush.msra.mxu0 %v4264
    %5176 = vmatpush.msra.mxu0 %v4260
    %5177 = vmatpush.msra.mxu0 %v4256
    %5178 = vmatpush.msra.mxu0 %v4252
    %5179 = vmatmul.f32.gmra.mxu0 %v4115
    %v5180 = vpop.f32.mrf.mxu0
    %v5181 = vadd.f32 %v5161, %v5180
    %5182 = vdwg.mxu0
    %5183 = vmatpush.msra.mxu0 %v4376
    %5184 = vmatpush.msra.mxu0 %v4372
    %5185 = vmatpush.msra.mxu0 %v4368
    %5186 = vmatpush.msra.mxu0 %v4364
    %5187 = vmatpush.msra.mxu0 %v4360
    %5188 = vmatpush.msra.mxu0 %v4356
    %5189 = vmatpush.msra.mxu0 %v4352
    %5190 = vmatpush.msra.mxu0 %v4348
    %5191 = vmatpush.msra.mxu0 %v4344
    %5192 = vmatpush.msra.mxu0 %v4340
    %5193 = vmatpush.msra.mxu0 %v4336
    %5194 = vmatpush.msra.mxu0 %v4332
    %5195 = vmatpush.msra.mxu0 %v4328
    %5196 = vmatpush.msra.mxu0 %v4324
    %5197 = vmatpush.msra.mxu0 %v4320
    %5198 = vmatpush.msra.mxu0 %v4316
    %5199 = vmatmul.f32.gmra.mxu0 %v4116
    %v5200 = vpop.f32.mrf.mxu0
    %v5201 = vadd.f32 %v5181, %v5200
    %5202 = vdwg.mxu0
    %5203 = vmatpush.msra.mxu0 %v4440
    %5204 = vmatpush.msra.mxu0 %v4436
    %5205 = vmatpush.msra.mxu0 %v4432
    %5206 = vmatpush.msra.mxu0 %v4428
    %5207 = vmatpush.msra.mxu0 %v4424
    %5208 = vmatpush.msra.mxu0 %v4420
    %5209 = vmatpush.msra.mxu0 %v4416
    %5210 = vmatpush.msra.mxu0 %v4412
    %5211 = vmatpush.msra.mxu0 %v4408
    %5212 = vmatpush.msra.mxu0 %v4404
    %5213 = vmatpush.msra.mxu0 %v4400
    %5214 = vmatpush.msra.mxu0 %v4396
    %5215 = vmatpush.msra.mxu0 %v4392
    %5216 = vmatpush.msra.mxu0 %v4388
    %5217 = vmatpush.msra.mxu0 %v4384
    %5218 = vmatpush.msra.mxu0 %v4380
    %5219 = vmatmul.f32.gmra.mxu0 %v4117
    %v5220 = vpop.f32.mrf.mxu0
    %v5221 = vadd.f32 %v5201, %v5220
    %5222 = vdwg.mxu0
    %5223 = vmatpush.msra.mxu0 %v4504
    %5224 = vmatpush.msra.mxu0 %v4500
    %5225 = vmatpush.msra.mxu0 %v4496
    %5226 = vmatpush.msra.mxu0 %v4492
    %5227 = vmatpush.msra.mxu0 %v4488
    %5228 = vmatpush.msra.mxu0 %v4484
    %5229 = vmatpush.msra.mxu0 %v4480
    %5230 = vmatpush.msra.mxu0 %v4476
    %5231 = vmatpush.msra.mxu0 %v4472
    %5232 = vmatpush.msra.mxu0 %v4468
    %5233 = vmatpush.msra.mxu0 %v4464
    %5234 = vmatpush.msra.mxu0 %v4460
    %5235 = vmatpush.msra.mxu0 %v4456
    %5236 = vmatpush.msra.mxu0 %v4452
    %5237 = vmatpush.msra.mxu0 %v4448
    %5238 = vmatpush.msra.mxu0 %v4444
    %5239 = vmatmul.f32.gmra.mxu0 %v4118
    %v5240 = vpop.f32.mrf.mxu0
    %v5241 = vadd.f32 %v5221, %v5240
    %5242 = vdwg.mxu0
    %5243 = vmatpush.msra.mxu0 %v4568
    %5244 = vmatpush.msra.mxu0 %v4564
    %5245 = vmatpush.msra.mxu0 %v4560
    %5246 = vmatpush.msra.mxu0 %v4556
    %5247 = vmatpush.msra.mxu0 %v4552
    %5248 = vmatpush.msra.mxu0 %v4548
    %5249 = vmatpush.msra.mxu0 %v4544
    %5250 = vmatpush.msra.mxu0 %v4540
    %5251 = vmatpush.msra.mxu0 %v4536
    %5252 = vmatpush.msra.mxu0 %v4532
    %5253 = vmatpush.msra.mxu0 %v4528
    %5254 = vmatpush.msra.mxu0 %v4524
    %5255 = vmatpush.msra.mxu0 %v4520
    %5256 = vmatpush.msra.mxu0 %v4516
    %5257 = vmatpush.msra.mxu0 %v4512
    %5258 = vmatpush.msra.mxu0 %v4508
    %5259 = vmatmul.f32.gmra.mxu0 %v4119
    %v5260 = vpop.f32.mrf.mxu0
    %v5261 = vadd.f32 %v5241, %v5260
    %5262 = vdwg.mxu0
    %5263 = vmatpush.msra.mxu0 %v4632
    %5264 = vmatpush.msra.mxu0 %v4628
    %5265 = vmatpush.msra.mxu0 %v4624
    %5266 = vmatpush.msra.mxu0 %v4620
    %5267 = vmatpush.msra.mxu0 %v4616
    %5268 = vmatpush.msra.mxu0 %v4612
    %5269 = vmatpush.msra.mxu0 %v4608
    %5270 = vmatpush.msra.mxu0 %v4604
    %5271 = vmatpush.msra.mxu0 %v4600
    %5272 = vmatpush.msra.mxu0 %v4596
    %5273 = vmatpush.msra.mxu0 %v4592
    %5274 = vmatpush.msra.mxu0 %v4588
    %5275 = vmatpush.msra.mxu0 %v4584
    %5276 = vmatpush.msra.mxu0 %v4580
    %5277 = vmatpush.msra.mxu0 %v4576
    %5278 = vmatpush.msra.mxu0 %v4572
    %5279 = vmatmul.f32.gmra.mxu0 %v4120
    %v5280 = vpop.f32.mrf.mxu0
    %v5281 = vadd.f32 %v5261, %v5280
    %5282 = vdwg.mxu0
    %v5283 = vmax.f32 %v4801, 0.0
    %v5284 = vmax.f32 %v4961, 0.0
    %v5285 = vmax.f32 %v5121, 0.0
    %v5286 = vmax.f32 %v5281, 0.0
    %v5287 = vld [vmem:[#allocation15] sm:$0xff]
    %v5288 = vld [vmem:[#allocation15 + $0x8] sm:$0xff]
    %v5289 = vld [vmem:[#allocation15 + $0x10] sm:$0xff]
    %v5290 = vld [vmem:[#allocation15 + $0x18] sm:$0xff]
    %v5291 = vld [vmem:[#allocation15 + $0x20] sm:$0xff]
    %v5292 = vld [vmem:[#allocation15 + $0x28] sm:$0xff]
    %v5293 = vld [vmem:[#allocation15 + $0x30] sm:$0xff]
    %v5294 = vld [vmem:[#allocation15 + $0x38] sm:$0xff]
    %v5295 = vld [vmem:[#allocation15 + $0x40] sm:$0xff]
    %v5296 = vld [vmem:[#allocation15 + $0x48] sm:$0xff]
    %v5297 = vld [vmem:[#allocation15 + $0x50] sm:$0xff]
    %v5298 = vld [vmem:[#allocation15 + $0x58] sm:$0xff]
    %v5299 = vld [vmem:[#allocation15 + $0x60] sm:$0xff]
    %v5300 = vld [vmem:[#allocation15 + $0x68] sm:$0xff]
    %v5301 = vld [vmem:[#allocation15 + $0x70] sm:$0xff]
    %v5302 = vld [vmem:[#allocation15 + $0x78] sm:$0xff]
    %v5303 = vld [vmem:[#allocation15 + $0x80] sm:$0xff]
    %v5304 = vld [vmem:[#allocation15 + $0x88] sm:$0xff]
    %v5305 = vld [vmem:[#allocation15 + $0x90] sm:$0xff]
    %v5306 = vld [vmem:[#allocation15 + $0x98] sm:$0xff]
    %v5307 = vld [vmem:[#allocation15 + $0xa0] sm:$0xff]
    %v5308 = vld [vmem:[#allocation15 + $0xa8] sm:$0xff]
    %v5309 = vld [vmem:[#allocation15 + $0xb0] sm:$0xff]
    %v5310 = vld [vmem:[#allocation15 + $0xb8] sm:$0xff]
    %v5311 = vld [vmem:[#allocation15 + $0xc0] sm:$0xff]
    %v5312 = vld [vmem:[#allocation15 + $0xc8] sm:$0xff]
    %v5313 = vld [vmem:[#allocation15 + $0xd0] sm:$0xff]
    %v5314 = vld [vmem:[#allocation15 + $0xd8] sm:$0xff]
    %v5315 = vld [vmem:[#allocation15 + $0xe0] sm:$0xff]
    %v5316 = vld [vmem:[#allocation15 + $0xe8] sm:$0xff]
    %v5317 = vld [vmem:[#allocation15 + $0xf0] sm:$0xff]
    %v5318 = vld [vmem:[#allocation15 + $0xf8] sm:$0xff]
    %v5319 = vld [vmem:[#allocation15 + $0x100] sm:$0xff]
    %v5320 = vld [vmem:[#allocation15 + $0x108] sm:$0xff]
    %v5321 = vld [vmem:[#allocation15 + $0x110] sm:$0xff]
    %v5322 = vld [vmem:[#allocation15 + $0x118] sm:$0xff]
    %v5323 = vld [vmem:[#allocation15 + $0x120] sm:$0xff]
    %v5324 = vld [vmem:[#allocation15 + $0x128] sm:$0xff]
    %v5325 = vld [vmem:[#allocation15 + $0x130] sm:$0xff]
    %v5326 = vld [vmem:[#allocation15 + $0x138] sm:$0xff]
    %v5327 = vld [vmem:[#allocation15 + $0x140] sm:$0xff]
    %v5328 = vld [vmem:[#allocation15 + $0x148] sm:$0xff]
    %v5329 = vld [vmem:[#allocation15 + $0x150] sm:$0xff]
    %v5330 = vld [vmem:[#allocation15 + $0x158] sm:$0xff]
    %v5331 = vld [vmem:[#allocation15 + $0x160] sm:$0xff]
    %v5332 = vld [vmem:[#allocation15 + $0x168] sm:$0xff]
    %v5333 = vld [vmem:[#allocation15 + $0x170] sm:$0xff]
    %v5334 = vld [vmem:[#allocation15 + $0x178] sm:$0xff]
    %v5335 = vld [vmem:[#allocation15 + $0x180] sm:$0xff]
    %v5336 = vld [vmem:[#allocation15 + $0x188] sm:$0xff]
    %v5337 = vld [vmem:[#allocation15 + $0x190] sm:$0xff]
    %v5338 = vld [vmem:[#allocation15 + $0x198] sm:$0xff]
    %v5339 = vld [vmem:[#allocation15 + $0x1a0] sm:$0xff]
    %v5340 = vld [vmem:[#allocation15 + $0x1a8] sm:$0xff]
    %v5341 = vld [vmem:[#allocation15 + $0x1b0] sm:$0xff]
    %v5342 = vld [vmem:[#allocation15 + $0x1b8] sm:$0xff]
    %v5343 = vld [vmem:[#allocation15 + $0x1c0] sm:$0xff]
    %v5344 = vld [vmem:[#allocation15 + $0x1c8] sm:$0xff]
    %v5345 = vld [vmem:[#allocation15 + $0x1d0] sm:$0xff]
    %v5346 = vld [vmem:[#allocation15 + $0x1d8] sm:$0xff]
    %v5347 = vld [vmem:[#allocation15 + $0x1e0] sm:$0xff]
    %v5348 = vld [vmem:[#allocation15 + $0x1e8] sm:$0xff]
    %v5349 = vld [vmem:[#allocation15 + $0x1f0] sm:$0xff]
    %v5350 = vld [vmem:[#allocation15 + $0x1f8] sm:$0xff]
    %v5351 = vld [vmem:[#allocation15 + $0x200] sm:$0xff]
    %v5352 = vld [vmem:[#allocation15 + $0x208] sm:$0xff]
    %v5353 = vld [vmem:[#allocation15 + $0x210] sm:$0xff]
    %v5354 = vld [vmem:[#allocation15 + $0x218] sm:$0xff]
    %v5355 = vld [vmem:[#allocation15 + $0x220] sm:$0xff]
    %v5356 = vld [vmem:[#allocation15 + $0x228] sm:$0xff]
    %v5357 = vld [vmem:[#allocation15 + $0x230] sm:$0xff]
    %v5358 = vld [vmem:[#allocation15 + $0x238] sm:$0xff]
    %v5359 = vld [vmem:[#allocation15 + $0x240] sm:$0xff]
    %v5360 = vld [vmem:[#allocation15 + $0x248] sm:$0xff]
    %v5361 = vld [vmem:[#allocation15 + $0x250] sm:$0xff]
    %v5362 = vld [vmem:[#allocation15 + $0x258] sm:$0xff]
    %v5363 = vld [vmem:[#allocation15 + $0x260] sm:$0xff]
    %v5364 = vld [vmem:[#allocation15 + $0x268] sm:$0xff]
    %v5365 = vld [vmem:[#allocation15 + $0x270] sm:$0xff]
    %v5366 = vld [vmem:[#allocation15 + $0x278] sm:$0xff]
    %v5367 = vld [vmem:[#allocation15 + $0x280] sm:$0xff]
    %v5368 = vld [vmem:[#allocation15 + $0x288] sm:$0xff]
    %v5369 = vld [vmem:[#allocation15 + $0x290] sm:$0xff]
    %v5370 = vld [vmem:[#allocation15 + $0x298] sm:$0xff]
    %v5371 = vld [vmem:[#allocation15 + $0x2a0] sm:$0xff]
    %v5372 = vld [vmem:[#allocation15 + $0x2a8] sm:$0xff]
    %v5373 = vld [vmem:[#allocation15 + $0x2b0] sm:$0xff]
    %v5374 = vld [vmem:[#allocation15 + $0x2b8] sm:$0xff]
    %v5375 = vld [vmem:[#allocation15 + $0x2c0] sm:$0xff]
    %v5376 = vld [vmem:[#allocation15 + $0x2c8] sm:$0xff]
    %v5377 = vld [vmem:[#allocation15 + $0x2d0] sm:$0xff]
    %v5378 = vld [vmem:[#allocation15 + $0x2d8] sm:$0xff]
    %v5379 = vld [vmem:[#allocation15 + $0x2e0] sm:$0xff]
    %v5380 = vld [vmem:[#allocation15 + $0x2e8] sm:$0xff]
    %v5381 = vld [vmem:[#allocation15 + $0x2f0] sm:$0xff]
    %v5382 = vld [vmem:[#allocation15 + $0x2f8] sm:$0xff]
    %v5383 = vld [vmem:[#allocation15 + $0x300] sm:$0xff]
    %v5384 = vld [vmem:[#allocation15 + $0x308] sm:$0xff]
    %v5385 = vld [vmem:[#allocation15 + $0x310] sm:$0xff]
    %v5386 = vld [vmem:[#allocation15 + $0x318] sm:$0xff]
    %v5387 = vld [vmem:[#allocation15 + $0x320] sm:$0xff]
    %v5388 = vld [vmem:[#allocation15 + $0x328] sm:$0xff]
    %v5389 = vld [vmem:[#allocation15 + $0x330] sm:$0xff]
    %v5390 = vld [vmem:[#allocation15 + $0x338] sm:$0xff]
    %v5391 = vld [vmem:[#allocation15 + $0x340] sm:$0xff]
    %v5392 = vld [vmem:[#allocation15 + $0x348] sm:$0xff]
    %v5393 = vld [vmem:[#allocation15 + $0x350] sm:$0xff]
    %v5394 = vld [vmem:[#allocation15 + $0x358] sm:$0xff]
    %v5395 = vld [vmem:[#allocation15 + $0x360] sm:$0xff]
    %v5396 = vld [vmem:[#allocation15 + $0x368] sm:$0xff]
    %v5397 = vld [vmem:[#allocation15 + $0x370] sm:$0xff]
    %v5398 = vld [vmem:[#allocation15 + $0x378] sm:$0xff]
    %v5399 = vld [vmem:[#allocation15 + $0x380] sm:$0xff]
    %v5400 = vld [vmem:[#allocation15 + $0x388] sm:$0xff]
    %v5401 = vld [vmem:[#allocation15 + $0x390] sm:$0xff]
    %v5402 = vld [vmem:[#allocation15 + $0x398] sm:$0xff]
    %v5403 = vld [vmem:[#allocation15 + $0x3a0] sm:$0xff]
    %v5404 = vld [vmem:[#allocation15 + $0x3a8] sm:$0xff]
    %v5405 = vld [vmem:[#allocation15 + $0x3b0] sm:$0xff]
    %v5406 = vld [vmem:[#allocation15 + $0x3b8] sm:$0xff]
    %v5407 = vld [vmem:[#allocation15 + $0x3c0] sm:$0xff]
    %v5408 = vld [vmem:[#allocation15 + $0x3c8] sm:$0xff]
    %v5409 = vld [vmem:[#allocation15 + $0x3d0] sm:$0xff]
    %v5410 = vld [vmem:[#allocation15 + $0x3d8] sm:$0xff]
    %v5411 = vld [vmem:[#allocation15 + $0x3e0] sm:$0xff]
    %v5412 = vld [vmem:[#allocation15 + $0x3e8] sm:$0xff]
    %v5413 = vld [vmem:[#allocation15 + $0x3f0] sm:$0xff]
    %v5414 = vld [vmem:[#allocation15 + $0x3f8] sm:$0xff]
    %v5415 = vld [vmem:[#allocation16] sm:$0x3]
    %v5417 = vperm.slane %v5415, 0
    %v5418 = vperm.slane %v5415, 1
    %5421 = vmatpush.msra.mxu0 %v5317
    %5422 = vmatpush.msra.mxu0 %v5315
    %5423 = vmatpush.msra.mxu0 %v5313
    %5424 = vmatpush.msra.mxu0 %v5311
    %5425 = vmatpush.msra.mxu0 %v5309
    %5426 = vmatpush.msra.mxu0 %v5307
    %5427 = vmatpush.msra.mxu0 %v5305
    %5428 = vmatpush.msra.mxu0 %v5303
    %5429 = vmatpush.msra.mxu0 %v5301
    %5430 = vmatpush.msra.mxu0 %v5299
    %5431 = vmatpush.msra.mxu0 %v5297
    %5432 = vmatpush.msra.mxu0 %v5295
    %5433 = vmatpush.msra.mxu0 %v5293
    %5434 = vmatpush.msra.mxu0 %v5291
    %5435 = vmatpush.msra.mxu0 %v5289
    %5436 = vmatpush.msra.mxu0 %v5287
    %5437 = vmatmul.f32.gmra.mxu0 %v5283
    %v5438 = vpop.f32.mrf.mxu0
    %v5439 = vadd.f32 %v5417, %v5438
    %5440 = vdwg.mxu0
    %5441 = vmatpush.msra.mxu0 %v5349
    %5442 = vmatpush.msra.mxu0 %v5347
    %5443 = vmatpush.msra.mxu0 %v5345
    %5444 = vmatpush.msra.mxu0 %v5343
    %5445 = vmatpush.msra.mxu0 %v5341
    %5446 = vmatpush.msra.mxu0 %v5339
    %5447 = vmatpush.msra.mxu0 %v5337
    %5448 = vmatpush.msra.mxu0 %v5335
    %5449 = vmatpush.msra.mxu0 %v5333
    %5450 = vmatpush.msra.mxu0 %v5331
    %5451 = vmatpush.msra.mxu0 %v5329
    %5452 = vmatpush.msra.mxu0 %v5327
    %5453 = vmatpush.msra.mxu0 %v5325
    %5454 = vmatpush.msra.mxu0 %v5323
    %5455 = vmatpush.msra.mxu0 %v5321
    %5456 = vmatpush.msra.mxu0 %v5319
    %5457 = vmatmul.f32.gmra.mxu0 %v5284
    %v5458 = vpop.f32.mrf.mxu0
    %v5459 = vadd.f32 %v5439, %v5458
    %5460 = vdwg.mxu0
    %5461 = vmatpush.msra.mxu0 %v5381
    %5462 = vmatpush.msra.mxu0 %v5379
    %5463 = vmatpush.msra.mxu0 %v5377
    %5464 = vmatpush.msra.mxu0 %v5375
    %5465 = vmatpush.msra.mxu0 %v5373
    %5466 = vmatpush.msra.mxu0 %v5371
    %5467 = vmatpush.msra.mxu0 %v5369
    %5468 = vmatpush.msra.mxu0 %v5367
    %5469 = vmatpush.msra.mxu0 %v5365
    %5470 = vmatpush.msra.mxu0 %v5363
    %5471 = vmatpush.msra.mxu0 %v5361
    %5472 = vmatpush.msra.mxu0 %v5359
    %5473 = vmatpush.msra.mxu0 %v5357
    %5474 = vmatpush.msra.mxu0 %v5355
    %5475 = vmatpush.msra.mxu0 %v5353
    %5476 = vmatpush.msra.mxu0 %v5351
    %5477 = vmatmul.f32.gmra.mxu0 %v5285
    %v5478 = vpop.f32.mrf.mxu0
    %v5479 = vadd.f32 %v5459, %v5478
    %5480 = vdwg.mxu0
    %5481 = vmatpush.msra.mxu0 %v5413
    %5482 = vmatpush.msra.mxu0 %v5411
    %5483 = vmatpush.msra.mxu0 %v5409
    %5484 = vmatpush.msra.mxu0 %v5407
    %5485 = vmatpush.msra.mxu0 %v5405
    %5486 = vmatpush.msra.mxu0 %v5403
    %5487 = vmatpush.msra.mxu0 %v5401
    %5488 = vmatpush.msra.mxu0 %v5399
    %5489 = vmatpush.msra.mxu0 %v5397
    %5490 = vmatpush.msra.mxu0 %v5395
    %5491 = vmatpush.msra.mxu0 %v5393
    %5492 = vmatpush.msra.mxu0 %v5391
    %5493 = vmatpush.msra.mxu0 %v5389
    %5494 = vmatpush.msra.mxu0 %v5387
    %5495 = vmatpush.msra.mxu0 %v5385
    %5496 = vmatpush.msra.mxu0 %v5383
    %5497 = vmatmul.f32.gmra.mxu0 %v5286
    %v5498 = vpop.f32.mrf.mxu0
    %v5499 = vadd.f32 %v5479, %v5498
    %5500 = vdwg.mxu0
    %5501 = vmatpush.msra.mxu0 %v5318
    %5502 = vmatpush.msra.mxu0 %v5316
    %5503 = vmatpush.msra.mxu0 %v5314
    %5504 = vmatpush.msra.mxu0 %v5312
    %5505 = vmatpush.msra.mxu0 %v5310
    %5506 = vmatpush.msra.mxu0 %v5308
    %5507 = vmatpush.msra.mxu0 %v5306
    %5508 = vmatpush.msra.mxu0 %v5304
    %5509 = vmatpush.msra.mxu0 %v5302
    %5510 = vmatpush.msra.mxu0 %v5300
    %5511 = vmatpush.msra.mxu0 %v5298
    %5512 = vmatpush.msra.mxu0 %v5296
    %5513 = vmatpush.msra.mxu0 %v5294
    %5514 = vmatpush.msra.mxu0 %v5292
    %5515 = vmatpush.msra.mxu0 %v5290
    %5516 = vmatpush.msra.mxu0 %v5288
    %5517 = vmatmul.f32.gmra.mxu0 %v5283
    %v5518 = vpop.f32.mrf.mxu0
    %v5519 = vadd.f32 %v5418, %v5518
    %5520 = vdwg.mxu0
    %5521 = vmatpush.msra.mxu0 %v5350
    %5522 = vmatpush.msra.mxu0 %v5348
    %5523 = vmatpush.msra.mxu0 %v5346
    %5524 = vmatpush.msra.mxu0 %v5344
    %5525 = vmatpush.msra.mxu0 %v5342
    %5526 = vmatpush.msra.mxu0 %v5340
    %5527 = vmatpush.msra.mxu0 %v5338
    %5528 = vmatpush.msra.mxu0 %v5336
    %5529 = vmatpush.msra.mxu0 %v5334
    %5530 = vmatpush.msra.mxu0 %v5332
    %5531 = vmatpush.msra.mxu0 %v5330
    %5532 = vmatpush.msra.mxu0 %v5328
    %5533 = vmatpush.msra.mxu0 %v5326
    %5534 = vmatpush.msra.mxu0 %v5324
    %5535 = vmatpush.msra.mxu0 %v5322
    %5536 = vmatpush.msra.mxu0 %v5320
    %5537 = vmatmul.f32.gmra.mxu0 %v5284
    %v5538 = vpop.f32.mrf.mxu0
    %v5539 = vadd.f32 %v5519, %v5538
    %5540 = vdwg.mxu0
    %5541 = vmatpush.msra.mxu0 %v5382
    %5542 = vmatpush.msra.mxu0 %v5380
    %5543 = vmatpush.msra.mxu0 %v5378
    %5544 = vmatpush.msra.mxu0 %v5376
    %5545 = vmatpush.msra.mxu0 %v5374
    %5546 = vmatpush.msra.mxu0 %v5372
    %5547 = vmatpush.msra.mxu0 %v5370
    %5548 = vmatpush.msra.mxu0 %v5368
    %5549 = vmatpush.msra.mxu0 %v5366
    %5550 = vmatpush.msra.mxu0 %v5364
    %5551 = vmatpush.msra.mxu0 %v5362
    %5552 = vmatpush.msra.mxu0 %v5360
    %5553 = vmatpush.msra.mxu0 %v5358
    %5554 = vmatpush.msra.mxu0 %v5356
    %5555 = vmatpush.msra.mxu0 %v5354
    %5556 = vmatpush.msra.mxu0 %v5352
    %5557 = vmatmul.f32.gmra.mxu0 %v5285
    %v5558 = vpop.f32.mrf.mxu0
    %v5559 = vadd.f32 %v5539, %v5558
    %5560 = vdwg.mxu0
    %5561 = vmatpush.msra.mxu0 %v5414
    %5562 = vmatpush.msra.mxu0 %v5412
    %5563 = vmatpush.msra.mxu0 %v5410
    %5564 = vmatpush.msra.mxu0 %v5408
    %5565 = vmatpush.msra.mxu0 %v5406
    %5566 = vmatpush.msra.mxu0 %v5404
    %5567 = vmatpush.msra.mxu0 %v5402
    %5568 = vmatpush.msra.mxu0 %v5400
    %5569 = vmatpush.msra.mxu0 %v5398
    %5570 = vmatpush.msra.mxu0 %v5396
    %5571 = vmatpush.msra.mxu0 %v5394
    %5572 = vmatpush.msra.mxu0 %v5392
    %5573 = vmatpush.msra.mxu0 %v5390
    %5574 = vmatpush.msra.mxu0 %v5388
    %5575 = vmatpush.msra.mxu0 %v5386
    %5576 = vmatpush.msra.mxu0 %v5384
    %5577 = vmatmul.f32.gmra.mxu0 %v5286
    %v5578 = vpop.f32.mrf.mxu0
    %v5579 = vadd.f32 %v5559, %v5578
    %5580 = vdwg.mxu0
    %v5581 = vmax.f32 %v5499, 0.0
    %v5582 = vmax.f32 %v5579, 0.0
    %v5583 = vld [vmem:[#allocation18] sm:$0xff]
    %v5584 = vld [vmem:[#allocation18 + $0x8] sm:$0xff]
    %v5585 = vld [vmem:[#allocation18 + $0x10] sm:$0xff]
    %v5586 = vld [vmem:[#allocation18 + $0x18] sm:$0xff]
    %v5587 = vld [vmem:[#allocation18 + $0x20] sm:$0xff]
    %v5588 = vld [vmem:[#allocation18 + $0x28] sm:$0xff]
    %v5589 = vld [vmem:[#allocation18 + $0x30] sm:$0xff]
    %v5590 = vld [vmem:[#allocation18 + $0x38] sm:$0xff]
    %v5591 = vld [vmem:[#allocation18 + $0x40] sm:$0xff]
    %v5592 = vld [vmem:[#allocation18 + $0x48] sm:$0xff]
    %v5593 = vld [vmem:[#allocation18 + $0x50] sm:$0xff]
    %v5594 = vld [vmem:[#allocation18 + $0x58] sm:$0xff]
    %v5595 = vld [vmem:[#allocation18 + $0x60] sm:$0xff]
    %v5596 = vld [vmem:[#allocation18 + $0x68] sm:$0xff]
    %v5597 = vld [vmem:[#allocation18 + $0x70] sm:$0xff]
    %v5598 = vld [vmem:[#allocation18 + $0x78] sm:$0xff]
    %v5599 = vld [vmem:[#allocation18 + $0x80] sm:$0xff]
    %v5600 = vld [vmem:[#allocation18 + $0x88] sm:$0xff]
    %v5601 = vld [vmem:[#allocation18 + $0x90] sm:$0xff]
    %v5602 = vld [vmem:[#allocation18 + $0x98] sm:$0xff]
    %v5603 = vld [vmem:[#allocation18 + $0xa0] sm:$0xff]
    %v5604 = vld [vmem:[#allocation18 + $0xa8] sm:$0xff]
    %v5605 = vld [vmem:[#allocation18 + $0xb0] sm:$0xff]
    %v5606 = vld [vmem:[#allocation18 + $0xb8] sm:$0xff]
    %v5607 = vld [vmem:[#allocation18 + $0xc0] sm:$0xff]
    %v5608 = vld [vmem:[#allocation18 + $0xc8] sm:$0xff]
    %v5609 = vld [vmem:[#allocation18 + $0xd0] sm:$0xff]
    %v5610 = vld [vmem:[#allocation18 + $0xd8] sm:$0xff]
    %v5611 = vld [vmem:[#allocation18 + $0xe0] sm:$0xff]
    %v5612 = vld [vmem:[#allocation18 + $0xe8] sm:$0xff]
    %v5613 = vld [vmem:[#allocation18 + $0xf0] sm:$0xff]
    %v5614 = vld [vmem:[#allocation18 + $0xf8] sm:$0xff]
    %v5615 = vld [vmem:[#allocation19] sm:$0x1]
    %v5617 = vperm.slane %v5615, 0
    %5619 = vmatpush.msra.mxu0 %v5598
    %5620 = vmatpush.msra.mxu0 %v5597
    %5621 = vmatpush.msra.mxu0 %v5596
    %5622 = vmatpush.msra.mxu0 %v5595
    %5623 = vmatpush.msra.mxu0 %v5594
    %5624 = vmatpush.msra.mxu0 %v5593
    %5625 = vmatpush.msra.mxu0 %v5592
    %5626 = vmatpush.msra.mxu0 %v5591
    %5627 = vmatpush.msra.mxu0 %v5590
    %5628 = vmatpush.msra.mxu0 %v5589
    %5629 = vmatpush.msra.mxu0 %v5588
    %5630 = vmatpush.msra.mxu0 %v5587
    %5631 = vmatpush.msra.mxu0 %v5586
    %5632 = vmatpush.msra.mxu0 %v5585
    %5633 = vmatpush.msra.mxu0 %v5584
    %5634 = vmatpush.msra.mxu0 %v5583
    %5635 = vmatmul.f32.gmra.mxu0 %v5581
    %v5636 = vpop.f32.mrf.mxu0
    %v5637 = vadd.f32 %v5617, %v5636
    %5638 = vdwg.mxu0
    %5639 = vmatpush.msra.mxu0 %v5614
    %5640 = vmatpush.msra.mxu0 %v5613
    %5641 = vmatpush.msra.mxu0 %v5612
    %5642 = vmatpush.msra.mxu0 %v5611
    %5643 = vmatpush.msra.mxu0 %v5610
    %5644 = vmatpush.msra.mxu0 %v5609
    %5645 = vmatpush.msra.mxu0 %v5608
    %5646 = vmatpush.msra.mxu0 %v5607
    %5647 = vmatpush.msra.mxu0 %v5606
    %5648 = vmatpush.msra.mxu0 %v5605
    %5649 = vmatpush.msra.mxu0 %v5604
    %5650 = vmatpush.msra.mxu0 %v5603
    %5651 = vmatpush.msra.mxu0 %v5602
    %5652 = vmatpush.msra.mxu0 %v5601
    %5653 = vmatpush.msra.mxu0 %v5600
    %5654 = vmatpush.msra.mxu0 %v5599
    %5655 = vmatmul.f32.gmra.mxu0 %v5582
    %v5656 = vpop.f32.mrf.mxu0
    %v5657 = vadd.f32 %v5637, %v5656
    %5658 = vdwg.mxu0
    %5659 = vst [vmem:[%s13] sm:$0xff] %v5657
    // Predicated region
    $region102: #{forward.1} parent=1 // pred_check
      _
    $region103: #{forward.1} parent=1 // pred_check_branch
      %5661 = sbr.rel (0) target = $region105
    $region104: #{forward.1} parent=1 // pred_region
      _
    $region105: #{forward.1} parent=1 // pred_fallthru
      _
    // Predicated region
    $region106: #{forward.1} parent=1 // pred_check
      _
    $region107: #{forward.1} parent=1 // pred_check_branch
      %5663 = sbr.rel (0) target = $region109
    $region108: #{forward.1} parent=1 // pred_region
      _
    $region109: #{forward.1} parent=1 // pred_fallthru
      _
    %5664 = vsyncpa [#allocation3], 1
    %5665 = vsyncpa [#allocation5], 1
    %5666 = vsyncpa [#allocation8], 1
    %5667 = vsyncpa [#allocation11], 1
    %5668 = vsyncpa [#allocation14], 1
    %5669 = vsyncpa [#allocation17], 1
    %5670 = vsyncpa [#allocation20], 1

</llo_original>
